<compile_context>
chip_gen: v5e
topology: v5e:2x2
jax: 0.10.0
libtpu: 0.0.40
codegen_flags: <defaults>
</compile_context>

<pallas_src>
import jax
import jax.numpy as jnp
from jax import lax
from jax.experimental import pallas as pl
from jax.experimental.pallas import tpu as pltpu  # noqa: F401  (TPU backend)

# ---------------- sizes (small, consistent with the module) ----------------
B, S, D = 2, 8, 128          # batch, seq, n_dim
N_TOK = B * S                # merged batch*seq rows fed to the MXU
VOCAB = 256                  # gpt wte vocab
MAX_NUM = 32                 # max_num for the 4 categorical embeddings
MAX_LEN = 64                 # max_length for the 5 positional-style embeddings
N_HEAD = 4
HEAD_DIM = D // N_HEAD
MLP = 4 * D
INIT_RANGE = 0.02
LN_EPS = 1e-5

N_TABLES = 10                                    # wte + 4 categorical + 5 positional
CV = VOCAB + 4 * MAX_NUM + 5 * MAX_LEN           # 704 combined table ids
CV_TOT = CV + S                                  # + S wpe rows folded in -> 712
CV_PAD = 768                                     # lane-aligned (multiple of 128)
N_ID_COLS = N_TABLES + 1                         # 10 tables + 1 position column
IDS_PAD = 16                                     # pad the 11 id columns to 16

segment2id = {'[gs_csk_knowledge]': 1}           # deterministic stand-in for global


# ===================== fused kernel: embed_sum + GPT-2 ======================
def fused_kernel(ids_ref, bias_ref, emb_tab_ref,
                 ln1_g_ref, ln1_b_ref, wqkv_ref, bqkv_ref, wproj_ref, bproj_ref,
                 ln2_g_ref, ln2_b_ref, wfc_ref, bfc_ref, wout_ref, bout_ref,
                 lnf_g_ref, lnf_b_ref, wte_t_ref, logits_ref):
    bf16 = jnp.bfloat16

    # ---- embedding gather+sum (incl. wpe): ONE lane-dense one-hot matmul ----
    ids = ids_ref[...]                                        # (N_TOK, IDS_PAD)
    iota = lax.broadcasted_iota(jnp.int32, (N_TOK, CV_PAD), 1)
    oh = jnp.zeros((N_TOK, CV_PAD), jnp.float32)
    for t in range(N_ID_COLS):                                # 11 cheap VPU compares
        oh = oh + (iota == ids[:, t:t + 1]).astype(jnp.float32)
    # f32 matmul keeps the gather exact (table values are f32).
    h = jnp.dot(oh, emb_tab_ref[...], preferred_element_type=jnp.float32)

    def layernorm(v, g, b):
        mu = jnp.mean(v, axis=-1, keepdims=True)
        var = jnp.mean((v - mu) ** 2, axis=-1, keepdims=True)
        return (v - mu) * lax.rsqrt(var + LN_EPS) * g + b

    # ---- causal multi-head self attention (batch merged into rows) ----
    hn = layernorm(h, ln1_g_ref[...], ln1_b_ref[...])
    qkv = jnp.dot(hn.astype(bf16), wqkv_ref[...],
                  preferred_element_type=jnp.float32) + bqkv_ref[...]
    q, k, v = qkv[:, :D], qkv[:, D:2 * D], qkv[:, 2 * D:]
    qh = q.reshape(N_TOK, N_HEAD, HEAD_DIM).transpose(1, 0, 2)   # (H, N, HD)
    kh = k.reshape(N_TOK, N_HEAD, HEAD_DIM).transpose(1, 0, 2)
    vh = v.reshape(N_TOK, N_HEAD, HEAD_DIM).transpose(1, 0, 2)
    scores = jnp.einsum('hqd,hkd->hqk', qh, kh,
                        preferred_element_type=jnp.float32)      # (H, N, N)
    # bias = batch-block + causal + key-padding mask, precomputed in wrapper.
    scores = scores * (1.0 / (HEAD_DIM ** 0.5)) + bias_ref[...][None, :, :]
    # stable softmax in f32; denominator reciprocal goes to the (free) EUP slot.
    mx = jnp.max(scores, axis=-1, keepdims=True)
    e = jnp.exp(scores - mx)
    p = e * pl.reciprocal(jnp.sum(e, axis=-1, keepdims=True), approx=True)
    ctx = jnp.einsum('hqk,hkd->hqd', p, vh,
                     preferred_element_type=jnp.float32)         # (H, N, HD)
    attn = ctx.transpose(1, 0, 2).reshape(N_TOK, D)
    attn = jnp.dot(attn.astype(bf16), wproj_ref[...],
                   preferred_element_type=jnp.float32) + bproj_ref[...]
    h = h + attn

    # ---- MLP ----
    hn = layernorm(h, ln2_g_ref[...], ln2_b_ref[...])
    m = jnp.dot(hn.astype(bf16), wfc_ref[...],
                preferred_element_type=jnp.float32) + bfc_ref[...]
    m = jax.nn.gelu(m, approximate=True)
    m = jnp.dot(m.astype(bf16), wout_ref[...],
                preferred_element_type=jnp.float32) + bout_ref[...]
    h = h + m

    # ---- final LN + tied LM head (pre-transposed wte -> lane-dense output) ----
    hf = layernorm(h, lnf_g_ref[...], lnf_b_ref[...])
    logits = jnp.dot(hf.astype(bf16), wte_t_ref[...],
                     preferred_element_type=jnp.float32)         # (N_TOK, VOCAB)
    logits_ref[...] = logits.astype(logits_ref.dtype)


def fine_unigpt_pallas(params, ids_mat, attn_bias, emb_table):
    # Single program (no grid): at these shapes grid steps only add overhead on
    # single-TC chips; all weights comfortably fit VMEM (< 1 MiB total).
    # TODO(synk): at production sizes (VOCAB~50k, D~768) tile the LM head over
    # a VOCAB grid axis instead of a full-table block (v7x has 64 MiB VMEM).
    return pl.pallas_call(
        fused_kernel,
        out_shape=jax.ShapeDtypeStruct((N_TOK, VOCAB), jnp.float32),
    )(ids_mat, attn_bias, emb_table,
      params["ln1_g"], params["ln1_b"],
      params["w_qkv"].astype(jnp.bfloat16), params["b_qkv"],
      params["w_proj"].astype(jnp.bfloat16), params["b_proj"],
      params["ln2_g"], params["ln2_b"],
      params["w_fc"].astype(jnp.bfloat16), params["b_fc"],
      params["w_out"].astype(jnp.bfloat16), params["b_out"],
      params["lnf_g"], params["lnf_b"],
      params["wte"].T.astype(jnp.bfloat16))


# ======================= glue: loss + FineUniGPT.forward ====================
def xent_loss(logits, labels):
    # GPT-2 LMHead loss: shift logits/labels, ignore_index=-100
    sl = logits[:, :-1, :]
    st = labels[:, 1:]
    logp = jax.nn.log_softmax(sl, axis=-1)
    valid = st != -100
    safe = jnp.where(valid, st, 0)
    nll = -jnp.take_along_axis(logp, safe[..., None], axis=-1)[..., 0]
    return jnp.sum(nll * valid) / jnp.maximum(jnp.sum(valid), 1)


def fine_unigpt_forward(params, input_ids, labels, attention_mask, segments,
                        sources, source_index, token_types, pos_fw, pos_bw,
                        word_aligns, word_aligns_fw, word_aligns_bw,
                        past_key_values=None):
    # ---- combined embedding table: 10 tables + wpe rows, offset-shifted ----
    tables = [params["wte"],
              params["segment_emb"], params["source_emb"],
              params["source_index_emb"], params["token_type_emb"],
              params["pos_fw_emb"], params["pos_bw_emb"],
              params["word_aligns_emb"], params["word_aligns_fw_emb"],
              params["word_aligns_bw_emb"]]
    offsets = [0]
    for t in tables[:-1]:
        offsets.append(offsets[-1] + t.shape[0])
    emb_table = jnp.concatenate(tables + [params["wpe"]], axis=0)  # (712, D)
    emb_table = jnp.pad(emb_table, ((0, CV_PAD - CV_TOT), (0, 0)))  # (768, D)

    # ---- per-token shifted id matrix: (N_TOK, 16), pad columns = -1 ----
    id_streams = [input_ids, segments, sources, source_index, token_types,
                  pos_fw, pos_bw, word_aligns, word_aligns_fw, word_aligns_bw]
    ids_mat = jnp.stack([a.reshape(-1).astype(jnp.int32) for a in id_streams],
                        axis=1)                                    # (N_TOK, 10)
    ids_mat = ids_mat + jnp.asarray(offsets, jnp.int32)[None, :]
    # 11th column: sequence position -> gathers the wpe rows (offset CV).
    pos_col = jnp.tile(jnp.arange(S, dtype=jnp.int32), (B,)) + CV  # (N_TOK,)
    ids_mat = jnp.concatenate([ids_mat, pos_col[:, None]], axis=1)  # (N_TOK, 11)
    ids_mat = jnp.pad(ids_mat, ((0, 0), (0, IDS_PAD - N_ID_COLS)),
                      constant_values=-1)                          # (N_TOK, 16)

    # ---- additive attention bias: batch-block + causal + key padding ----
    tok = jnp.arange(N_TOK)
    bidx, pidx = tok // S, tok % S
    allowed = (bidx[:, None] == bidx[None, :]) & (pidx[:, None] >= pidx[None, :])
    key_mask = attention_mask.reshape(N_TOK).astype(jnp.float32)
    attn_bias = (jnp.where(allowed, 0.0, -1e9)
                 + (1.0 - key_mask)[None, :] * (-1e9)).astype(jnp.float32)

    _ = segments == segment2id['[gs_csk_knowledge]']  # only used by hybrid model
    # TODO(synk): past_key_values / teach_force_mode / copy_mode branches of
    # FineUniGPT.forward are not exercised here (copy_mode=False, past=None path).

    logits = fine_unigpt_pallas(params, ids_mat, attn_bias, emb_table)
    logits = logits.reshape(B, S, VOCAB)
    loss = xent_loss(logits, labels)
    return {"loss": loss, "logits": logits}


# ================================= params ===================================
def init_params(key):
    ks = jax.random.split(key, 24)
    nrm = lambda k, shape, std: std * jax.random.normal(k, shape, jnp.float32)
    p = {
        # FineUniGPT embeddings (std = init_range)
        "segment_emb":        nrm(ks[0],  (MAX_NUM, D), INIT_RANGE),
        "source_emb":         nrm(ks[1],  (MAX_NUM, D), INIT_RANGE),
        "source_index_emb":   nrm(ks[2],  (MAX_NUM, D), INIT_RANGE),
        "token_type_emb":     nrm(ks[3],  (MAX_NUM, D), INIT_RANGE),
        "pos_fw_emb":         nrm(ks[4],  (MAX_LEN, D), INIT_RANGE),
        "pos_bw_emb":         nrm(ks[5],  (MAX_LEN, D), INIT_RANGE),
        "word_aligns_emb":    nrm(ks[6],  (MAX_LEN, D), INIT_RANGE),
        "word_aligns_fw_emb": nrm(ks[7],  (MAX_LEN, D), INIT_RANGE),
        "word_aligns_bw_emb": nrm(ks[8],  (MAX_LEN, D), INIT_RANGE),
        # tiny GPT-2 stand-in
        "wte":    nrm(ks[9],  (VOCAB, D), 0.02),
        "wpe":    nrm(ks[10], (S, D), 0.02),
        "ln1_g":  jnp.ones((1, D), jnp.float32),
        "ln1_b":  jnp.zeros((1, D), jnp.float32),
        "w_qkv":  nrm(ks[11], (D, 3 * D), 0.02),
        "b_qkv":  jnp.zeros((1, 3 * D), jnp.float32),
        "w_proj": nrm(ks[12], (D, D), 0.02),
        "b_proj": jnp.zeros((1, D), jnp.float32),
        "ln2_g":  jnp.ones((1, D), jnp.float32),
        "ln2_b":  jnp.zeros((1, D), jnp.float32),
        "w_fc":   nrm(ks[13], (D, MLP), 0.02),
        "b_fc":   jnp.zeros((1, MLP), jnp.float32),
        "w_out":  nrm(ks[14], (MLP, D), 0.02),
        "b_out":  jnp.zeros((1, D), jnp.float32),
        "lnf_g":  jnp.ones((1, D), jnp.float32),
        "lnf_b":  jnp.zeros((1, D), jnp.float32),
    }
    return p


if __name__ == "__main__":
    key = jax.random.PRNGKey(0)
    kp, *kids = jax.random.split(key, 14)
    params = init_params(kp)

    ri = lambda k, hi: jax.random.randint(k, (B, S), 0, hi, jnp.int32)
    input_ids      = ri(kids[0], VOCAB)
    labels         = input_ids
    attention_mask = jnp.ones((B, S), jnp.int32)
    segments       = ri(kids[1], MAX_NUM)
    sources        = ri(kids[2], MAX_NUM)
    source_index   = ri(kids[3], MAX_NUM)
    token_types    = ri(kids[4], MAX_NUM)
    pos_fw         = ri(kids[5], MAX_LEN)
    pos_bw         = ri(kids[6], MAX_LEN)
    word_aligns    = ri(kids[7], MAX_LEN)
    word_aligns_fw = ri(kids[8], MAX_LEN)
    word_aligns_bw = ri(kids[9], MAX_LEN)

    fwd = jax.jit(fine_unigpt_forward)
    out = fwd(params, input_ids, labels, attention_mask,
              segments, sources, source_index, token_types,
              pos_fw, pos_bw, word_aligns, word_aligns_fw, word_aligns_bw)
    jax.block_until_ready(out["logits"])
    jax.block_until_ready(out["loss"])
    assert out["logits"].shape == (B, S, VOCAB)
    assert jnp.isfinite(out["loss"])
    print("KERNEL_OK")
</pallas_src>

<mosaic_0001>
module attributes {stable_mosaic.version = 11 : i64} {
  func.func @fused_kernel(%arg0: memref<16x16xi32, #tpu.memory_space<vmem>>, %arg1: memref<16x16xf32, #tpu.memory_space<vmem>>, %arg2: memref<768x128xf32, #tpu.memory_space<vmem>>, %arg3: memref<1x128xf32, #tpu.memory_space<vmem>>, %arg4: memref<1x128xf32, #tpu.memory_space<vmem>>, %arg5: memref<128x384xbf16, #tpu.memory_space<vmem>>, %arg6: memref<1x384xf32, #tpu.memory_space<vmem>>, %arg7: memref<128x128xbf16, #tpu.memory_space<vmem>>, %arg8: memref<1x128xf32, #tpu.memory_space<vmem>>, %arg9: memref<1x128xf32, #tpu.memory_space<vmem>>, %arg10: memref<1x128xf32, #tpu.memory_space<vmem>>, %arg11: memref<128x512xbf16, #tpu.memory_space<vmem>>, %arg12: memref<1x512xf32, #tpu.memory_space<vmem>>, %arg13: memref<512x128xbf16, #tpu.memory_space<vmem>>, %arg14: memref<1x128xf32, #tpu.memory_space<vmem>>, %arg15: memref<1x128xf32, #tpu.memory_space<vmem>>, %arg16: memref<1x128xf32, #tpu.memory_space<vmem>>, %arg17: memref<128x256xbf16, #tpu.memory_space<vmem>>, %arg18: memref<16x256xf32, #tpu.memory_space<vmem>>) attributes {dimension_semantics = [], scalar_prefetch = 0 : i64, scratch_operands = 0 : i64, tpu.core_type = #tpu.core_type<tc>} {
    %c0 = arith.constant 0 : index
    %c0_0 = arith.constant 0 : index
    %0 = vector.load %arg0[%c0, %c0_0] : memref<16x16xi32, #tpu.memory_space<vmem>>, vector<16x16xi32>
    %1 = tpu.iota {dimensions = array<i32: 1>} : vector<16x768xi32>
    %cst = arith.constant 0.000000e+00 : f32
    %2 = vector.broadcast %cst : f32 to vector<16x768xf32>
    %3 = vector.extract_strided_slice %0 {offsets = [0, 0], sizes = [16, 1], strides = [1, 1]} : vector<16x16xi32> to vector<16x1xi32>
    %4 = vector.broadcast %3 : vector<16x1xi32> to vector<16x768xi32>
    %5 = arith.cmpi eq, %1, %4 : vector<16x768xi32>
    %6 = arith.extui %5 : vector<16x768xi1> to vector<16x768xi32>
    %7 = arith.sitofp %6 : vector<16x768xi32> to vector<16x768xf32>
    %8 = arith.addf %2, %7 : vector<16x768xf32>
    %9 = vector.extract_strided_slice %0 {offsets = [0, 1], sizes = [16, 1], strides = [1, 1]} : vector<16x16xi32> to vector<16x1xi32>
    %10 = vector.broadcast %9 : vector<16x1xi32> to vector<16x768xi32>
    %11 = arith.cmpi eq, %1, %10 : vector<16x768xi32>
    %12 = arith.extui %11 : vector<16x768xi1> to vector<16x768xi32>
    %13 = arith.sitofp %12 : vector<16x768xi32> to vector<16x768xf32>
    %14 = arith.addf %8, %13 : vector<16x768xf32>
    %15 = vector.extract_strided_slice %0 {offsets = [0, 2], sizes = [16, 1], strides = [1, 1]} : vector<16x16xi32> to vector<16x1xi32>
    %16 = vector.broadcast %15 : vector<16x1xi32> to vector<16x768xi32>
    %17 = arith.cmpi eq, %1, %16 : vector<16x768xi32>
    %18 = arith.extui %17 : vector<16x768xi1> to vector<16x768xi32>
    %19 = arith.sitofp %18 : vector<16x768xi32> to vector<16x768xf32>
    %20 = arith.addf %14, %19 : vector<16x768xf32>
    %21 = vector.extract_strided_slice %0 {offsets = [0, 3], sizes = [16, 1], strides = [1, 1]} : vector<16x16xi32> to vector<16x1xi32>
    %22 = vector.broadcast %21 : vector<16x1xi32> to vector<16x768xi32>
    %23 = arith.cmpi eq, %1, %22 : vector<16x768xi32>
    %24 = arith.extui %23 : vector<16x768xi1> to vector<16x768xi32>
    %25 = arith.sitofp %24 : vector<16x768xi32> to vector<16x768xf32>
    %26 = arith.addf %20, %25 : vector<16x768xf32>
    %27 = vector.extract_strided_slice %0 {offsets = [0, 4], sizes = [16, 1], strides = [1, 1]} : vector<16x16xi32> to vector<16x1xi32>
    %28 = vector.broadcast %27 : vector<16x1xi32> to vector<16x768xi32>
    %29 = arith.cmpi eq, %1, %28 : vector<16x768xi32>
    %30 = arith.extui %29 : vector<16x768xi1> to vector<16x768xi32>
    %31 = arith.sitofp %30 : vector<16x768xi32> to vector<16x768xf32>
    %32 = arith.addf %26, %31 : vector<16x768xf32>
    %33 = vector.extract_strided_slice %0 {offsets = [0, 5], sizes = [16, 1], strides = [1, 1]} : vector<16x16xi32> to vector<16x1xi32>
    %34 = vector.broadcast %33 : vector<16x1xi32> to vector<16x768xi32>
    %35 = arith.cmpi eq, %1, %34 : vector<16x768xi32>
    %36 = arith.extui %35 : vector<16x768xi1> to vector<16x768xi32>
    %37 = arith.sitofp %36 : vector<16x768xi32> to vector<16x768xf32>
    %38 = arith.addf %32, %37 : vector<16x768xf32>
    %39 = vector.extract_strided_slice %0 {offsets = [0, 6], sizes = [16, 1], strides = [1, 1]} : vector<16x16xi32> to vector<16x1xi32>
    %40 = vector.broadcast %39 : vector<16x1xi32> to vector<16x768xi32>
    %41 = arith.cmpi eq, %1, %40 : vector<16x768xi32>
    %42 = arith.extui %41 : vector<16x768xi1> to vector<16x768xi32>
    %43 = arith.sitofp %42 : vector<16x768xi32> to vector<16x768xf32>
    %44 = arith.addf %38, %43 : vector<16x768xf32>
    %45 = vector.extract_strided_slice %0 {offsets = [0, 7], sizes = [16, 1], strides = [1, 1]} : vector<16x16xi32> to vector<16x1xi32>
    %46 = vector.broadcast %45 : vector<16x1xi32> to vector<16x768xi32>
    %47 = arith.cmpi eq, %1, %46 : vector<16x768xi32>
    %48 = arith.extui %47 : vector<16x768xi1> to vector<16x768xi32>
    %49 = arith.sitofp %48 : vector<16x768xi32> to vector<16x768xf32>
    %50 = arith.addf %44, %49 : vector<16x768xf32>
    %51 = vector.extract_strided_slice %0 {offsets = [0, 8], sizes = [16, 1], strides = [1, 1]} : vector<16x16xi32> to vector<16x1xi32>
    %52 = vector.broadcast %51 : vector<16x1xi32> to vector<16x768xi32>
    %53 = arith.cmpi eq, %1, %52 : vector<16x768xi32>
    %54 = arith.extui %53 : vector<16x768xi1> to vector<16x768xi32>
    %55 = arith.sitofp %54 : vector<16x768xi32> to vector<16x768xf32>
    %56 = arith.addf %50, %55 : vector<16x768xf32>
    %57 = vector.extract_strided_slice %0 {offsets = [0, 9], sizes = [16, 1], strides = [1, 1]} : vector<16x16xi32> to vector<16x1xi32>
    %58 = vector.broadcast %57 : vector<16x1xi32> to vector<16x768xi32>
    %59 = arith.cmpi eq, %1, %58 : vector<16x768xi32>
    %60 = arith.extui %59 : vector<16x768xi1> to vector<16x768xi32>
    %61 = arith.sitofp %60 : vector<16x768xi32> to vector<16x768xf32>
    %62 = arith.addf %56, %61 : vector<16x768xf32>
    %63 = vector.extract_strided_slice %0 {offsets = [0, 10], sizes = [16, 1], strides = [1, 1]} : vector<16x16xi32> to vector<16x1xi32>
    %64 = vector.broadcast %63 : vector<16x1xi32> to vector<16x768xi32>
    %65 = arith.cmpi eq, %1, %64 : vector<16x768xi32>
    %66 = arith.extui %65 : vector<16x768xi1> to vector<16x768xi32>
    %67 = arith.sitofp %66 : vector<16x768xi32> to vector<16x768xf32>
    %68 = arith.addf %62, %67 : vector<16x768xf32>
    %c0_1 = arith.constant 0 : index
    %c0_2 = arith.constant 0 : index
    %69 = vector.load %arg2[%c0_1, %c0_2] : memref<768x128xf32, #tpu.memory_space<vmem>>, vector<768x128xf32>
    %cst_3 = arith.constant dense<0.000000e+00> : vector<16x128xf32>
    %70 = tpu.matmul %68, %69, %cst_3 {dimension_numbers = #tpu.dot_dimension_numbers<[1], [0], [0], [1], [0, 0, 1, 1], [], []>} : vector<16x768xf32>, vector<768x128xf32>, vector<16x128xf32> -> vector<16x128xf32>
    %c0_4 = arith.constant 0 : index
    %c0_5 = arith.constant 0 : index
    %71 = vector.load %arg3[%c0_4, %c0_5] : memref<1x128xf32, #tpu.memory_space<vmem>>, vector<1x128xf32>
    %c0_6 = arith.constant 0 : index
    %c0_7 = arith.constant 0 : index
    %72 = vector.load %arg4[%c0_6, %c0_7] : memref<1x128xf32, #tpu.memory_space<vmem>>, vector<1x128xf32>
    %cst_8 = arith.constant dense<0.000000e+00> : vector<16xf32>
    %73 = vector.multi_reduction <add>, %70, %cst_8 [1] : vector<16x128xf32> to vector<16xf32>
    %74 = vector.shape_cast %73 : vector<16xf32> to vector<16x1xf32>
    %cst_9 = arith.constant 1.280000e+02 : f32
    %75 = vector.broadcast %cst_9 : f32 to vector<16x1xf32>
    %76 = arith.divf %74, %75 : vector<16x1xf32>
    %77 = vector.broadcast %76 : vector<16x1xf32> to vector<16x128xf32>
    %78 = arith.subf %70, %77 : vector<16x128xf32>
    %79 = arith.mulf %78, %78 : vector<16x128xf32>
    %cst_10 = arith.constant dense<0.000000e+00> : vector<16xf32>
    %80 = vector.multi_reduction <add>, %79, %cst_10 [1] : vector<16x128xf32> to vector<16xf32>
    %81 = vector.shape_cast %80 : vector<16xf32> to vector<16x1xf32>
    %cst_11 = arith.constant 1.280000e+02 : f32
    %82 = vector.broadcast %cst_11 : f32 to vector<16x1xf32>
    %83 = arith.divf %81, %82 : vector<16x1xf32>
    %84 = vector.broadcast %76 : vector<16x1xf32> to vector<16x128xf32>
    %85 = arith.subf %70, %84 : vector<16x128xf32>
    %cst_12 = arith.constant 9.99999974E-6 : f32
    %86 = vector.broadcast %cst_12 : f32 to vector<16x1xf32>
    %87 = arith.addf %83, %86 : vector<16x1xf32>
    %88 = math.rsqrt %87 : vector<16x1xf32>
    %89 = vector.broadcast %88 : vector<16x1xf32> to vector<16x128xf32>
    %90 = arith.mulf %85, %89 : vector<16x128xf32>
    %91 = vector.broadcast %71 : vector<1x128xf32> to vector<16x128xf32>
    %92 = arith.mulf %90, %91 : vector<16x128xf32>
    %93 = vector.broadcast %72 : vector<1x128xf32> to vector<16x128xf32>
    %94 = arith.addf %92, %93 : vector<16x128xf32>
    %95 = arith.truncf %94 : vector<16x128xf32> to vector<16x128xbf16>
    %c0_13 = arith.constant 0 : index
    %c0_14 = arith.constant 0 : index
    %96 = vector.load %arg5[%c0_13, %c0_14] : memref<128x384xbf16, #tpu.memory_space<vmem>>, vector<128x384xbf16>
    %cst_15 = arith.constant dense<0.000000e+00> : vector<16x384xf32>
    %97 = tpu.matmul %95, %96, %cst_15 {dimension_numbers = #tpu.dot_dimension_numbers<[1], [0], [0], [1], [0, 0, 1, 1], [], []>} : vector<16x128xbf16>, vector<128x384xbf16>, vector<16x384xf32> -> vector<16x384xf32>
    %c0_16 = arith.constant 0 : index
    %c0_17 = arith.constant 0 : index
    %98 = vector.load %arg6[%c0_16, %c0_17] : memref<1x384xf32, #tpu.memory_space<vmem>>, vector<1x384xf32>
    %99 = vector.broadcast %98 : vector<1x384xf32> to vector<16x384xf32>
    %100 = arith.addf %97, %99 : vector<16x384xf32>
    %101 = vector.extract_strided_slice %100 {offsets = [0, 0], sizes = [16, 128], strides = [1, 1]} : vector<16x384xf32> to vector<16x128xf32>
    %102 = vector.extract_strided_slice %100 {offsets = [0, 128], sizes = [16, 128], strides = [1, 1]} : vector<16x384xf32> to vector<16x128xf32>
    %103 = vector.extract_strided_slice %100 {offsets = [0, 256], sizes = [16, 128], strides = [1, 1]} : vector<16x384xf32> to vector<16x128xf32>
    %104 = vector.shape_cast %101 : vector<16x128xf32> to vector<16x4x32xf32>
    %105 = tpu.transpose %104, [1, 0, 2] : vector<16x4x32xf32> -> vector<4x16x32xf32>
    %106 = vector.shape_cast %102 : vector<16x128xf32> to vector<16x4x32xf32>
    %107 = tpu.transpose %106, [1, 0, 2] : vector<16x4x32xf32> -> vector<4x16x32xf32>
    %108 = vector.shape_cast %103 : vector<16x128xf32> to vector<16x4x32xf32>
    %109 = tpu.transpose %108, [1, 0, 2] : vector<16x4x32xf32> -> vector<4x16x32xf32>
    "tpu.trace_start"() <{level = 10 : i32, message = "hqd,hkd->hqk"}> : () -> ()
    %cst_18 = arith.constant dense<0.000000e+00> : vector<4x16x16xf32>
    %110 = tpu.matmul %105, %107, %cst_18 {dimension_numbers = #tpu.dot_dimension_numbers<[2], [2], [1], [1], [0, 0, 0, 1, 1, 1], [0], [0]>} : vector<4x16x32xf32>, vector<4x16x32xf32>, vector<4x16x16xf32> -> vector<4x16x16xf32>
    "tpu.trace_stop"() : () -> ()
    %cst_19 = arith.constant 0.176776692 : f32
    %111 = vector.broadcast %cst_19 : f32 to vector<4x16x16xf32>
    %112 = arith.mulf %110, %111 : vector<4x16x16xf32>
    %c0_20 = arith.constant 0 : index
    %c0_21 = arith.constant 0 : index
    %113 = vector.load %arg1[%c0_20, %c0_21] : memref<16x16xf32, #tpu.memory_space<vmem>>, vector<16x16xf32>
    %114 = vector.shape_cast %113 : vector<16x16xf32> to vector<1x16x16xf32>
    %115 = vector.broadcast %114 : vector<1x16x16xf32> to vector<4x16x16xf32>
    %116 = arith.addf %112, %115 : vector<4x16x16xf32>
    %cst_22 = arith.constant dense<0xFF800000> : vector<4x16xf32>
    %117 = vector.multi_reduction <maximumf>, %116, %cst_22 [2] : vector<4x16x16xf32> to vector<4x16xf32>
    %118 = vector.shape_cast %117 : vector<4x16xf32> to vector<4x16x1xf32>
    %119 = vector.broadcast %118 : vector<4x16x1xf32> to vector<4x16x16xf32>
    %120 = arith.subf %116, %119 : vector<4x16x16xf32>
    %121 = math.exp %120 : vector<4x16x16xf32>
    %cst_23 = arith.constant dense<0.000000e+00> : vector<4x16xf32>
    %122 = vector.multi_reduction <add>, %121, %cst_23 [2] : vector<4x16x16xf32> to vector<4x16xf32>
    %123 = vector.shape_cast %122 : vector<4x16xf32> to vector<4x16x1xf32>
    %124 = tpu.reciprocal %123 {approx = true} : vector<4x16x1xf32> -> vector<4x16x1xf32>
    %125 = vector.broadcast %124 : vector<4x16x1xf32> to vector<4x16x16xf32>
    %126 = arith.mulf %121, %125 : vector<4x16x16xf32>
    "tpu.trace_start"() <{level = 10 : i32, message = "hqk,hkd->hqd"}> : () -> ()
    %cst_24 = arith.constant dense<0.000000e+00> : vector<4x16x32xf32>
    %127 = tpu.matmul %126, %109, %cst_24 {dimension_numbers = #tpu.dot_dimension_numbers<[2], [1], [1], [2], [0, 0, 0, 1, 1, 2], [0], [0]>} : vector<4x16x16xf32>, vector<4x16x32xf32>, vector<4x16x32xf32> -> vector<4x16x32xf32>
    "tpu.trace_stop"() : () -> ()
    %128 = tpu.transpose %127, [1, 0, 2] : vector<4x16x32xf32> -> vector<16x4x32xf32>
    %129 = vector.shape_cast %128 : vector<16x4x32xf32> to vector<16x128xf32>
    %130 = arith.truncf %129 : vector<16x128xf32> to vector<16x128xbf16>
    %c0_25 = arith.constant 0 : index
    %c0_26 = arith.constant 0 : index
    %131 = vector.load %arg7[%c0_25, %c0_26] : memref<128x128xbf16, #tpu.memory_space<vmem>>, vector<128x128xbf16>
    %cst_27 = arith.constant dense<0.000000e+00> : vector<16x128xf32>
    %132 = tpu.matmul %130, %131, %cst_27 {dimension_numbers = #tpu.dot_dimension_numbers<[1], [0], [0], [1], [0, 0, 1, 1], [], []>} : vector<16x128xbf16>, vector<128x128xbf16>, vector<16x128xf32> -> vector<16x128xf32>
    %c0_28 = arith.constant 0 : index
    %c0_29 = arith.constant 0 : index
    %133 = vector.load %arg8[%c0_28, %c0_29] : memref<1x128xf32, #tpu.memory_space<vmem>>, vector<1x128xf32>
    %134 = vector.broadcast %133 : vector<1x128xf32> to vector<16x128xf32>
    %135 = arith.addf %132, %134 : vector<16x128xf32>
    %136 = arith.addf %70, %135 : vector<16x128xf32>
    %c0_30 = arith.constant 0 : index
    %c0_31 = arith.constant 0 : index
    %137 = vector.load %arg9[%c0_30, %c0_31] : memref<1x128xf32, #tpu.memory_space<vmem>>, vector<1x128xf32>
    %c0_32 = arith.constant 0 : index
    %c0_33 = arith.constant 0 : index
    %138 = vector.load %arg10[%c0_32, %c0_33] : memref<1x128xf32, #tpu.memory_space<vmem>>, vector<1x128xf32>
    %cst_34 = arith.constant dense<0.000000e+00> : vector<16xf32>
    %139 = vector.multi_reduction <add>, %136, %cst_34 [1] : vector<16x128xf32> to vector<16xf32>
    %140 = vector.shape_cast %139 : vector<16xf32> to vector<16x1xf32>
    %cst_35 = arith.constant 1.280000e+02 : f32
    %141 = vector.broadcast %cst_35 : f32 to vector<16x1xf32>
    %142 = arith.divf %140, %141 : vector<16x1xf32>
    %143 = vector.broadcast %142 : vector<16x1xf32> to vector<16x128xf32>
    %144 = arith.subf %136, %143 : vector<16x128xf32>
    %145 = arith.mulf %144, %144 : vector<16x128xf32>
    %cst_36 = arith.constant dense<0.000000e+00> : vector<16xf32>
    %146 = vector.multi_reduction <add>, %145, %cst_36 [1] : vector<16x128xf32> to vector<16xf32>
    %147 = vector.shape_cast %146 : vector<16xf32> to vector<16x1xf32>
    %cst_37 = arith.constant 1.280000e+02 : f32
    %148 = vector.broadcast %cst_37 : f32 to vector<16x1xf32>
    %149 = arith.divf %147, %148 : vector<16x1xf32>
    %150 = vector.broadcast %142 : vector<16x1xf32> to vector<16x128xf32>
    %151 = arith.subf %136, %150 : vector<16x128xf32>
    %cst_38 = arith.constant 9.99999974E-6 : f32
    %152 = vector.broadcast %cst_38 : f32 to vector<16x1xf32>
    %153 = arith.addf %149, %152 : vector<16x1xf32>
    %154 = math.rsqrt %153 : vector<16x1xf32>
    %155 = vector.broadcast %154 : vector<16x1xf32> to vector<16x128xf32>
    %156 = arith.mulf %151, %155 : vector<16x128xf32>
    %157 = vector.broadcast %137 : vector<1x128xf32> to vector<16x128xf32>
    %158 = arith.mulf %156, %157 : vector<16x128xf32>
    %159 = vector.broadcast %138 : vector<1x128xf32> to vector<16x128xf32>
    %160 = arith.addf %158, %159 : vector<16x128xf32>
    %161 = arith.truncf %160 : vector<16x128xf32> to vector<16x128xbf16>
    %c0_39 = arith.constant 0 : index
    %c0_40 = arith.constant 0 : index
    %162 = vector.load %arg11[%c0_39, %c0_40] : memref<128x512xbf16, #tpu.memory_space<vmem>>, vector<128x512xbf16>
    %cst_41 = arith.constant dense<0.000000e+00> : vector<16x512xf32>
    %163 = tpu.matmul %161, %162, %cst_41 {dimension_numbers = #tpu.dot_dimension_numbers<[1], [0], [0], [1], [0, 0, 1, 1], [], []>} : vector<16x128xbf16>, vector<128x512xbf16>, vector<16x512xf32> -> vector<16x512xf32>
    %c0_42 = arith.constant 0 : index
    %c0_43 = arith.constant 0 : index
    %164 = vector.load %arg12[%c0_42, %c0_43] : memref<1x512xf32, #tpu.memory_space<vmem>>, vector<1x512xf32>
    %165 = vector.broadcast %164 : vector<1x512xf32> to vector<16x512xf32>
    %166 = arith.addf %163, %165 : vector<16x512xf32>
    %167 = arith.mulf %166, %166 : vector<16x512xf32>
    %168 = arith.mulf %166, %167 : vector<16x512xf32>
    %cst_44 = arith.constant 4.471500e-02 : f32
    %169 = vector.broadcast %cst_44 : f32 to vector<16x512xf32>
    %170 = arith.mulf %169, %168 : vector<16x512xf32>
    %171 = arith.addf %166, %170 : vector<16x512xf32>
    %cst_45 = arith.constant 0.797884583 : f32
    %172 = vector.broadcast %cst_45 : f32 to vector<16x512xf32>
    %173 = arith.mulf %172, %171 : vector<16x512xf32>
    %174 = math.tanh %173 : vector<16x512xf32>
    %cst_46 = arith.constant 1.000000e+00 : f32
    %175 = vector.broadcast %cst_46 : f32 to vector<16x512xf32>
    %176 = arith.addf %175, %174 : vector<16x512xf32>
    %cst_47 = arith.constant 5.000000e-01 : f32
    %177 = vector.broadcast %cst_47 : f32 to vector<16x512xf32>
    %178 = arith.mulf %177, %176 : vector<16x512xf32>
    %179 = arith.mulf %166, %178 : vector<16x512xf32>
    %180 = arith.truncf %179 : vector<16x512xf32> to vector<16x512xbf16>
    %c0_48 = arith.constant 0 : index
    %c0_49 = arith.constant 0 : index
    %181 = vector.load %arg13[%c0_48, %c0_49] : memref<512x128xbf16, #tpu.memory_space<vmem>>, vector<512x128xbf16>
    %cst_50 = arith.constant dense<0.000000e+00> : vector<16x128xf32>
    %182 = tpu.matmul %180, %181, %cst_50 {dimension_numbers = #tpu.dot_dimension_numbers<[1], [0], [0], [1], [0, 0, 1, 1], [], []>} : vector<16x512xbf16>, vector<512x128xbf16>, vector<16x128xf32> -> vector<16x128xf32>
    %c0_51 = arith.constant 0 : index
    %c0_52 = arith.constant 0 : index
    %183 = vector.load %arg14[%c0_51, %c0_52] : memref<1x128xf32, #tpu.memory_space<vmem>>, vector<1x128xf32>
    %184 = vector.broadcast %183 : vector<1x128xf32> to vector<16x128xf32>
    %185 = arith.addf %182, %184 : vector<16x128xf32>
    %186 = arith.addf %136, %185 : vector<16x128xf32>
    %c0_53 = arith.constant 0 : index
    %c0_54 = arith.constant 0 : index
    %187 = vector.load %arg15[%c0_53, %c0_54] : memref<1x128xf32, #tpu.memory_space<vmem>>, vector<1x128xf32>
    %c0_55 = arith.constant 0 : index
    %c0_56 = arith.constant 0 : index
    %188 = vector.load %arg16[%c0_55, %c0_56] : memref<1x128xf32, #tpu.memory_space<vmem>>, vector<1x128xf32>
    %cst_57 = arith.constant dense<0.000000e+00> : vector<16xf32>
    %189 = vector.multi_reduction <add>, %186, %cst_57 [1] : vector<16x128xf32> to vector<16xf32>
    %190 = vector.shape_cast %189 : vector<16xf32> to vector<16x1xf32>
    %cst_58 = arith.constant 1.280000e+02 : f32
    %191 = vector.broadcast %cst_58 : f32 to vector<16x1xf32>
    %192 = arith.divf %190, %191 : vector<16x1xf32>
    %193 = vector.broadcast %192 : vector<16x1xf32> to vector<16x128xf32>
    %194 = arith.subf %186, %193 : vector<16x128xf32>
    %195 = arith.mulf %194, %194 : vector<16x128xf32>
    %cst_59 = arith.constant dense<0.000000e+00> : vector<16xf32>
    %196 = vector.multi_reduction <add>, %195, %cst_59 [1] : vector<16x128xf32> to vector<16xf32>
    %197 = vector.shape_cast %196 : vector<16xf32> to vector<16x1xf32>
    %cst_60 = arith.constant 1.280000e+02 : f32
    %198 = vector.broadcast %cst_60 : f32 to vector<16x1xf32>
    %199 = arith.divf %197, %198 : vector<16x1xf32>
    %200 = vector.broadcast %192 : vector<16x1xf32> to vector<16x128xf32>
    %201 = arith.subf %186, %200 : vector<16x128xf32>
    %cst_61 = arith.constant 9.99999974E-6 : f32
    %202 = vector.broadcast %cst_61 : f32 to vector<16x1xf32>
    %203 = arith.addf %199, %202 : vector<16x1xf32>
    %204 = math.rsqrt %203 : vector<16x1xf32>
    %205 = vector.broadcast %204 : vector<16x1xf32> to vector<16x128xf32>
    %206 = arith.mulf %201, %205 : vector<16x128xf32>
    %207 = vector.broadcast %187 : vector<1x128xf32> to vector<16x128xf32>
    %208 = arith.mulf %206, %207 : vector<16x128xf32>
    %209 = vector.broadcast %188 : vector<1x128xf32> to vector<16x128xf32>
    %210 = arith.addf %208, %209 : vector<16x128xf32>
    %211 = arith.truncf %210 : vector<16x128xf32> to vector<16x128xbf16>
    %c0_62 = arith.constant 0 : index
    %c0_63 = arith.constant 0 : index
    %212 = vector.load %arg17[%c0_62, %c0_63] : memref<128x256xbf16, #tpu.memory_space<vmem>>, vector<128x256xbf16>
    %cst_64 = arith.constant dense<0.000000e+00> : vector<16x256xf32>
    %213 = tpu.matmul %211, %212, %cst_64 {dimension_numbers = #tpu.dot_dimension_numbers<[1], [0], [0], [1], [0, 0, 1, 1], [], []>} : vector<16x128xbf16>, vector<128x256xbf16>, vector<16x256xf32> -> vector<16x256xf32>
    %c0_65 = arith.constant 0 : index
    %c0_66 = arith.constant 0 : index
    %214 = vector.load %arg18[%c0_65, %c0_66] : memref<16x256xf32, #tpu.memory_space<vmem>>, vector<16x256xf32>
    tpu.vector_store %arg18[%c0_65, %c0_66], %213 {strides = array<i32>} : memref<16x256xf32, #tpu.memory_space<vmem>>, vector<16x256xf32>,
    return
  }
}

</mosaic_0001>

<llo_original>
// kernel: fine_unigpt_forward.1
$region0: #{fine_unigpt_forward.1}
  #allocation0 [shape = 'u32[]', space=smem, size = 0x4, offset = 0x4, fixed_abs, tag = 'smem constant byte address 0x4 - core index']
  #allocation1 [shape = 'u32[72,128]{1,0:T(1,128)}', space=vmem, size = 0x9000, scoped, tag = 'internal scratch']
  %s0 = inlined_call_operand.vmem [shape: s32[16,16], index: 0, kind: input, shape index: {}]
  %s1 = inlined_call_operand.vmem [shape: f32[16,16], index: 1, kind: input, shape index: {}]
  %s2 = inlined_call_operand.vmem [shape: f32[768,128], index: 2, kind: input, shape index: {}]
  %s3 = inlined_call_operand.vmem [shape: f32[1,128], index: 3, kind: input, shape index: {}]
  %s4 = inlined_call_operand.vmem [shape: f32[1,128], index: 4, kind: input, shape index: {}]
  %s5 = inlined_call_operand.vmem [shape: bf16[128,384], index: 5, kind: input, shape index: {}]
  %s6 = inlined_call_operand.vmem [shape: f32[1,384], index: 6, kind: input, shape index: {}]
  %s7 = inlined_call_operand.vmem [shape: bf16[128,128], index: 7, kind: input, shape index: {}]
  %s8 = inlined_call_operand.vmem [shape: f32[1,128], index: 8, kind: input, shape index: {}]
  %s9 = inlined_call_operand.vmem [shape: f32[1,128], index: 9, kind: input, shape index: {}]
  %s10 = inlined_call_operand.vmem [shape: f32[1,128], index: 10, kind: input, shape index: {}]
  %s11 = inlined_call_operand.vmem [shape: bf16[128,512], index: 11, kind: input, shape index: {}]
  %s12 = inlined_call_operand.vmem [shape: f32[1,512], index: 12, kind: input, shape index: {}]
  %s13 = inlined_call_operand.vmem [shape: bf16[512,128], index: 13, kind: input, shape index: {}]
  %s14 = inlined_call_operand.vmem [shape: f32[1,128], index: 14, kind: input, shape index: {}]
  %s15 = inlined_call_operand.vmem [shape: f32[1,128], index: 15, kind: input, shape index: {}]
  %s16 = inlined_call_operand.vmem [shape: f32[1,128], index: 16, kind: input, shape index: {}]
  %s17 = inlined_call_operand.vmem [shape: bf16[128,256], index: 17, kind: input, shape index: {}]
  %s18 = inlined_call_operand.vmem [shape: f32[16,256], index: 18, kind: output, shape index: {}]
  %s19 = sld [smem:[#allocation0]]
  $region82: #{fine_unigpt_forward.1} parent=0
    _
  %s21 = ssub.s32 1, %s19
  %s22 = scalar_select 0, %s21, %s19
  // Predicated region
  $region2: #{fine_unigpt_forward.1} parent=0 // pred_check
    _
  $region3: #{fine_unigpt_forward.1} parent=0 // pred_check_branch
    %24 = sbr.rel (0) target = $region5
  $region4: #{fine_unigpt_forward.1} parent=0 // pred_region
    _
  $region5: #{fine_unigpt_forward.1} parent=0 // pred_fallthru
    _
  // Predicated region
  $region6: #{fine_unigpt_forward.1} parent=0 // pred_check
    _
  $region7: #{fine_unigpt_forward.1} parent=0 // pred_check_branch
    %26 = sbr.rel (0) target = $region9
  $region8: #{fine_unigpt_forward.1} parent=0 // pred_region
    _
  $region9: #{fine_unigpt_forward.1} parent=0 // pred_fallthru
    _
  // Predicated region
  $region10: #{fine_unigpt_forward.1} parent=0 // pred_check
    _
  $region11: #{fine_unigpt_forward.1} parent=0 // pred_check_branch
    %28 = sbr.rel (0) target = $region13
  $region12: #{fine_unigpt_forward.1} parent=0 // pred_region
    _
  $region13: #{fine_unigpt_forward.1} parent=0 // pred_fallthru
    _
  // Predicated region
  $region14: #{fine_unigpt_forward.1} parent=0 // pred_check
    _
  $region15: #{fine_unigpt_forward.1} parent=0 // pred_check_branch
    %30 = sbr.rel (0) target = $region17
  $region16: #{fine_unigpt_forward.1} parent=0 // pred_region
    _
  $region17: #{fine_unigpt_forward.1} parent=0 // pred_fallthru
    _
  // Predicated region
  $region18: #{fine_unigpt_forward.1} parent=0 // pred_check
    _
  $region19: #{fine_unigpt_forward.1} parent=0 // pred_check_branch
    %32 = sbr.rel (0) target = $region21
  $region20: #{fine_unigpt_forward.1} parent=0 // pred_region
    _
  $region21: #{fine_unigpt_forward.1} parent=0 // pred_fallthru
    _
  // Predicated region
  $region22: #{fine_unigpt_forward.1} parent=0 // pred_check
    _
  $region23: #{fine_unigpt_forward.1} parent=0 // pred_check_branch
    %34 = sbr.rel (0) target = $region25
  $region24: #{fine_unigpt_forward.1} parent=0 // pred_region
    _
  $region25: #{fine_unigpt_forward.1} parent=0 // pred_fallthru
    _
  // Predicated region
  $region26: #{fine_unigpt_forward.1} parent=0 // pred_check
    _
  $region27: #{fine_unigpt_forward.1} parent=0 // pred_check_branch
    %36 = sbr.rel (0) target = $region29
  $region28: #{fine_unigpt_forward.1} parent=0 // pred_region
    _
  $region29: #{fine_unigpt_forward.1} parent=0 // pred_fallthru
    _
  // Predicated region
  $region30: #{fine_unigpt_forward.1} parent=0 // pred_check
    _
  $region31: #{fine_unigpt_forward.1} parent=0 // pred_check_branch
    %38 = sbr.rel (0) target = $region33
  $region32: #{fine_unigpt_forward.1} parent=0 // pred_region
    _
  $region33: #{fine_unigpt_forward.1} parent=0 // pred_fallthru
    _
  // Predicated region
  $region34: #{fine_unigpt_forward.1} parent=0 // pred_check
    _
  $region35: #{fine_unigpt_forward.1} parent=0 // pred_check_branch
    %40 = sbr.rel (0) target = $region37
  $region36: #{fine_unigpt_forward.1} parent=0 // pred_region
    _
  $region37: #{fine_unigpt_forward.1} parent=0 // pred_fallthru
    _
  // Predicated region
  $region38: #{fine_unigpt_forward.1} parent=0 // pred_check
    _
  $region39: #{fine_unigpt_forward.1} parent=0 // pred_check_branch
    %42 = sbr.rel (0) target = $region41
  $region40: #{fine_unigpt_forward.1} parent=0 // pred_region
    _
  $region41: #{fine_unigpt_forward.1} parent=0 // pred_fallthru
    _
  // Predicated region
  $region42: #{fine_unigpt_forward.1} parent=0 // pred_check
    _
  $region43: #{fine_unigpt_forward.1} parent=0 // pred_check_branch
    %44 = sbr.rel (0) target = $region45
  $region44: #{fine_unigpt_forward.1} parent=0 // pred_region
    _
  $region45: #{fine_unigpt_forward.1} parent=0 // pred_fallthru
    _
  // Predicated region
  $region46: #{fine_unigpt_forward.1} parent=0 // pred_check
    _
  $region47: #{fine_unigpt_forward.1} parent=0 // pred_check_branch
    %46 = sbr.rel (0) target = $region49
  $region48: #{fine_unigpt_forward.1} parent=0 // pred_region
    _
  $region49: #{fine_unigpt_forward.1} parent=0 // pred_fallthru
    _
  // Predicated region
  $region50: #{fine_unigpt_forward.1} parent=0 // pred_check
    _
  $region51: #{fine_unigpt_forward.1} parent=0 // pred_check_branch
    %48 = sbr.rel (0) target = $region53
  $region52: #{fine_unigpt_forward.1} parent=0 // pred_region
    _
  $region53: #{fine_unigpt_forward.1} parent=0 // pred_fallthru
    _
  // Predicated region
  $region54: #{fine_unigpt_forward.1} parent=0 // pred_check
    _
  $region55: #{fine_unigpt_forward.1} parent=0 // pred_check_branch
    %50 = sbr.rel (0) target = $region57
  $region56: #{fine_unigpt_forward.1} parent=0 // pred_region
    _
  $region57: #{fine_unigpt_forward.1} parent=0 // pred_fallthru
    _
  // Predicated region
  $region58: #{fine_unigpt_forward.1} parent=0 // pred_check
    _
  $region59: #{fine_unigpt_forward.1} parent=0 // pred_check_branch
    %52 = sbr.rel (0) target = $region61
  $region60: #{fine_unigpt_forward.1} parent=0 // pred_region
    _
  $region61: #{fine_unigpt_forward.1} parent=0 // pred_fallthru
    _
  // Predicated region
  $region62: #{fine_unigpt_forward.1} parent=0 // pred_check
    _
  $region63: #{fine_unigpt_forward.1} parent=0 // pred_check_branch
    %54 = sbr.rel (0) target = $region65
  $region64: #{fine_unigpt_forward.1} parent=0 // pred_region
    _
  $region65: #{fine_unigpt_forward.1} parent=0 // pred_fallthru
    _
  // Predicated region
  $region66: #{fine_unigpt_forward.1} parent=0 // pred_check
    _
  $region67: #{fine_unigpt_forward.1} parent=0 // pred_check_branch
    %56 = sbr.rel (0) target = $region69
  $region68: #{fine_unigpt_forward.1} parent=0 // pred_region
    _
  $region69: #{fine_unigpt_forward.1} parent=0 // pred_fallthru
    _
  // Predicated region
  $region70: #{fine_unigpt_forward.1} parent=0 // pred_check
    _
  $region71: #{fine_unigpt_forward.1} parent=0 // pred_check_branch
    %58 = sbr.rel (0) target = $region73
  $region72: #{fine_unigpt_forward.1} parent=0 // pred_region
    _
  $region73: #{fine_unigpt_forward.1} parent=0 // pred_fallthru
    _
  %v59 = vld [vmem:[%s0] sm:$0xff]
  %v60 = vld [vmem:[%s0 + $0x8] sm:$0xff]
  %v61 = vlaneseq
  %v62 = vand.u32 %v61, 127
  %v63 = vadd.s32 %v62, 128
  %v64 = vadd.s32 %v62, 256
  %v65 = vadd.s32 %v62, 384
  %v66 = vadd.s32 %v62, 512
  %v67 = vadd.s32 %v62, 640
  %68 = vset.pattern.permute.xlu0 0
  %69 = vperm.xlu0 %68, %v59
  %v70 = vpop.permute.xlu0 %69
  %71 = vset.pattern.permute.xlu0 0
  %72 = vperm.xlu0 %71, %v60
  %v73 = vpop.permute.xlu0 %72
  %vm74 = vcmp.eq.s32.totalorder %v62, %v70
  %vm75 = vcmp.eq.s32.totalorder %v63, %v70
  %vm76 = vcmp.eq.s32.totalorder %v64, %v70
  %vm77 = vcmp.eq.s32.totalorder %v65, %v70
  %vm78 = vcmp.eq.s32.totalorder %v66, %v70
  %vm79 = vcmp.eq.s32.totalorder %v67, %v70
  %vm80 = vcmp.eq.s32.totalorder %v62, %v73
  %vm81 = vcmp.eq.s32.totalorder %v63, %v73
  %vm82 = vcmp.eq.s32.totalorder %v64, %v73
  %vm83 = vcmp.eq.s32.totalorder %v65, %v73
  %vm84 = vcmp.eq.s32.totalorder %v66, %v73
  %vm85 = vcmp.eq.s32.totalorder %v67, %v73
  %v86 = vsel %vm74, 1, 0
  %v87 = vsel %vm75, 1, 0
  %v88 = vsel %vm76, 1, 0
  %v89 = vsel %vm77, 1, 0
  %v90 = vsel %vm78, 1, 0
  %v91 = vsel %vm79, 1, 0
  %v92 = vsel %vm80, 1, 0
  %v93 = vsel %vm81, 1, 0
  %v94 = vsel %vm82, 1, 0
  %v95 = vsel %vm83, 1, 0
  %v96 = vsel %vm84, 1, 0
  %v97 = vsel %vm85, 1, 0
  %v98 = vcvt.s32.f32 %v86
  %v99 = vcvt.s32.f32 %v87
  %v100 = vcvt.s32.f32 %v88
  %v101 = vcvt.s32.f32 %v89
  %v102 = vcvt.s32.f32 %v90
  %v103 = vcvt.s32.f32 %v91
  %v104 = vcvt.s32.f32 %v92
  %v105 = vcvt.s32.f32 %v93
  %v106 = vcvt.s32.f32 %v94
  %v107 = vcvt.s32.f32 %v95
  %v108 = vcvt.s32.f32 %v96
  %v109 = vcvt.s32.f32 %v97
  %v110 = vadd.f32 %v98, 0.0
  %v111 = vadd.f32 %v99, 0.0
  %v112 = vadd.f32 %v100, 0.0
  %v113 = vadd.f32 %v101, 0.0
  %v114 = vadd.f32 %v102, 0.0
  %v115 = vadd.f32 %v103, 0.0
  %v116 = vadd.f32 %v104, 0.0
  %v117 = vadd.f32 %v105, 0.0
  %v118 = vadd.f32 %v106, 0.0
  %v119 = vadd.f32 %v107, 0.0
  %v120 = vadd.f32 %v108, 0.0
  %v121 = vadd.f32 %v109, 0.0
  %122 = vset.pattern.permute.xlu0 1
  %123 = vperm.xlu0 %122, %v59
  %v124 = vpop.permute.xlu0 %123
  %125 = vset.pattern.permute.xlu0 1
  %126 = vperm.xlu0 %125, %v60
  %v127 = vpop.permute.xlu0 %126
  %vm128 = vcmp.eq.s32.totalorder %v62, %v124
  %vm129 = vcmp.eq.s32.totalorder %v63, %v124
  %vm130 = vcmp.eq.s32.totalorder %v64, %v124
  %vm131 = vcmp.eq.s32.totalorder %v65, %v124
  %vm132 = vcmp.eq.s32.totalorder %v66, %v124
  %vm133 = vcmp.eq.s32.totalorder %v67, %v124
  %vm134 = vcmp.eq.s32.totalorder %v62, %v127
  %vm135 = vcmp.eq.s32.totalorder %v63, %v127
  %vm136 = vcmp.eq.s32.totalorder %v64, %v127
  %vm137 = vcmp.eq.s32.totalorder %v65, %v127
  %vm138 = vcmp.eq.s32.totalorder %v66, %v127
  %vm139 = vcmp.eq.s32.totalorder %v67, %v127
  %v140 = vsel %vm128, 1, 0
  %v141 = vsel %vm129, 1, 0
  %v142 = vsel %vm130, 1, 0
  %v143 = vsel %vm131, 1, 0
  %v144 = vsel %vm132, 1, 0
  %v145 = vsel %vm133, 1, 0
  %v146 = vsel %vm134, 1, 0
  %v147 = vsel %vm135, 1, 0
  %v148 = vsel %vm136, 1, 0
  %v149 = vsel %vm137, 1, 0
  %v150 = vsel %vm138, 1, 0
  %v151 = vsel %vm139, 1, 0
  %v152 = vcvt.s32.f32 %v140
  %v153 = vcvt.s32.f32 %v141
  %v154 = vcvt.s32.f32 %v142
  %v155 = vcvt.s32.f32 %v143
  %v156 = vcvt.s32.f32 %v144
  %v157 = vcvt.s32.f32 %v145
  %v158 = vcvt.s32.f32 %v146
  %v159 = vcvt.s32.f32 %v147
  %v160 = vcvt.s32.f32 %v148
  %v161 = vcvt.s32.f32 %v149
  %v162 = vcvt.s32.f32 %v150
  %v163 = vcvt.s32.f32 %v151
  %v164 = vadd.f32 %v110, %v152
  %v165 = vadd.f32 %v111, %v153
  %v166 = vadd.f32 %v112, %v154
  %v167 = vadd.f32 %v113, %v155
  %v168 = vadd.f32 %v114, %v156
  %v169 = vadd.f32 %v115, %v157
  %v170 = vadd.f32 %v116, %v158
  %v171 = vadd.f32 %v117, %v159
  %v172 = vadd.f32 %v118, %v160
  %v173 = vadd.f32 %v119, %v161
  %v174 = vadd.f32 %v120, %v162
  %v175 = vadd.f32 %v121, %v163
  %176 = vset.pattern.permute.xlu0 2
  %177 = vperm.xlu0 %176, %v59
  %v178 = vpop.permute.xlu0 %177
  %179 = vset.pattern.permute.xlu0 2
  %180 = vperm.xlu0 %179, %v60
  %v181 = vpop.permute.xlu0 %180
  %vm182 = vcmp.eq.s32.totalorder %v62, %v178
  %vm183 = vcmp.eq.s32.totalorder %v63, %v178
  %vm184 = vcmp.eq.s32.totalorder %v64, %v178
  %vm185 = vcmp.eq.s32.totalorder %v65, %v178
  %vm186 = vcmp.eq.s32.totalorder %v66, %v178
  %vm187 = vcmp.eq.s32.totalorder %v67, %v178
  %vm188 = vcmp.eq.s32.totalorder %v62, %v181
  %vm189 = vcmp.eq.s32.totalorder %v63, %v181
  %vm190 = vcmp.eq.s32.totalorder %v64, %v181
  %vm191 = vcmp.eq.s32.totalorder %v65, %v181
  %vm192 = vcmp.eq.s32.totalorder %v66, %v181
  %vm193 = vcmp.eq.s32.totalorder %v67, %v181
  %v194 = vsel %vm182, 1, 0
  %v195 = vsel %vm183, 1, 0
  %v196 = vsel %vm184, 1, 0
  %v197 = vsel %vm185, 1, 0
  %v198 = vsel %vm186, 1, 0
  %v199 = vsel %vm187, 1, 0
  %v200 = vsel %vm188, 1, 0
  %v201 = vsel %vm189, 1, 0
  %v202 = vsel %vm190, 1, 0
  %v203 = vsel %vm191, 1, 0
  %v204 = vsel %vm192, 1, 0
  %v205 = vsel %vm193, 1, 0
  %v206 = vcvt.s32.f32 %v194
  %v207 = vcvt.s32.f32 %v195
  %v208 = vcvt.s32.f32 %v196
  %v209 = vcvt.s32.f32 %v197
  %v210 = vcvt.s32.f32 %v198
  %v211 = vcvt.s32.f32 %v199
  %v212 = vcvt.s32.f32 %v200
  %v213 = vcvt.s32.f32 %v201
  %v214 = vcvt.s32.f32 %v202
  %v215 = vcvt.s32.f32 %v203
  %v216 = vcvt.s32.f32 %v204
  %v217 = vcvt.s32.f32 %v205
  %v218 = vadd.f32 %v164, %v206
  %v219 = vadd.f32 %v165, %v207
  %v220 = vadd.f32 %v166, %v208
  %v221 = vadd.f32 %v167, %v209
  %v222 = vadd.f32 %v168, %v210
  %v223 = vadd.f32 %v169, %v211
  %v224 = vadd.f32 %v170, %v212
  %v225 = vadd.f32 %v171, %v213
  %v226 = vadd.f32 %v172, %v214
  %v227 = vadd.f32 %v173, %v215
  %v228 = vadd.f32 %v174, %v216
  %v229 = vadd.f32 %v175, %v217
  %230 = vset.pattern.permute.xlu0 3
  %231 = vperm.xlu0 %230, %v59
  %v232 = vpop.permute.xlu0 %231
  %233 = vset.pattern.permute.xlu0 3
  %234 = vperm.xlu0 %233, %v60
  %v235 = vpop.permute.xlu0 %234
  %vm236 = vcmp.eq.s32.totalorder %v62, %v232
  %vm237 = vcmp.eq.s32.totalorder %v63, %v232
  %vm238 = vcmp.eq.s32.totalorder %v64, %v232
  %vm239 = vcmp.eq.s32.totalorder %v65, %v232
  %vm240 = vcmp.eq.s32.totalorder %v66, %v232
  %vm241 = vcmp.eq.s32.totalorder %v67, %v232
  %vm242 = vcmp.eq.s32.totalorder %v62, %v235
  %vm243 = vcmp.eq.s32.totalorder %v63, %v235
  %vm244 = vcmp.eq.s32.totalorder %v64, %v235
  %vm245 = vcmp.eq.s32.totalorder %v65, %v235
  %vm246 = vcmp.eq.s32.totalorder %v66, %v235
  %vm247 = vcmp.eq.s32.totalorder %v67, %v235
  %v248 = vsel %vm236, 1, 0
  %v249 = vsel %vm237, 1, 0
  %v250 = vsel %vm238, 1, 0
  %v251 = vsel %vm239, 1, 0
  %v252 = vsel %vm240, 1, 0
  %v253 = vsel %vm241, 1, 0
  %v254 = vsel %vm242, 1, 0
  %v255 = vsel %vm243, 1, 0
  %v256 = vsel %vm244, 1, 0
  %v257 = vsel %vm245, 1, 0
  %v258 = vsel %vm246, 1, 0
  %v259 = vsel %vm247, 1, 0
  %v260 = vcvt.s32.f32 %v248
  %v261 = vcvt.s32.f32 %v249
  %v262 = vcvt.s32.f32 %v250
  %v263 = vcvt.s32.f32 %v251
  %v264 = vcvt.s32.f32 %v252
  %v265 = vcvt.s32.f32 %v253
  %v266 = vcvt.s32.f32 %v254
  %v267 = vcvt.s32.f32 %v255
  %v268 = vcvt.s32.f32 %v256
  %v269 = vcvt.s32.f32 %v257
  %v270 = vcvt.s32.f32 %v258
  %v271 = vcvt.s32.f32 %v259
  %v272 = vadd.f32 %v218, %v260
  %v273 = vadd.f32 %v219, %v261
  %v274 = vadd.f32 %v220, %v262
  %v275 = vadd.f32 %v221, %v263
  %v276 = vadd.f32 %v222, %v264
  %v277 = vadd.f32 %v223, %v265
  %v278 = vadd.f32 %v224, %v266
  %v279 = vadd.f32 %v225, %v267
  %v280 = vadd.f32 %v226, %v268
  %v281 = vadd.f32 %v227, %v269
  %v282 = vadd.f32 %v228, %v270
  %v283 = vadd.f32 %v229, %v271
  %284 = vset.pattern.permute.xlu0 4
  %285 = vperm.xlu0 %284, %v59
  %v286 = vpop.permute.xlu0 %285
  %287 = vset.pattern.permute.xlu0 4
  %288 = vperm.xlu0 %287, %v60
  %v289 = vpop.permute.xlu0 %288
  %vm290 = vcmp.eq.s32.totalorder %v62, %v286
  %vm291 = vcmp.eq.s32.totalorder %v63, %v286
  %vm292 = vcmp.eq.s32.totalorder %v64, %v286
  %vm293 = vcmp.eq.s32.totalorder %v65, %v286
  %vm294 = vcmp.eq.s32.totalorder %v66, %v286
  %vm295 = vcmp.eq.s32.totalorder %v67, %v286
  %vm296 = vcmp.eq.s32.totalorder %v62, %v289
  %vm297 = vcmp.eq.s32.totalorder %v63, %v289
  %vm298 = vcmp.eq.s32.totalorder %v64, %v289
  %vm299 = vcmp.eq.s32.totalorder %v65, %v289
  %vm300 = vcmp.eq.s32.totalorder %v66, %v289
  %vm301 = vcmp.eq.s32.totalorder %v67, %v289
  %v302 = vsel %vm290, 1, 0
  %v303 = vsel %vm291, 1, 0
  %v304 = vsel %vm292, 1, 0
  %v305 = vsel %vm293, 1, 0
  %v306 = vsel %vm294, 1, 0
  %v307 = vsel %vm295, 1, 0
  %v308 = vsel %vm296, 1, 0
  %v309 = vsel %vm297, 1, 0
  %v310 = vsel %vm298, 1, 0
  %v311 = vsel %vm299, 1, 0
  %v312 = vsel %vm300, 1, 0
  %v313 = vsel %vm301, 1, 0
  %v314 = vcvt.s32.f32 %v302
  %v315 = vcvt.s32.f32 %v303
  %v316 = vcvt.s32.f32 %v304
  %v317 = vcvt.s32.f32 %v305
  %v318 = vcvt.s32.f32 %v306
  %v319 = vcvt.s32.f32 %v307
  %v320 = vcvt.s32.f32 %v308
  %v321 = vcvt.s32.f32 %v309
  %v322 = vcvt.s32.f32 %v310
  %v323 = vcvt.s32.f32 %v311
  %v324 = vcvt.s32.f32 %v312
  %v325 = vcvt.s32.f32 %v313
  %v326 = vadd.f32 %v272, %v314
  %v327 = vadd.f32 %v273, %v315
  %v328 = vadd.f32 %v274, %v316
  %v329 = vadd.f32 %v275, %v317
  %v330 = vadd.f32 %v276, %v318
  %v331 = vadd.f32 %v277, %v319
  %v332 = vadd.f32 %v278, %v320
  %v333 = vadd.f32 %v279, %v321
  %v334 = vadd.f32 %v280, %v322
  %v335 = vadd.f32 %v281, %v323
  %v336 = vadd.f32 %v282, %v324
  %v337 = vadd.f32 %v283, %v325
  %338 = vset.pattern.permute.xlu0 5
  %339 = vperm.xlu0 %338, %v59
  %v340 = vpop.permute.xlu0 %339
  %341 = vset.pattern.permute.xlu0 5
  %342 = vperm.xlu0 %341, %v60
  %v343 = vpop.permute.xlu0 %342
  %vm344 = vcmp.eq.s32.totalorder %v62, %v340
  %vm345 = vcmp.eq.s32.totalorder %v63, %v340
  %vm346 = vcmp.eq.s32.totalorder %v64, %v340
  %vm347 = vcmp.eq.s32.totalorder %v65, %v340
  %vm348 = vcmp.eq.s32.totalorder %v66, %v340
  %vm349 = vcmp.eq.s32.totalorder %v67, %v340
  %vm350 = vcmp.eq.s32.totalorder %v62, %v343
  %vm351 = vcmp.eq.s32.totalorder %v63, %v343
  %vm352 = vcmp.eq.s32.totalorder %v64, %v343
  %vm353 = vcmp.eq.s32.totalorder %v65, %v343
  %vm354 = vcmp.eq.s32.totalorder %v66, %v343
  %vm355 = vcmp.eq.s32.totalorder %v67, %v343
  %v356 = vsel %vm344, 1, 0
  %v357 = vsel %vm345, 1, 0
  %v358 = vsel %vm346, 1, 0
  %v359 = vsel %vm347, 1, 0
  %v360 = vsel %vm348, 1, 0
  %v361 = vsel %vm349, 1, 0
  %v362 = vsel %vm350, 1, 0
  %v363 = vsel %vm351, 1, 0
  %v364 = vsel %vm352, 1, 0
  %v365 = vsel %vm353, 1, 0
  %v366 = vsel %vm354, 1, 0
  %v367 = vsel %vm355, 1, 0
  %v368 = vcvt.s32.f32 %v356
  %v369 = vcvt.s32.f32 %v357
  %v370 = vcvt.s32.f32 %v358
  %v371 = vcvt.s32.f32 %v359
  %v372 = vcvt.s32.f32 %v360
  %v373 = vcvt.s32.f32 %v361
  %v374 = vcvt.s32.f32 %v362
  %v375 = vcvt.s32.f32 %v363
  %v376 = vcvt.s32.f32 %v364
  %v377 = vcvt.s32.f32 %v365
  %v378 = vcvt.s32.f32 %v366
  %v379 = vcvt.s32.f32 %v367
  %v380 = vadd.f32 %v326, %v368
  %v381 = vadd.f32 %v327, %v369
  %v382 = vadd.f32 %v328, %v370
  %v383 = vadd.f32 %v329, %v371
  %v384 = vadd.f32 %v330, %v372
  %v385 = vadd.f32 %v331, %v373
  %v386 = vadd.f32 %v332, %v374
  %v387 = vadd.f32 %v333, %v375
  %v388 = vadd.f32 %v334, %v376
  %v389 = vadd.f32 %v335, %v377
  %v390 = vadd.f32 %v336, %v378
  %v391 = vadd.f32 %v337, %v379
  %392 = vset.pattern.permute.xlu0 6
  %393 = vperm.xlu0 %392, %v59
  %v394 = vpop.permute.xlu0 %393
  %395 = vset.pattern.permute.xlu0 6
  %396 = vperm.xlu0 %395, %v60
  %v397 = vpop.permute.xlu0 %396
  %vm398 = vcmp.eq.s32.totalorder %v62, %v394
  %vm399 = vcmp.eq.s32.totalorder %v63, %v394
  %vm400 = vcmp.eq.s32.totalorder %v64, %v394
  %vm401 = vcmp.eq.s32.totalorder %v65, %v394
  %vm402 = vcmp.eq.s32.totalorder %v66, %v394
  %vm403 = vcmp.eq.s32.totalorder %v67, %v394
  %vm404 = vcmp.eq.s32.totalorder %v62, %v397
  %vm405 = vcmp.eq.s32.totalorder %v63, %v397
  %vm406 = vcmp.eq.s32.totalorder %v64, %v397
  %vm407 = vcmp.eq.s32.totalorder %v65, %v397
  %vm408 = vcmp.eq.s32.totalorder %v66, %v397
  %vm409 = vcmp.eq.s32.totalorder %v67, %v397
  %v410 = vsel %vm398, 1, 0
  %v411 = vsel %vm399, 1, 0
  %v412 = vsel %vm400, 1, 0
  %v413 = vsel %vm401, 1, 0
  %v414 = vsel %vm402, 1, 0
  %v415 = vsel %vm403, 1, 0
  %v416 = vsel %vm404, 1, 0
  %v417 = vsel %vm405, 1, 0
  %v418 = vsel %vm406, 1, 0
  %v419 = vsel %vm407, 1, 0
  %v420 = vsel %vm408, 1, 0
  %v421 = vsel %vm409, 1, 0
  %v422 = vcvt.s32.f32 %v410
  %v423 = vcvt.s32.f32 %v411
  %v424 = vcvt.s32.f32 %v412
  %v425 = vcvt.s32.f32 %v413
  %v426 = vcvt.s32.f32 %v414
  %v427 = vcvt.s32.f32 %v415
  %v428 = vcvt.s32.f32 %v416
  %v429 = vcvt.s32.f32 %v417
  %v430 = vcvt.s32.f32 %v418
  %v431 = vcvt.s32.f32 %v419
  %v432 = vcvt.s32.f32 %v420
  %v433 = vcvt.s32.f32 %v421
  %v434 = vadd.f32 %v380, %v422
  %v435 = vadd.f32 %v381, %v423
  %v436 = vadd.f32 %v382, %v424
  %v437 = vadd.f32 %v383, %v425
  %v438 = vadd.f32 %v384, %v426
  %v439 = vadd.f32 %v385, %v427
  %v440 = vadd.f32 %v386, %v428
  %v441 = vadd.f32 %v387, %v429
  %v442 = vadd.f32 %v388, %v430
  %v443 = vadd.f32 %v389, %v431
  %v444 = vadd.f32 %v390, %v432
  %v445 = vadd.f32 %v391, %v433
  %446 = vset.pattern.permute.xlu0 7
  %447 = vperm.xlu0 %446, %v59
  %v448 = vpop.permute.xlu0 %447
  %449 = vset.pattern.permute.xlu0 7
  %450 = vperm.xlu0 %449, %v60
  %v451 = vpop.permute.xlu0 %450
  %vm452 = vcmp.eq.s32.totalorder %v62, %v448
  %vm453 = vcmp.eq.s32.totalorder %v63, %v448
  %vm454 = vcmp.eq.s32.totalorder %v64, %v448
  %vm455 = vcmp.eq.s32.totalorder %v65, %v448
  %vm456 = vcmp.eq.s32.totalorder %v66, %v448
  %vm457 = vcmp.eq.s32.totalorder %v67, %v448
  %vm458 = vcmp.eq.s32.totalorder %v62, %v451
  %vm459 = vcmp.eq.s32.totalorder %v63, %v451
  %vm460 = vcmp.eq.s32.totalorder %v64, %v451
  %vm461 = vcmp.eq.s32.totalorder %v65, %v451
  %vm462 = vcmp.eq.s32.totalorder %v66, %v451
  %vm463 = vcmp.eq.s32.totalorder %v67, %v451
  %v464 = vsel %vm452, 1, 0
  %v465 = vsel %vm453, 1, 0
  %v466 = vsel %vm454, 1, 0
  %v467 = vsel %vm455, 1, 0
  %v468 = vsel %vm456, 1, 0
  %v469 = vsel %vm457, 1, 0
  %v470 = vsel %vm458, 1, 0
  %v471 = vsel %vm459, 1, 0
  %v472 = vsel %vm460, 1, 0
  %v473 = vsel %vm461, 1, 0
  %v474 = vsel %vm462, 1, 0
  %v475 = vsel %vm463, 1, 0
  %v476 = vcvt.s32.f32 %v464
  %v477 = vcvt.s32.f32 %v465
  %v478 = vcvt.s32.f32 %v466
  %v479 = vcvt.s32.f32 %v467
  %v480 = vcvt.s32.f32 %v468
  %v481 = vcvt.s32.f32 %v469
  %v482 = vcvt.s32.f32 %v470
  %v483 = vcvt.s32.f32 %v471
  %v484 = vcvt.s32.f32 %v472
  %v485 = vcvt.s32.f32 %v473
  %v486 = vcvt.s32.f32 %v474
  %v487 = vcvt.s32.f32 %v475
  %v488 = vadd.f32 %v434, %v476
  %v489 = vadd.f32 %v435, %v477
  %v490 = vadd.f32 %v436, %v478
  %v491 = vadd.f32 %v437, %v479
  %v492 = vadd.f32 %v438, %v480
  %v493 = vadd.f32 %v439, %v481
  %v494 = vadd.f32 %v440, %v482
  %v495 = vadd.f32 %v441, %v483
  %v496 = vadd.f32 %v442, %v484
  %v497 = vadd.f32 %v443, %v485
  %v498 = vadd.f32 %v444, %v486
  %v499 = vadd.f32 %v445, %v487
  %500 = vset.pattern.permute.xlu0 8
  %501 = vperm.xlu0 %500, %v59
  %v502 = vpop.permute.xlu0 %501
  %503 = vset.pattern.permute.xlu0 8
  %504 = vperm.xlu0 %503, %v60
  %v505 = vpop.permute.xlu0 %504
  %vm506 = vcmp.eq.s32.totalorder %v62, %v502
  %vm507 = vcmp.eq.s32.totalorder %v63, %v502
  %vm508 = vcmp.eq.s32.totalorder %v64, %v502
  %vm509 = vcmp.eq.s32.totalorder %v65, %v502
  %vm510 = vcmp.eq.s32.totalorder %v66, %v502
  %vm511 = vcmp.eq.s32.totalorder %v67, %v502
  %vm512 = vcmp.eq.s32.totalorder %v62, %v505
  %vm513 = vcmp.eq.s32.totalorder %v63, %v505
  %vm514 = vcmp.eq.s32.totalorder %v64, %v505
  %vm515 = vcmp.eq.s32.totalorder %v65, %v505
  %vm516 = vcmp.eq.s32.totalorder %v66, %v505
  %vm517 = vcmp.eq.s32.totalorder %v67, %v505
  %v518 = vsel %vm506, 1, 0
  %v519 = vsel %vm507, 1, 0
  %v520 = vsel %vm508, 1, 0
  %v521 = vsel %vm509, 1, 0
  %v522 = vsel %vm510, 1, 0
  %v523 = vsel %vm511, 1, 0
  %v524 = vsel %vm512, 1, 0
  %v525 = vsel %vm513, 1, 0
  %v526 = vsel %vm514, 1, 0
  %v527 = vsel %vm515, 1, 0
  %v528 = vsel %vm516, 1, 0
  %v529 = vsel %vm517, 1, 0
  %v530 = vcvt.s32.f32 %v518
  %v531 = vcvt.s32.f32 %v519
  %v532 = vcvt.s32.f32 %v520
  %v533 = vcvt.s32.f32 %v521
  %v534 = vcvt.s32.f32 %v522
  %v535 = vcvt.s32.f32 %v523
  %v536 = vcvt.s32.f32 %v524
  %v537 = vcvt.s32.f32 %v525
  %v538 = vcvt.s32.f32 %v526
  %v539 = vcvt.s32.f32 %v527
  %v540 = vcvt.s32.f32 %v528
  %v541 = vcvt.s32.f32 %v529
  %v542 = vadd.f32 %v488, %v530
  %v543 = vadd.f32 %v489, %v531
  %v544 = vadd.f32 %v490, %v532
  %v545 = vadd.f32 %v491, %v533
  %v546 = vadd.f32 %v492, %v534
  %v547 = vadd.f32 %v493, %v535
  %v548 = vadd.f32 %v494, %v536
  %v549 = vadd.f32 %v495, %v537
  %v550 = vadd.f32 %v496, %v538
  %v551 = vadd.f32 %v497, %v539
  %v552 = vadd.f32 %v498, %v540
  %v553 = vadd.f32 %v499, %v541
  %554 = vset.pattern.permute.xlu0 9
  %555 = vperm.xlu0 %554, %v59
  %v556 = vpop.permute.xlu0 %555
  %557 = vset.pattern.permute.xlu0 9
  %558 = vperm.xlu0 %557, %v60
  %v559 = vpop.permute.xlu0 %558
  %vm560 = vcmp.eq.s32.totalorder %v62, %v556
  %vm561 = vcmp.eq.s32.totalorder %v63, %v556
  %vm562 = vcmp.eq.s32.totalorder %v64, %v556
  %vm563 = vcmp.eq.s32.totalorder %v65, %v556
  %vm564 = vcmp.eq.s32.totalorder %v66, %v556
  %vm565 = vcmp.eq.s32.totalorder %v67, %v556
  %vm566 = vcmp.eq.s32.totalorder %v62, %v559
  %vm567 = vcmp.eq.s32.totalorder %v63, %v559
  %vm568 = vcmp.eq.s32.totalorder %v64, %v559
  %vm569 = vcmp.eq.s32.totalorder %v65, %v559
  %vm570 = vcmp.eq.s32.totalorder %v66, %v559
  %vm571 = vcmp.eq.s32.totalorder %v67, %v559
  %v572 = vsel %vm560, 1, 0
  %v573 = vsel %vm561, 1, 0
  %v574 = vsel %vm562, 1, 0
  %v575 = vsel %vm563, 1, 0
  %v576 = vsel %vm564, 1, 0
  %v577 = vsel %vm565, 1, 0
  %v578 = vsel %vm566, 1, 0
  %v579 = vsel %vm567, 1, 0
  %v580 = vsel %vm568, 1, 0
  %v581 = vsel %vm569, 1, 0
  %v582 = vsel %vm570, 1, 0
  %v583 = vsel %vm571, 1, 0
  %v584 = vcvt.s32.f32 %v572
  %v585 = vcvt.s32.f32 %v573
  %v586 = vcvt.s32.f32 %v574
  %v587 = vcvt.s32.f32 %v575
  %v588 = vcvt.s32.f32 %v576
  %v589 = vcvt.s32.f32 %v577
  %v590 = vcvt.s32.f32 %v578
  %v591 = vcvt.s32.f32 %v579
  %v592 = vcvt.s32.f32 %v580
  %v593 = vcvt.s32.f32 %v581
  %v594 = vcvt.s32.f32 %v582
  %v595 = vcvt.s32.f32 %v583
  %v596 = vadd.f32 %v542, %v584
  %v597 = vadd.f32 %v543, %v585
  %v598 = vadd.f32 %v544, %v586
  %v599 = vadd.f32 %v545, %v587
  %v600 = vadd.f32 %v546, %v588
  %v601 = vadd.f32 %v547, %v589
  %v602 = vadd.f32 %v548, %v590
  %v603 = vadd.f32 %v549, %v591
  %v604 = vadd.f32 %v550, %v592
  %v605 = vadd.f32 %v551, %v593
  %v606 = vadd.f32 %v552, %v594
  %v607 = vadd.f32 %v553, %v595
  %608 = vset.pattern.permute.xlu0 10
  %609 = vperm.xlu0 %608, %v59
  %v610 = vpop.permute.xlu0 %609
  %611 = vset.pattern.permute.xlu0 10
  %612 = vperm.xlu0 %611, %v60
  %v613 = vpop.permute.xlu0 %612
  %vm614 = vcmp.eq.s32.totalorder %v62, %v610
  %vm615 = vcmp.eq.s32.totalorder %v63, %v610
  %vm616 = vcmp.eq.s32.totalorder %v64, %v610
  %vm617 = vcmp.eq.s32.totalorder %v65, %v610
  %vm618 = vcmp.eq.s32.totalorder %v66, %v610
  %vm619 = vcmp.eq.s32.totalorder %v67, %v610
  %vm620 = vcmp.eq.s32.totalorder %v62, %v613
  %vm621 = vcmp.eq.s32.totalorder %v63, %v613
  %vm622 = vcmp.eq.s32.totalorder %v64, %v613
  %vm623 = vcmp.eq.s32.totalorder %v65, %v613
  %vm624 = vcmp.eq.s32.totalorder %v66, %v613
  %vm625 = vcmp.eq.s32.totalorder %v67, %v613
  %v626 = vsel %vm614, 1, 0
  %v627 = vsel %vm615, 1, 0
  %v628 = vsel %vm616, 1, 0
  %v629 = vsel %vm617, 1, 0
  %v630 = vsel %vm618, 1, 0
  %v631 = vsel %vm619, 1, 0
  %v632 = vsel %vm620, 1, 0
  %v633 = vsel %vm621, 1, 0
  %v634 = vsel %vm622, 1, 0
  %v635 = vsel %vm623, 1, 0
  %v636 = vsel %vm624, 1, 0
  %v637 = vsel %vm625, 1, 0
  %v638 = vcvt.s32.f32 %v626
  %v639 = vcvt.s32.f32 %v627
  %v640 = vcvt.s32.f32 %v628
  %v641 = vcvt.s32.f32 %v629
  %v642 = vcvt.s32.f32 %v630
  %v643 = vcvt.s32.f32 %v631
  %v644 = vcvt.s32.f32 %v632
  %v645 = vcvt.s32.f32 %v633
  %v646 = vcvt.s32.f32 %v634
  %v647 = vcvt.s32.f32 %v635
  %v648 = vcvt.s32.f32 %v636
  %v649 = vcvt.s32.f32 %v637
  %v650 = vadd.f32 %v596, %v638
  %v651 = vadd.f32 %v597, %v639
  %v652 = vadd.f32 %v598, %v640
  %v653 = vadd.f32 %v599, %v641
  %v654 = vadd.f32 %v600, %v642
  %v655 = vadd.f32 %v601, %v643
  %v656 = vadd.f32 %v602, %v644
  %v657 = vadd.f32 %v603, %v645
  %v658 = vadd.f32 %v604, %v646
  %v659 = vadd.f32 %v605, %v647
  %v660 = vadd.f32 %v606, %v648
  %v661 = vadd.f32 %v607, %v649
  %v662 = vld [vmem:[%s2] sm:$0xff]
  %v663 = vld [vmem:[%s2 + $0x8] sm:$0xff]
  %v664 = vld [vmem:[%s2 + $0x10] sm:$0xff]
  %v665 = vld [vmem:[%s2 + $0x18] sm:$0xff]
  %v666 = vld [vmem:[%s2 + $0x20] sm:$0xff]
  %v667 = vld [vmem:[%s2 + $0x28] sm:$0xff]
  %v668 = vld [vmem:[%s2 + $0x30] sm:$0xff]
  %v669 = vld [vmem:[%s2 + $0x38] sm:$0xff]
  %v670 = vld [vmem:[%s2 + $0x40] sm:$0xff]
  %v671 = vld [vmem:[%s2 + $0x48] sm:$0xff]
  %v672 = vld [vmem:[%s2 + $0x50] sm:$0xff]
  %v673 = vld [vmem:[%s2 + $0x58] sm:$0xff]
  %v674 = vld [vmem:[%s2 + $0x60] sm:$0xff]
  %v675 = vld [vmem:[%s2 + $0x68] sm:$0xff]
  %v676 = vld [vmem:[%s2 + $0x70] sm:$0xff]
  %v677 = vld [vmem:[%s2 + $0x78] sm:$0xff]
  %v678 = vld [vmem:[%s2 + $0x80] sm:$0xff]
  %v679 = vld [vmem:[%s2 + $0x88] sm:$0xff]
  %v680 = vld [vmem:[%s2 + $0x90] sm:$0xff]
  %v681 = vld [vmem:[%s2 + $0x98] sm:$0xff]
  %v682 = vld [vmem:[%s2 + $0xa0] sm:$0xff]
  %v683 = vld [vmem:[%s2 + $0xa8] sm:$0xff]
  %v684 = vld [vmem:[%s2 + $0xb0] sm:$0xff]
  %v685 = vld [vmem:[%s2 + $0xb8] sm:$0xff]
  %v686 = vld [vmem:[%s2 + $0xc0] sm:$0xff]
  %v687 = vld [vmem:[%s2 + $0xc8] sm:$0xff]
  %v688 = vld [vmem:[%s2 + $0xd0] sm:$0xff]
  %v689 = vld [vmem:[%s2 + $0xd8] sm:$0xff]
  %v690 = vld [vmem:[%s2 + $0xe0] sm:$0xff]
  %v691 = vld [vmem:[%s2 + $0xe8] sm:$0xff]
  %v692 = vld [vmem:[%s2 + $0xf0] sm:$0xff]
  %v693 = vld [vmem:[%s2 + $0xf8] sm:$0xff]
  %v694 = vld [vmem:[%s2 + $0x100] sm:$0xff]
  %v695 = vld [vmem:[%s2 + $0x108] sm:$0xff]
  %v696 = vld [vmem:[%s2 + $0x110] sm:$0xff]
  %v697 = vld [vmem:[%s2 + $0x118] sm:$0xff]
  %v698 = vld [vmem:[%s2 + $0x120] sm:$0xff]
  %v699 = vld [vmem:[%s2 + $0x128] sm:$0xff]
  %v700 = vld [vmem:[%s2 + $0x130] sm:$0xff]
  %v701 = vld [vmem:[%s2 + $0x138] sm:$0xff]
  %v702 = vld [vmem:[%s2 + $0x140] sm:$0xff]
  %v703 = vld [vmem:[%s2 + $0x148] sm:$0xff]
  %v704 = vld [vmem:[%s2 + $0x150] sm:$0xff]
  %v705 = vld [vmem:[%s2 + $0x158] sm:$0xff]
  %v706 = vld [vmem:[%s2 + $0x160] sm:$0xff]
  %v707 = vld [vmem:[%s2 + $0x168] sm:$0xff]
  %v708 = vld [vmem:[%s2 + $0x170] sm:$0xff]
  %v709 = vld [vmem:[%s2 + $0x178] sm:$0xff]
  %v710 = vld [vmem:[%s2 + $0x180] sm:$0xff]
  %v711 = vld [vmem:[%s2 + $0x188] sm:$0xff]
  %v712 = vld [vmem:[%s2 + $0x190] sm:$0xff]
  %v713 = vld [vmem:[%s2 + $0x198] sm:$0xff]
  %v714 = vld [vmem:[%s2 + $0x1a0] sm:$0xff]
  %v715 = vld [vmem:[%s2 + $0x1a8] sm:$0xff]
  %v716 = vld [vmem:[%s2 + $0x1b0] sm:$0xff]
  %v717 = vld [vmem:[%s2 + $0x1b8] sm:$0xff]
  %v718 = vld [vmem:[%s2 + $0x1c0] sm:$0xff]
  %v719 = vld [vmem:[%s2 + $0x1c8] sm:$0xff]
  %v720 = vld [vmem:[%s2 + $0x1d0] sm:$0xff]
  %v721 = vld [vmem:[%s2 + $0x1d8] sm:$0xff]
  %v722 = vld [vmem:[%s2 + $0x1e0] sm:$0xff]
  %v723 = vld [vmem:[%s2 + $0x1e8] sm:$0xff]
  %v724 = vld [vmem:[%s2 + $0x1f0] sm:$0xff]
  %v725 = vld [vmem:[%s2 + $0x1f8] sm:$0xff]
  %v726 = vld [vmem:[%s2 + $0x200] sm:$0xff]
  %v727 = vld [vmem:[%s2 + $0x208] sm:$0xff]
  %v728 = vld [vmem:[%s2 + $0x210] sm:$0xff]
  %v729 = vld [vmem:[%s2 + $0x218] sm:$0xff]
  %v730 = vld [vmem:[%s2 + $0x220] sm:$0xff]
  %v731 = vld [vmem:[%s2 + $0x228] sm:$0xff]
  %v732 = vld [vmem:[%s2 + $0x230] sm:$0xff]
  %v733 = vld [vmem:[%s2 + $0x238] sm:$0xff]
  %v734 = vld [vmem:[%s2 + $0x240] sm:$0xff]
  %v735 = vld [vmem:[%s2 + $0x248] sm:$0xff]
  %v736 = vld [vmem:[%s2 + $0x250] sm:$0xff]
  %v737 = vld [vmem:[%s2 + $0x258] sm:$0xff]
  %v738 = vld [vmem:[%s2 + $0x260] sm:$0xff]
  %v739 = vld [vmem:[%s2 + $0x268] sm:$0xff]
  %v740 = vld [vmem:[%s2 + $0x270] sm:$0xff]
  %v741 = vld [vmem:[%s2 + $0x278] sm:$0xff]
  %v742 = vld [vmem:[%s2 + $0x280] sm:$0xff]
  %v743 = vld [vmem:[%s2 + $0x288] sm:$0xff]
  %v744 = vld [vmem:[%s2 + $0x290] sm:$0xff]
  %v745 = vld [vmem:[%s2 + $0x298] sm:$0xff]
  %v746 = vld [vmem:[%s2 + $0x2a0] sm:$0xff]
  %v747 = vld [vmem:[%s2 + $0x2a8] sm:$0xff]
  %v748 = vld [vmem:[%s2 + $0x2b0] sm:$0xff]
  %v749 = vld [vmem:[%s2 + $0x2b8] sm:$0xff]
  %v750 = vld [vmem:[%s2 + $0x2c0] sm:$0xff]
  %v751 = vld [vmem:[%s2 + $0x2c8] sm:$0xff]
  %v752 = vld [vmem:[%s2 + $0x2d0] sm:$0xff]
  %v753 = vld [vmem:[%s2 + $0x2d8] sm:$0xff]
  %v754 = vld [vmem:[%s2 + $0x2e0] sm:$0xff]
  %v755 = vld [vmem:[%s2 + $0x2e8] sm:$0xff]
  %v756 = vld [vmem:[%s2 + $0x2f0] sm:$0xff]
  %v757 = vld [vmem:[%s2 + $0x2f8] sm:$0xff]
  %758 = vmatpush.msra.mxu0 %v677
  %759 = vmatpush.msra.mxu0 %v676
  %760 = vmatpush.msra.mxu0 %v675
  %761 = vmatpush.msra.mxu0 %v674
  %762 = vmatpush.msra.mxu0 %v673
  %763 = vmatpush.msra.mxu0 %v672
  %764 = vmatpush.msra.mxu0 %v671
  %765 = vmatpush.msra.mxu0 %v670
  %766 = vmatpush.msra.mxu0 %v669
  %767 = vmatpush.msra.mxu0 %v668
  %768 = vmatpush.msra.mxu0 %v667
  %769 = vmatpush.msra.mxu0 %v666
  %770 = vmatpush.msra.mxu0 %v665
  %771 = vmatpush.msra.mxu0 %v664
  %772 = vmatpush.msra.mxu0 %v663
  %773 = vmatpush.msra.mxu0 %v662
  %774 = vmatmul.f32.gmra.mxu0 %v650
  %v775 = vpop.f32.mrf.mxu0
  %v776 = vadd.f32 0.0, %v775
  %777 = vmatmul.f32.gmra.mxu0 %v656
  %v778 = vpop.f32.mrf.mxu0
  %v779 = vadd.f32 0.0, %v778
  %780 = vdwg.mxu0
  %781 = vmatpush.msra.mxu0 %v693
  %782 = vmatpush.msra.mxu0 %v692
  %783 = vmatpush.msra.mxu0 %v691
  %784 = vmatpush.msra.mxu0 %v690
  %785 = vmatpush.msra.mxu0 %v689
  %786 = vmatpush.msra.mxu0 %v688
  %787 = vmatpush.msra.mxu0 %v687
  %788 = vmatpush.msra.mxu0 %v686
  %789 = vmatpush.msra.mxu0 %v685
  %790 = vmatpush.msra.mxu0 %v684
  %791 = vmatpush.msra.mxu0 %v683
  %792 = vmatpush.msra.mxu0 %v682
  %793 = vmatpush.msra.mxu0 %v681
  %794 = vmatpush.msra.mxu0 %v680
  %795 = vmatpush.msra.mxu0 %v679
  %796 = vmatpush.msra.mxu0 %v678
  %797 = vmatmul.f32.gmra.mxu0 %v651
  %v798 = vpop.f32.mrf.mxu0
  %v799 = vadd.f32 %v776, %v798
  %800 = vmatmul.f32.gmra.mxu0 %v657
  %v801 = vpop.f32.mrf.mxu0
  %v802 = vadd.f32 %v779, %v801
  %803 = vdwg.mxu0
  %804 = vmatpush.msra.mxu0 %v709
  %805 = vmatpush.msra.mxu0 %v708
  %806 = vmatpush.msra.mxu0 %v707
  %807 = vmatpush.msra.mxu0 %v706
  %808 = vmatpush.msra.mxu0 %v705
  %809 = vmatpush.msra.mxu0 %v704
  %810 = vmatpush.msra.mxu0 %v703
  %811 = vmatpush.msra.mxu0 %v702
  %812 = vmatpush.msra.mxu0 %v701
  %813 = vmatpush.msra.mxu0 %v700
  %814 = vmatpush.msra.mxu0 %v699
  %815 = vmatpush.msra.mxu0 %v698
  %816 = vmatpush.msra.mxu0 %v697
  %817 = vmatpush.msra.mxu0 %v696
  %818 = vmatpush.msra.mxu0 %v695
  %819 = vmatpush.msra.mxu0 %v694
  %820 = vmatmul.f32.gmra.mxu0 %v652
  %v821 = vpop.f32.mrf.mxu0
  %v822 = vadd.f32 %v799, %v821
  %823 = vmatmul.f32.gmra.mxu0 %v658
  %v824 = vpop.f32.mrf.mxu0
  %v825 = vadd.f32 %v802, %v824
  %826 = vdwg.mxu0
  %827 = vmatpush.msra.mxu0 %v725
  %828 = vmatpush.msra.mxu0 %v724
  %829 = vmatpush.msra.mxu0 %v723
  %830 = vmatpush.msra.mxu0 %v722
  %831 = vmatpush.msra.mxu0 %v721
  %832 = vmatpush.msra.mxu0 %v720
  %833 = vmatpush.msra.mxu0 %v719
  %834 = vmatpush.msra.mxu0 %v718
  %835 = vmatpush.msra.mxu0 %v717
  %836 = vmatpush.msra.mxu0 %v716
  %837 = vmatpush.msra.mxu0 %v715
  %838 = vmatpush.msra.mxu0 %v714
  %839 = vmatpush.msra.mxu0 %v713
  %840 = vmatpush.msra.mxu0 %v712
  %841 = vmatpush.msra.mxu0 %v711
  %842 = vmatpush.msra.mxu0 %v710
  %843 = vmatmul.f32.gmra.mxu0 %v653
  %v844 = vpop.f32.mrf.mxu0
  %v845 = vadd.f32 %v822, %v844
  %846 = vmatmul.f32.gmra.mxu0 %v659
  %v847 = vpop.f32.mrf.mxu0
  %v848 = vadd.f32 %v825, %v847
  %849 = vdwg.mxu0
  %850 = vmatpush.msra.mxu0 %v741
  %851 = vmatpush.msra.mxu0 %v740
  %852 = vmatpush.msra.mxu0 %v739
  %853 = vmatpush.msra.mxu0 %v738
  %854 = vmatpush.msra.mxu0 %v737
  %855 = vmatpush.msra.mxu0 %v736
  %856 = vmatpush.msra.mxu0 %v735
  %857 = vmatpush.msra.mxu0 %v734
  %858 = vmatpush.msra.mxu0 %v733
  %859 = vmatpush.msra.mxu0 %v732
  %860 = vmatpush.msra.mxu0 %v731
  %861 = vmatpush.msra.mxu0 %v730
  %862 = vmatpush.msra.mxu0 %v729
  %863 = vmatpush.msra.mxu0 %v728
  %864 = vmatpush.msra.mxu0 %v727
  %865 = vmatpush.msra.mxu0 %v726
  %866 = vmatmul.f32.gmra.mxu0 %v654
  %v867 = vpop.f32.mrf.mxu0
  %v868 = vadd.f32 %v845, %v867
  %869 = vmatmul.f32.gmra.mxu0 %v660
  %v870 = vpop.f32.mrf.mxu0
  %v871 = vadd.f32 %v848, %v870
  %872 = vdwg.mxu0
  %873 = vmatpush.msra.mxu0 %v757
  %874 = vmatpush.msra.mxu0 %v756
  %875 = vmatpush.msra.mxu0 %v755
  %876 = vmatpush.msra.mxu0 %v754
  %877 = vmatpush.msra.mxu0 %v753
  %878 = vmatpush.msra.mxu0 %v752
  %879 = vmatpush.msra.mxu0 %v751
  %880 = vmatpush.msra.mxu0 %v750
  %881 = vmatpush.msra.mxu0 %v749
  %882 = vmatpush.msra.mxu0 %v748
  %883 = vmatpush.msra.mxu0 %v747
  %884 = vmatpush.msra.mxu0 %v746
  %885 = vmatpush.msra.mxu0 %v745
  %886 = vmatpush.msra.mxu0 %v744
  %887 = vmatpush.msra.mxu0 %v743
  %888 = vmatpush.msra.mxu0 %v742
  %889 = vmatmul.f32.gmra.mxu0 %v655
  %v890 = vpop.f32.mrf.mxu0
  %v891 = vadd.f32 %v868, %v890
  %892 = vmatmul.f32.gmra.mxu0 %v661
  %v893 = vpop.f32.mrf.mxu0
  %v894 = vadd.f32 %v871, %v893
  %895 = vdwg.mxu0
  %v896 = vld [vmem:[%s3] sm:$0x1]
  %v897 = vld [vmem:[%s4] sm:$0x1]
  %898 = vadd.xlane.f32.xlu0 %v891
  %v899 = vpop.xlane.xlu0 %898
  %900 = vadd.xlane.f32.xlu0 %v894
  %v901 = vpop.xlane.xlu0 %900
  %v902 = vrcp.pop 128.0
  %v903 = vmul.f32 128.0, %v902
  %v904 = vsub.f32 1.0, %v903
  %v905 = vmul.f32 %v902, %v904
  %v906 = vadd.f32 %v902, %v905
  %vm907 = vweird.f32 %v902
  %v908 = vsel %vm907, %v902, %v906
  %v909 = vmul.f32 %v899, %v908
  %v910 = vmul.f32 %v901, %v908
  %v911 = vsub.f32 %v891, %v909
  %v912 = vsub.f32 %v894, %v910
  %v913 = vmul.f32 %v911, %v911
  %v914 = vmul.f32 %v912, %v912
  %915 = vadd.xlane.f32.xlu0 %v913
  %v916 = vpop.xlane.xlu0 %915
  %917 = vadd.xlane.f32.xlu0 %v914
  %v918 = vpop.xlane.xlu0 %917
  %v919 = vmul.f32 %v916, %v908
  %v920 = vmul.f32 %v918, %v908
  %v921 = vadd.f32 %v919, 1e-05
  %v922 = vadd.f32 %v920, 1e-05
  %v923 = vrsqrt.pop %v921
  %v924 = vmul.f32 %v923, %v921
  %v925 = vmul.f32 %v924, %v923
  %v926 = vmul.f32 0.5, %v925
  %v927 = vsub.f32 1.5, %v926
  %v928 = vmul.f32 %v923, %v927
  %vm929 = vweird.f32 %v921
  %vm930 = vweird.f32 %v923
  %vm931 = vmor %vm929, %vm930
  %v932 = vsel %vm931, %v923, %v928
  %v933 = vrsqrt.pop %v922
  %v934 = vmul.f32 %v933, %v922
  %v935 = vmul.f32 %v934, %v933
  %v936 = vmul.f32 0.5, %v935
  %v937 = vsub.f32 1.5, %v936
  %v938 = vmul.f32 %v933, %v937
  %vm939 = vweird.f32 %v922
  %vm940 = vweird.f32 %v933
  %vm941 = vmor %vm939, %vm940
  %v942 = vsel %vm941, %v933, %v938
  %v943 = vmul.f32 %v911, %v932
  %v944 = vmul.f32 %v912, %v942
  %v946 = vperm.slane %v896, 0
  %v948 = vmul.f32 %v943, %v946
  %v949 = vmul.f32 %v944, %v946
  %v951 = vperm.slane %v897, 0
  %v953 = vadd.f32 %v948, %v951
  %v954 = vadd.f32 %v949, %v951
  %v955 = vpack.c.bf16 %v954, %v953
  %v956 = vld [vmem:[%s5] sm:$0xff]
  %v957 = vld [vmem:[%s5 + $0x8] sm:$0xf]
  %v958 = vld [vmem:[%s5 + $0xc] sm:$0xff]
  %v959 = vld [vmem:[%s5 + $0x14] sm:$0xf]
  %v960 = vld [vmem:[%s5 + $0x18] sm:$0xff]
  %v961 = vld [vmem:[%s5 + $0x20] sm:$0xf]
  %v962 = vld [vmem:[%s5 + $0x24] sm:$0xff]
  %v963 = vld [vmem:[%s5 + $0x2c] sm:$0xf]
  %v964 = vld [vmem:[%s5 + $0x30] sm:$0xff]
  %v965 = vld [vmem:[%s5 + $0x38] sm:$0xf]
  %v966 = vld [vmem:[%s5 + $0x3c] sm:$0xff]
  %v967 = vld [vmem:[%s5 + $0x44] sm:$0xf]
  %v968 = vld [vmem:[%s5 + $0x48] sm:$0xff]
  %v969 = vld [vmem:[%s5 + $0x50] sm:$0xf]
  %v970 = vld [vmem:[%s5 + $0x54] sm:$0xff]
  %v971 = vld [vmem:[%s5 + $0x5c] sm:$0xf]
  %v972 = vld [vmem:[%s5 + $0x60] sm:$0xff]
  %v973 = vld [vmem:[%s5 + $0x68] sm:$0xf]
  %v974 = vld [vmem:[%s5 + $0x6c] sm:$0xff]
  %v975 = vld [vmem:[%s5 + $0x74] sm:$0xf]
  %v976 = vld [vmem:[%s5 + $0x78] sm:$0xff]
  %v977 = vld [vmem:[%s5 + $0x80] sm:$0xf]
  %v978 = vld [vmem:[%s5 + $0x84] sm:$0xff]
  %v979 = vld [vmem:[%s5 + $0x8c] sm:$0xf]
  %v980 = vld [vmem:[%s5 + $0x90] sm:$0xff]
  %v981 = vld [vmem:[%s5 + $0x98] sm:$0xf]
  %v982 = vld [vmem:[%s5 + $0x9c] sm:$0xff]
  %v983 = vld [vmem:[%s5 + $0xa4] sm:$0xf]
  %v984 = vld [vmem:[%s5 + $0xa8] sm:$0xff]
  %v985 = vld [vmem:[%s5 + $0xb0] sm:$0xf]
  %v986 = vld [vmem:[%s5 + $0xb4] sm:$0xff]
  %v987 = vld [vmem:[%s5 + $0xbc] sm:$0xf]
  %v988 = vld [vmem:[%s6] sm:$0x7]
  %v990 = vperm.slane %v988, 0
  %v991 = vperm.slane %v988, 1
  %v992 = vperm.slane %v988, 2
  %v1028 = vunpack.c.l.b16 %v956
  %v1029 = vunpack.c.h.b16 %v956
  %v1030 = vunpack.c.l.b16 %v957
  %v1031 = vunpack.c.l.b16 %v958
  %v1032 = vunpack.c.h.b16 %v958
  %v1033 = vunpack.c.l.b16 %v959
  %v1034 = vunpack.c.l.b16 %v960
  %v1035 = vunpack.c.h.b16 %v960
  %v1036 = vunpack.c.l.b16 %v961
  %v1037 = vunpack.c.l.b16 %v962
  %v1038 = vunpack.c.h.b16 %v962
  %v1039 = vunpack.c.l.b16 %v963
  %v1040 = vunpack.c.l.b16 %v964
  %v1041 = vunpack.c.h.b16 %v964
  %v1042 = vunpack.c.l.b16 %v965
  %v1043 = vunpack.c.l.b16 %v966
  %v1044 = vunpack.c.h.b16 %v966
  %v1045 = vunpack.c.l.b16 %v967
  %v1046 = vunpack.c.l.b16 %v968
  %v1047 = vunpack.c.h.b16 %v968
  %v1048 = vunpack.c.l.b16 %v969
  %v1049 = vunpack.c.l.b16 %v970
  %v1050 = vunpack.c.h.b16 %v970
  %v1051 = vunpack.c.l.b16 %v971
  %v1052 = vunpack.c.l.b16 %v972
  %v1053 = vunpack.c.h.b16 %v972
  %v1054 = vunpack.c.l.b16 %v973
  %v1055 = vunpack.c.l.b16 %v974
  %v1056 = vunpack.c.h.b16 %v974
  %v1057 = vunpack.c.l.b16 %v975
  %v1058 = vunpack.c.l.b16 %v976
  %v1059 = vunpack.c.h.b16 %v976
  %v1060 = vunpack.c.l.b16 %v977
  %v1061 = vunpack.c.l.b16 %v978
  %v1062 = vunpack.c.h.b16 %v978
  %v1063 = vunpack.c.l.b16 %v979
  %v1064 = vunpack.c.l.b16 %v980
  %v1065 = vunpack.c.h.b16 %v980
  %v1066 = vunpack.c.l.b16 %v981
  %v1067 = vunpack.c.l.b16 %v982
  %v1068 = vunpack.c.h.b16 %v982
  %v1069 = vunpack.c.l.b16 %v983
  %v1070 = vunpack.c.l.b16 %v984
  %v1071 = vunpack.c.h.b16 %v984
  %v1072 = vunpack.c.l.b16 %v985
  %v1073 = vunpack.c.l.b16 %v986
  %v1074 = vunpack.c.h.b16 %v986
  %v1075 = vunpack.c.l.b16 %v987
  %v1076 = vpack.c.b16 %v1031, %v1028
  %v1077 = vpack.c.b16 %v1032, %v1029
  %v1078 = vpack.c.b16 %v1033, %v1030
  %v1079 = vpack.c.b16 %v1037, %v1034
  %v1080 = vpack.c.b16 %v1038, %v1035
  %v1081 = vpack.c.b16 %v1039, %v1036
  %v1082 = vpack.c.b16 %v1043, %v1040
  %v1083 = vpack.c.b16 %v1044, %v1041
  %v1084 = vpack.c.b16 %v1045, %v1042
  %v1085 = vpack.c.b16 %v1049, %v1046
  %v1086 = vpack.c.b16 %v1050, %v1047
  %v1087 = vpack.c.b16 %v1051, %v1048
  %v1088 = vpack.c.b16 %v1055, %v1052
  %v1089 = vpack.c.b16 %v1056, %v1053
  %v1090 = vpack.c.b16 %v1057, %v1054
  %v1091 = vpack.c.b16 %v1061, %v1058
  %v1092 = vpack.c.b16 %v1062, %v1059
  %v1093 = vpack.c.b16 %v1063, %v1060
  %v1094 = vpack.c.b16 %v1067, %v1064
  %v1095 = vpack.c.b16 %v1068, %v1065
  %v1096 = vpack.c.b16 %v1069, %v1066
  %v1097 = vpack.c.b16 %v1073, %v1070
  %v1098 = vpack.c.b16 %v1074, %v1071
  %v1099 = vpack.c.b16 %v1075, %v1072
  %1124 = vmatpush.bf16.msra.mxu0 %v1097
  %1125 = vmatpush.bf16.msra.mxu0 %v1094
  %1126 = vmatpush.bf16.msra.mxu0 %v1091
  %1127 = vmatpush.bf16.msra.mxu0 %v1088
  %1128 = vmatpush.bf16.msra.mxu0 %v1085
  %1129 = vmatpush.bf16.msra.mxu0 %v1082
  %1130 = vmatpush.bf16.msra.mxu0 %v1079
  %1131 = vmatpush.bf16.msra.mxu0 %v1076
  %1132 = vmatmul.bf16.gmra.mxu0 %v955
  %v1133 = vpop.f32.mrf.mxu0
  %v1134 = vadd.f32 %v990, %v1133
  %v1135 = vpop.f32.mrf.mxu0
  %v1136 = vadd.f32 %v990, %v1135
  %1137 = vdwg.mxu0
  %1138 = vmatpush.bf16.msra.mxu0 %v1098
  %1139 = vmatpush.bf16.msra.mxu0 %v1095
  %1140 = vmatpush.bf16.msra.mxu0 %v1092
  %1141 = vmatpush.bf16.msra.mxu0 %v1089
  %1142 = vmatpush.bf16.msra.mxu0 %v1086
  %1143 = vmatpush.bf16.msra.mxu0 %v1083
  %1144 = vmatpush.bf16.msra.mxu0 %v1080
  %1145 = vmatpush.bf16.msra.mxu0 %v1077
  %1146 = vmatmul.bf16.gmra.mxu0 %v955
  %v1147 = vpop.f32.mrf.mxu0
  %v1148 = vadd.f32 %v991, %v1147
  %v1149 = vpop.f32.mrf.mxu0
  %v1150 = vadd.f32 %v991, %v1149
  %1151 = vdwg.mxu0
  %1152 = vmatpush.bf16.msra.mxu0 %v1099
  %1153 = vmatpush.bf16.msra.mxu0 %v1096
  %1154 = vmatpush.bf16.msra.mxu0 %v1093
  %1155 = vmatpush.bf16.msra.mxu0 %v1090
  %1156 = vmatpush.bf16.msra.mxu0 %v1087
  %1157 = vmatpush.bf16.msra.mxu0 %v1084
  %1158 = vmatpush.bf16.msra.mxu0 %v1081
  %1159 = vmatpush.bf16.msra.mxu0 %v1078
  %1160 = vmatmul.bf16.gmra.mxu0 %v955
  %v1161 = vpop.f32.mrf.mxu0
  %v1162 = vadd.f32 %v992, %v1161
  %v1163 = vpop.f32.mrf.mxu0
  %v1164 = vadd.f32 %v992, %v1163
  %1165 = vdwg.mxu0
  %1168 = vrot.lane.b32.xlu0 %v1134, 96
  %v1169 = vpop.permute.xlu0 %1168
  %1170 = vrot.lane.b32.xlu0 %v1136, 96
  %v1171 = vpop.permute.xlu0 %1170
  %1174 = vrot.lane.b32.xlu0 %v1134, 64
  %v1175 = vpop.permute.xlu0 %1174
  %1176 = vrot.lane.b32.xlu0 %v1136, 64
  %v1177 = vpop.permute.xlu0 %1176
  %1180 = vrot.lane.b32.xlu0 %v1134, 32
  %v1181 = vpop.permute.xlu0 %1180
  %1182 = vrot.lane.b32.xlu0 %v1136, 32
  %v1183 = vpop.permute.xlu0 %1182
  %v1186 = vrot.slane %v1175, 4
  %vm1187 = vcmask 1047556
  %v1188 = vsel %vm1187, %v1186, %v1134
  %v1189 = vrot.slane %v1134, 4
  %v1190 = vsel %vm1187, %v1175, %v1189
  %v1192 = vunpack.c.l.s4 1983009808
  %v1193 = vunpack.c.0.s8 %v1192
  %v1194 = vperm.slane %v1188, %v1193
  %v1196 = vunpack.c.l.s4 1983009808
  %v1197 = vunpack.c.0.s8 %v1196
  %v1198 = vperm.slane %v1190, %v1197
  %v1199 = vrot.slane %v1181, 4
  %v1200 = vsel %vm1187, %v1199, %v1169
  %v1201 = vrot.slane %v1169, 4
  %v1202 = vsel %vm1187, %v1181, %v1201
  %v1204 = vunpack.c.l.s4 1983009808
  %v1205 = vunpack.c.0.s8 %v1204
  %v1206 = vperm.slane %v1200, %v1205
  %v1208 = vunpack.c.l.s4 1983009808
  %v1209 = vunpack.c.0.s8 %v1208
  %v1210 = vperm.slane %v1202, %v1209
  %v1211 = vrot.slane %v1206, 4
  %v1212 = vsel %vm1187, %v1211, %v1194
  %v1213 = vrot.slane %v1194, 4
  %v1214 = vsel %vm1187, %v1206, %v1213
  %v1216 = vunpack.c.l.s4 1934713408
  %v1217 = vunpack.c.0.s8 %v1216
  %v1218 = vperm.slane %v1212, %v1217
  %v1220 = vunpack.c.l.s4 1934713408
  %v1221 = vunpack.c.0.s8 %v1220
  %v1222 = vperm.slane %v1214, %v1221
  %v1223 = vrot.slane %v1210, 4
  %v1224 = vsel %vm1187, %v1223, %v1198
  %v1225 = vrot.slane %v1198, 4
  %v1226 = vsel %vm1187, %v1210, %v1225
  %v1228 = vunpack.c.l.s4 1934713408
  %v1229 = vunpack.c.0.s8 %v1228
  %v1230 = vperm.slane %v1224, %v1229
  %v1232 = vunpack.c.l.s4 1934713408
  %v1233 = vunpack.c.0.s8 %v1232
  %v1234 = vperm.slane %v1226, %v1233
  %v1235 = vrot.slane %v1218, 4
  %v1236 = vsel %vm1187, 0.0, %v1235
  %v1237 = vrot.slane %v1222, 4
  %v1238 = vsel %vm1187, 0.0, %v1237
  %v1239 = vrot.slane %v1230, 4
  %v1240 = vsel %vm1187, 0.0, %v1239
  %v1241 = vrot.slane %v1234, 4
  %v1242 = vsel %vm1187, 0.0, %v1241
  %v1243 = vrot.slane %v1177, 4
  %v1244 = vsel %vm1187, %v1243, %v1136
  %v1245 = vrot.slane %v1136, 4
  %v1246 = vsel %vm1187, %v1177, %v1245
  %v1248 = vunpack.c.l.s4 1983009808
  %v1249 = vunpack.c.0.s8 %v1248
  %v1250 = vperm.slane %v1244, %v1249
  %v1252 = vunpack.c.l.s4 1983009808
  %v1253 = vunpack.c.0.s8 %v1252
  %v1254 = vperm.slane %v1246, %v1253
  %v1255 = vrot.slane %v1183, 4
  %v1256 = vsel %vm1187, %v1255, %v1171
  %v1257 = vrot.slane %v1171, 4
  %v1258 = vsel %vm1187, %v1183, %v1257
  %v1260 = vunpack.c.l.s4 1983009808
  %v1261 = vunpack.c.0.s8 %v1260
  %v1262 = vperm.slane %v1256, %v1261
  %v1264 = vunpack.c.l.s4 1983009808
  %v1265 = vunpack.c.0.s8 %v1264
  %v1266 = vperm.slane %v1258, %v1265
  %v1267 = vrot.slane %v1262, 4
  %v1268 = vsel %vm1187, %v1267, %v1250
  %v1269 = vrot.slane %v1250, 4
  %v1270 = vsel %vm1187, %v1262, %v1269
  %v1272 = vunpack.c.l.s4 1934713408
  %v1273 = vunpack.c.0.s8 %v1272
  %v1274 = vperm.slane %v1268, %v1273
  %v1276 = vunpack.c.l.s4 1934713408
  %v1277 = vunpack.c.0.s8 %v1276
  %v1278 = vperm.slane %v1270, %v1277
  %v1279 = vrot.slane %v1266, 4
  %v1280 = vsel %vm1187, %v1279, %v1254
  %v1281 = vrot.slane %v1254, 4
  %v1282 = vsel %vm1187, %v1266, %v1281
  %v1284 = vunpack.c.l.s4 1934713408
  %v1285 = vunpack.c.0.s8 %v1284
  %v1286 = vperm.slane %v1280, %v1285
  %v1288 = vunpack.c.l.s4 1934713408
  %v1289 = vunpack.c.0.s8 %v1288
  %v1290 = vperm.slane %v1282, %v1289
  %v1291 = vrot.slane %v1274, 4
  %v1292 = vsel %vm1187, 0.0, %v1291
  %v1293 = vrot.slane %v1278, 4
  %v1294 = vsel %vm1187, 0.0, %v1293
  %v1295 = vrot.slane %v1286, 4
  %v1296 = vsel %vm1187, 0.0, %v1295
  %v1297 = vrot.slane %v1290, 4
  %v1298 = vsel %vm1187, 0.0, %v1297
  %v1299 = vsel %vm1187, %v1237, %v1218
  %v1301 = vunpack.c.l.s4 1983009808
  %v1302 = vunpack.c.0.s8 %v1301
  %v1303 = vperm.slane %v1299, %v1302
  %v1304 = vrot.slane %v1238, 4
  %v1305 = vsel %vm1187, %v1304, %v1236
  %v1307 = vunpack.c.l.s4 1983009808
  %v1308 = vunpack.c.0.s8 %v1307
  %v1309 = vperm.slane %v1305, %v1308
  %v1310 = vsel %vm1187, %v1241, %v1230
  %v1312 = vunpack.c.l.s4 1983009808
  %v1313 = vunpack.c.0.s8 %v1312
  %v1314 = vperm.slane %v1310, %v1313
  %v1315 = vrot.slane %v1242, 4
  %v1316 = vsel %vm1187, %v1315, %v1240
  %v1318 = vunpack.c.l.s4 1983009808
  %v1319 = vunpack.c.0.s8 %v1318
  %v1320 = vperm.slane %v1316, %v1319
  %v1321 = vrot.slane %v1309, 4
  %v1322 = vsel %vm1187, %v1321, %v1303
  %v1323 = vrot.slane %v1303, 4
  %v1324 = vsel %vm1187, %v1309, %v1323
  %v1326 = vunpack.c.l.s4 1934713408
  %v1327 = vunpack.c.0.s8 %v1326
  %v1328 = vperm.slane %v1322, %v1327
  %v1330 = vunpack.c.l.s4 1934713408
  %v1331 = vunpack.c.0.s8 %v1330
  %v1332 = vperm.slane %v1324, %v1331
  %v1333 = vrot.slane %v1320, 4
  %v1334 = vsel %vm1187, %v1333, %v1314
  %v1335 = vrot.slane %v1314, 4
  %v1336 = vsel %vm1187, %v1320, %v1335
  %v1338 = vunpack.c.l.s4 1934713408
  %v1339 = vunpack.c.0.s8 %v1338
  %v1340 = vperm.slane %v1334, %v1339
  %v1342 = vunpack.c.l.s4 1934713408
  %v1343 = vunpack.c.0.s8 %v1342
  %v1344 = vperm.slane %v1336, %v1343
  %v1345 = vrot.slane %v1340, 4
  %v1346 = vsel %vm1187, %v1345, %v1328
  %v1347 = vrot.slane %v1328, 4
  %v1348 = vsel %vm1187, %v1340, %v1347
  %v1349 = vrot.slane %v1344, 4
  %v1350 = vsel %vm1187, %v1349, %v1332
  %v1351 = vrot.slane %v1332, 4
  %v1352 = vsel %vm1187, %v1344, %v1351
  %v1353 = vsel %vm1187, %v1293, %v1274
  %v1355 = vunpack.c.l.s4 1983009808
  %v1356 = vunpack.c.0.s8 %v1355
  %v1357 = vperm.slane %v1353, %v1356
  %v1358 = vrot.slane %v1294, 4
  %v1359 = vsel %vm1187, %v1358, %v1292
  %v1361 = vunpack.c.l.s4 1983009808
  %v1362 = vunpack.c.0.s8 %v1361
  %v1363 = vperm.slane %v1359, %v1362
  %v1364 = vsel %vm1187, %v1297, %v1286
  %v1366 = vunpack.c.l.s4 1983009808
  %v1367 = vunpack.c.0.s8 %v1366
  %v1368 = vperm.slane %v1364, %v1367
  %v1369 = vrot.slane %v1298, 4
  %v1370 = vsel %vm1187, %v1369, %v1296
  %v1372 = vunpack.c.l.s4 1983009808
  %v1373 = vunpack.c.0.s8 %v1372
  %v1374 = vperm.slane %v1370, %v1373
  %v1375 = vrot.slane %v1363, 4
  %v1376 = vsel %vm1187, %v1375, %v1357
  %v1377 = vrot.slane %v1357, 4
  %v1378 = vsel %vm1187, %v1363, %v1377
  %v1380 = vunpack.c.l.s4 1934713408
  %v1381 = vunpack.c.0.s8 %v1380
  %v1382 = vperm.slane %v1376, %v1381
  %v1384 = vunpack.c.l.s4 1934713408
  %v1385 = vunpack.c.0.s8 %v1384
  %v1386 = vperm.slane %v1378, %v1385
  %v1387 = vrot.slane %v1374, 4
  %v1388 = vsel %vm1187, %v1387, %v1368
  %v1389 = vrot.slane %v1368, 4
  %v1390 = vsel %vm1187, %v1374, %v1389
  %v1392 = vunpack.c.l.s4 1934713408
  %v1393 = vunpack.c.0.s8 %v1392
  %v1394 = vperm.slane %v1388, %v1393
  %v1396 = vunpack.c.l.s4 1934713408
  %v1397 = vunpack.c.0.s8 %v1396
  %v1398 = vperm.slane %v1390, %v1397
  %v1399 = vrot.slane %v1394, 4
  %v1400 = vsel %vm1187, %v1399, %v1382
  %v1401 = vrot.slane %v1382, 4
  %v1402 = vsel %vm1187, %v1394, %v1401
  %v1403 = vrot.slane %v1398, 4
  %v1404 = vsel %vm1187, %v1403, %v1386
  %v1405 = vrot.slane %v1386, 4
  %v1406 = vsel %vm1187, %v1398, %v1405
  %1409 = vrot.lane.b32.xlu0 %v1148, 96
  %v1410 = vpop.permute.xlu0 %1409
  %1411 = vrot.lane.b32.xlu0 %v1150, 96
  %v1412 = vpop.permute.xlu0 %1411
  %1415 = vrot.lane.b32.xlu0 %v1148, 64
  %v1416 = vpop.permute.xlu0 %1415
  %1417 = vrot.lane.b32.xlu0 %v1150, 64
  %v1418 = vpop.permute.xlu0 %1417
  %1421 = vrot.lane.b32.xlu0 %v1148, 32
  %v1422 = vpop.permute.xlu0 %1421
  %1423 = vrot.lane.b32.xlu0 %v1150, 32
  %v1424 = vpop.permute.xlu0 %1423
  %v1427 = vrot.slane %v1416, 4
  %v1428 = vsel %vm1187, %v1427, %v1148
  %v1429 = vrot.slane %v1148, 4
  %v1430 = vsel %vm1187, %v1416, %v1429
  %v1432 = vunpack.c.l.s4 1983009808
  %v1433 = vunpack.c.0.s8 %v1432
  %v1434 = vperm.slane %v1428, %v1433
  %v1436 = vunpack.c.l.s4 1983009808
  %v1437 = vunpack.c.0.s8 %v1436
  %v1438 = vperm.slane %v1430, %v1437
  %v1439 = vrot.slane %v1422, 4
  %v1440 = vsel %vm1187, %v1439, %v1410
  %v1441 = vrot.slane %v1410, 4
  %v1442 = vsel %vm1187, %v1422, %v1441
  %v1444 = vunpack.c.l.s4 1983009808
  %v1445 = vunpack.c.0.s8 %v1444
  %v1446 = vperm.slane %v1440, %v1445
  %v1448 = vunpack.c.l.s4 1983009808
  %v1449 = vunpack.c.0.s8 %v1448
  %v1450 = vperm.slane %v1442, %v1449
  %v1451 = vrot.slane %v1446, 4
  %v1452 = vsel %vm1187, %v1451, %v1434
  %v1453 = vrot.slane %v1434, 4
  %v1454 = vsel %vm1187, %v1446, %v1453
  %v1456 = vunpack.c.l.s4 1934713408
  %v1457 = vunpack.c.0.s8 %v1456
  %v1458 = vperm.slane %v1452, %v1457
  %v1460 = vunpack.c.l.s4 1934713408
  %v1461 = vunpack.c.0.s8 %v1460
  %v1462 = vperm.slane %v1454, %v1461
  %v1463 = vrot.slane %v1450, 4
  %v1464 = vsel %vm1187, %v1463, %v1438
  %v1465 = vrot.slane %v1438, 4
  %v1466 = vsel %vm1187, %v1450, %v1465
  %v1468 = vunpack.c.l.s4 1934713408
  %v1469 = vunpack.c.0.s8 %v1468
  %v1470 = vperm.slane %v1464, %v1469
  %v1472 = vunpack.c.l.s4 1934713408
  %v1473 = vunpack.c.0.s8 %v1472
  %v1474 = vperm.slane %v1466, %v1473
  %v1475 = vrot.slane %v1458, 4
  %v1476 = vsel %vm1187, 0.0, %v1475
  %v1477 = vrot.slane %v1462, 4
  %v1478 = vsel %vm1187, 0.0, %v1477
  %v1479 = vrot.slane %v1470, 4
  %v1480 = vsel %vm1187, 0.0, %v1479
  %v1481 = vrot.slane %v1474, 4
  %v1482 = vsel %vm1187, 0.0, %v1481
  %v1483 = vrot.slane %v1418, 4
  %v1484 = vsel %vm1187, %v1483, %v1150
  %v1485 = vrot.slane %v1150, 4
  %v1486 = vsel %vm1187, %v1418, %v1485
  %v1488 = vunpack.c.l.s4 1983009808
  %v1489 = vunpack.c.0.s8 %v1488
  %v1490 = vperm.slane %v1484, %v1489
  %v1492 = vunpack.c.l.s4 1983009808
  %v1493 = vunpack.c.0.s8 %v1492
  %v1494 = vperm.slane %v1486, %v1493
  %v1495 = vrot.slane %v1424, 4
  %v1496 = vsel %vm1187, %v1495, %v1412
  %v1497 = vrot.slane %v1412, 4
  %v1498 = vsel %vm1187, %v1424, %v1497
  %v1500 = vunpack.c.l.s4 1983009808
  %v1501 = vunpack.c.0.s8 %v1500
  %v1502 = vperm.slane %v1496, %v1501
  %v1504 = vunpack.c.l.s4 1983009808
  %v1505 = vunpack.c.0.s8 %v1504
  %v1506 = vperm.slane %v1498, %v1505
  %v1507 = vrot.slane %v1502, 4
  %v1508 = vsel %vm1187, %v1507, %v1490
  %v1509 = vrot.slane %v1490, 4
  %v1510 = vsel %vm1187, %v1502, %v1509
  %v1512 = vunpack.c.l.s4 1934713408
  %v1513 = vunpack.c.0.s8 %v1512
  %v1514 = vperm.slane %v1508, %v1513
  %v1516 = vunpack.c.l.s4 1934713408
  %v1517 = vunpack.c.0.s8 %v1516
  %v1518 = vperm.slane %v1510, %v1517
  %v1519 = vrot.slane %v1506, 4
  %v1520 = vsel %vm1187, %v1519, %v1494
  %v1521 = vrot.slane %v1494, 4
  %v1522 = vsel %vm1187, %v1506, %v1521
  %v1524 = vunpack.c.l.s4 1934713408
  %v1525 = vunpack.c.0.s8 %v1524
  %v1526 = vperm.slane %v1520, %v1525
  %v1528 = vunpack.c.l.s4 1934713408
  %v1529 = vunpack.c.0.s8 %v1528
  %v1530 = vperm.slane %v1522, %v1529
  %v1531 = vrot.slane %v1514, 4
  %v1532 = vsel %vm1187, 0.0, %v1531
  %v1533 = vrot.slane %v1518, 4
  %v1534 = vsel %vm1187, 0.0, %v1533
  %v1535 = vrot.slane %v1526, 4
  %v1536 = vsel %vm1187, 0.0, %v1535
  %v1537 = vrot.slane %v1530, 4
  %v1538 = vsel %vm1187, 0.0, %v1537
  %v1539 = vsel %vm1187, %v1477, %v1458
  %v1541 = vunpack.c.l.s4 1983009808
  %v1542 = vunpack.c.0.s8 %v1541
  %v1543 = vperm.slane %v1539, %v1542
  %v1544 = vrot.slane %v1478, 4
  %v1545 = vsel %vm1187, %v1544, %v1476
  %v1547 = vunpack.c.l.s4 1983009808
  %v1548 = vunpack.c.0.s8 %v1547
  %v1549 = vperm.slane %v1545, %v1548
  %v1550 = vsel %vm1187, %v1481, %v1470
  %v1552 = vunpack.c.l.s4 1983009808
  %v1553 = vunpack.c.0.s8 %v1552
  %v1554 = vperm.slane %v1550, %v1553
  %v1555 = vrot.slane %v1482, 4
  %v1556 = vsel %vm1187, %v1555, %v1480
  %v1558 = vunpack.c.l.s4 1983009808
  %v1559 = vunpack.c.0.s8 %v1558
  %v1560 = vperm.slane %v1556, %v1559
  %v1561 = vrot.slane %v1549, 4
  %v1562 = vsel %vm1187, %v1561, %v1543
  %v1563 = vrot.slane %v1543, 4
  %v1564 = vsel %vm1187, %v1549, %v1563
  %v1566 = vunpack.c.l.s4 1934713408
  %v1567 = vunpack.c.0.s8 %v1566
  %v1568 = vperm.slane %v1562, %v1567
  %v1570 = vunpack.c.l.s4 1934713408
  %v1571 = vunpack.c.0.s8 %v1570
  %v1572 = vperm.slane %v1564, %v1571
  %v1573 = vrot.slane %v1560, 4
  %v1574 = vsel %vm1187, %v1573, %v1554
  %v1575 = vrot.slane %v1554, 4
  %v1576 = vsel %vm1187, %v1560, %v1575
  %v1578 = vunpack.c.l.s4 1934713408
  %v1579 = vunpack.c.0.s8 %v1578
  %v1580 = vperm.slane %v1574, %v1579
  %v1582 = vunpack.c.l.s4 1934713408
  %v1583 = vunpack.c.0.s8 %v1582
  %v1584 = vperm.slane %v1576, %v1583
  %v1585 = vrot.slane %v1580, 4
  %v1586 = vsel %vm1187, %v1585, %v1568
  %v1587 = vrot.slane %v1568, 4
  %v1588 = vsel %vm1187, %v1580, %v1587
  %v1589 = vrot.slane %v1584, 4
  %v1590 = vsel %vm1187, %v1589, %v1572
  %v1591 = vrot.slane %v1572, 4
  %v1592 = vsel %vm1187, %v1584, %v1591
  %v1593 = vsel %vm1187, %v1533, %v1514
  %v1595 = vunpack.c.l.s4 1983009808
  %v1596 = vunpack.c.0.s8 %v1595
  %v1597 = vperm.slane %v1593, %v1596
  %v1598 = vrot.slane %v1534, 4
  %v1599 = vsel %vm1187, %v1598, %v1532
  %v1601 = vunpack.c.l.s4 1983009808
  %v1602 = vunpack.c.0.s8 %v1601
  %v1603 = vperm.slane %v1599, %v1602
  %v1604 = vsel %vm1187, %v1537, %v1526
  %v1606 = vunpack.c.l.s4 1983009808
  %v1607 = vunpack.c.0.s8 %v1606
  %v1608 = vperm.slane %v1604, %v1607
  %v1609 = vrot.slane %v1538, 4
  %v1610 = vsel %vm1187, %v1609, %v1536
  %v1612 = vunpack.c.l.s4 1983009808
  %v1613 = vunpack.c.0.s8 %v1612
  %v1614 = vperm.slane %v1610, %v1613
  %v1615 = vrot.slane %v1603, 4
  %v1616 = vsel %vm1187, %v1615, %v1597
  %v1617 = vrot.slane %v1597, 4
  %v1618 = vsel %vm1187, %v1603, %v1617
  %v1620 = vunpack.c.l.s4 1934713408
  %v1621 = vunpack.c.0.s8 %v1620
  %v1622 = vperm.slane %v1616, %v1621
  %v1624 = vunpack.c.l.s4 1934713408
  %v1625 = vunpack.c.0.s8 %v1624
  %v1626 = vperm.slane %v1618, %v1625
  %v1627 = vrot.slane %v1614, 4
  %v1628 = vsel %vm1187, %v1627, %v1608
  %v1629 = vrot.slane %v1608, 4
  %v1630 = vsel %vm1187, %v1614, %v1629
  %v1632 = vunpack.c.l.s4 1934713408
  %v1633 = vunpack.c.0.s8 %v1632
  %v1634 = vperm.slane %v1628, %v1633
  %v1636 = vunpack.c.l.s4 1934713408
  %v1637 = vunpack.c.0.s8 %v1636
  %v1638 = vperm.slane %v1630, %v1637
  %v1639 = vrot.slane %v1634, 4
  %v1640 = vsel %vm1187, %v1639, %v1622
  %v1641 = vrot.slane %v1622, 4
  %v1642 = vsel %vm1187, %v1634, %v1641
  %v1643 = vrot.slane %v1638, 4
  %v1644 = vsel %vm1187, %v1643, %v1626
  %v1645 = vrot.slane %v1626, 4
  %v1646 = vsel %vm1187, %v1638, %v1645
  %1649 = vrot.lane.b32.xlu0 %v1162, 96
  %v1650 = vpop.permute.xlu0 %1649
  %1651 = vrot.lane.b32.xlu0 %v1164, 96
  %v1652 = vpop.permute.xlu0 %1651
  %1655 = vrot.lane.b32.xlu0 %v1162, 64
  %v1656 = vpop.permute.xlu0 %1655
  %1657 = vrot.lane.b32.xlu0 %v1164, 64
  %v1658 = vpop.permute.xlu0 %1657
  %1661 = vrot.lane.b32.xlu0 %v1162, 32
  %v1662 = vpop.permute.xlu0 %1661
  %1663 = vrot.lane.b32.xlu0 %v1164, 32
  %v1664 = vpop.permute.xlu0 %1663
  %v1667 = vrot.slane %v1656, 4
  %v1668 = vsel %vm1187, %v1667, %v1162
  %v1669 = vrot.slane %v1162, 4
  %v1670 = vsel %vm1187, %v1656, %v1669
  %v1672 = vunpack.c.l.s4 1983009808
  %v1673 = vunpack.c.0.s8 %v1672
  %v1674 = vperm.slane %v1668, %v1673
  %v1676 = vunpack.c.l.s4 1983009808
  %v1677 = vunpack.c.0.s8 %v1676
  %v1678 = vperm.slane %v1670, %v1677
  %v1679 = vrot.slane %v1662, 4
  %v1680 = vsel %vm1187, %v1679, %v1650
  %v1681 = vrot.slane %v1650, 4
  %v1682 = vsel %vm1187, %v1662, %v1681
  %v1684 = vunpack.c.l.s4 1983009808
  %v1685 = vunpack.c.0.s8 %v1684
  %v1686 = vperm.slane %v1680, %v1685
  %v1688 = vunpack.c.l.s4 1983009808
  %v1689 = vunpack.c.0.s8 %v1688
  %v1690 = vperm.slane %v1682, %v1689
  %v1691 = vrot.slane %v1686, 4
  %v1692 = vsel %vm1187, %v1691, %v1674
  %v1693 = vrot.slane %v1674, 4
  %v1694 = vsel %vm1187, %v1686, %v1693
  %v1696 = vunpack.c.l.s4 1934713408
  %v1697 = vunpack.c.0.s8 %v1696
  %v1698 = vperm.slane %v1692, %v1697
  %v1700 = vunpack.c.l.s4 1934713408
  %v1701 = vunpack.c.0.s8 %v1700
  %v1702 = vperm.slane %v1694, %v1701
  %v1703 = vrot.slane %v1690, 4
  %v1704 = vsel %vm1187, %v1703, %v1678
  %v1705 = vrot.slane %v1678, 4
  %v1706 = vsel %vm1187, %v1690, %v1705
  %v1708 = vunpack.c.l.s4 1934713408
  %v1709 = vunpack.c.0.s8 %v1708
  %v1710 = vperm.slane %v1704, %v1709
  %v1712 = vunpack.c.l.s4 1934713408
  %v1713 = vunpack.c.0.s8 %v1712
  %v1714 = vperm.slane %v1706, %v1713
  %v1715 = vrot.slane %v1698, 4
  %v1716 = vsel %vm1187, 0.0, %v1715
  %v1717 = vrot.slane %v1702, 4
  %v1718 = vsel %vm1187, 0.0, %v1717
  %v1719 = vrot.slane %v1710, 4
  %v1720 = vsel %vm1187, 0.0, %v1719
  %v1721 = vrot.slane %v1714, 4
  %v1722 = vsel %vm1187, 0.0, %v1721
  %v1723 = vrot.slane %v1658, 4
  %v1724 = vsel %vm1187, %v1723, %v1164
  %v1725 = vrot.slane %v1164, 4
  %v1726 = vsel %vm1187, %v1658, %v1725
  %v1728 = vunpack.c.l.s4 1983009808
  %v1729 = vunpack.c.0.s8 %v1728
  %v1730 = vperm.slane %v1724, %v1729
  %v1732 = vunpack.c.l.s4 1983009808
  %v1733 = vunpack.c.0.s8 %v1732
  %v1734 = vperm.slane %v1726, %v1733
  %v1735 = vrot.slane %v1664, 4
  %v1736 = vsel %vm1187, %v1735, %v1652
  %v1737 = vrot.slane %v1652, 4
  %v1738 = vsel %vm1187, %v1664, %v1737
  %v1740 = vunpack.c.l.s4 1983009808
  %v1741 = vunpack.c.0.s8 %v1740
  %v1742 = vperm.slane %v1736, %v1741
  %v1744 = vunpack.c.l.s4 1983009808
  %v1745 = vunpack.c.0.s8 %v1744
  %v1746 = vperm.slane %v1738, %v1745
  %v1747 = vrot.slane %v1742, 4
  %v1748 = vsel %vm1187, %v1747, %v1730
  %v1749 = vrot.slane %v1730, 4
  %v1750 = vsel %vm1187, %v1742, %v1749
  %v1752 = vunpack.c.l.s4 1934713408
  %v1753 = vunpack.c.0.s8 %v1752
  %v1754 = vperm.slane %v1748, %v1753
  %v1756 = vunpack.c.l.s4 1934713408
  %v1757 = vunpack.c.0.s8 %v1756
  %v1758 = vperm.slane %v1750, %v1757
  %v1759 = vrot.slane %v1746, 4
  %v1760 = vsel %vm1187, %v1759, %v1734
  %v1761 = vrot.slane %v1734, 4
  %v1762 = vsel %vm1187, %v1746, %v1761
  %v1764 = vunpack.c.l.s4 1934713408
  %v1765 = vunpack.c.0.s8 %v1764
  %v1766 = vperm.slane %v1760, %v1765
  %v1768 = vunpack.c.l.s4 1934713408
  %v1769 = vunpack.c.0.s8 %v1768
  %v1770 = vperm.slane %v1762, %v1769
  %v1771 = vrot.slane %v1754, 4
  %v1772 = vsel %vm1187, 0.0, %v1771
  %v1773 = vrot.slane %v1758, 4
  %v1774 = vsel %vm1187, 0.0, %v1773
  %v1775 = vrot.slane %v1766, 4
  %v1776 = vsel %vm1187, 0.0, %v1775
  %v1777 = vrot.slane %v1770, 4
  %v1778 = vsel %vm1187, 0.0, %v1777
  %v1779 = vsel %vm1187, %v1717, %v1698
  %v1781 = vunpack.c.l.s4 1983009808
  %v1782 = vunpack.c.0.s8 %v1781
  %v1783 = vperm.slane %v1779, %v1782
  %v1784 = vrot.slane %v1718, 4
  %v1785 = vsel %vm1187, %v1784, %v1716
  %v1787 = vunpack.c.l.s4 1983009808
  %v1788 = vunpack.c.0.s8 %v1787
  %v1789 = vperm.slane %v1785, %v1788
  %v1790 = vsel %vm1187, %v1721, %v1710
  %v1792 = vunpack.c.l.s4 1983009808
  %v1793 = vunpack.c.0.s8 %v1792
  %v1794 = vperm.slane %v1790, %v1793
  %v1795 = vrot.slane %v1722, 4
  %v1796 = vsel %vm1187, %v1795, %v1720
  %v1798 = vunpack.c.l.s4 1983009808
  %v1799 = vunpack.c.0.s8 %v1798
  %v1800 = vperm.slane %v1796, %v1799
  %v1801 = vrot.slane %v1789, 4
  %v1802 = vsel %vm1187, %v1801, %v1783
  %v1803 = vrot.slane %v1783, 4
  %v1804 = vsel %vm1187, %v1789, %v1803
  %v1806 = vunpack.c.l.s4 1934713408
  %v1807 = vunpack.c.0.s8 %v1806
  %v1808 = vperm.slane %v1802, %v1807
  %v1810 = vunpack.c.l.s4 1934713408
  %v1811 = vunpack.c.0.s8 %v1810
  %v1812 = vperm.slane %v1804, %v1811
  %v1813 = vrot.slane %v1800, 4
  %v1814 = vsel %vm1187, %v1813, %v1794
  %v1815 = vrot.slane %v1794, 4
  %v1816 = vsel %vm1187, %v1800, %v1815
  %v1818 = vunpack.c.l.s4 1934713408
  %v1819 = vunpack.c.0.s8 %v1818
  %v1820 = vperm.slane %v1814, %v1819
  %v1822 = vunpack.c.l.s4 1934713408
  %v1823 = vunpack.c.0.s8 %v1822
  %v1824 = vperm.slane %v1816, %v1823
  %v1825 = vrot.slane %v1820, 4
  %v1826 = vsel %vm1187, %v1825, %v1808
  %v1827 = vrot.slane %v1808, 4
  %v1828 = vsel %vm1187, %v1820, %v1827
  %v1829 = vrot.slane %v1824, 4
  %v1830 = vsel %vm1187, %v1829, %v1812
  %v1831 = vrot.slane %v1812, 4
  %v1832 = vsel %vm1187, %v1824, %v1831
  %v1833 = vsel %vm1187, %v1773, %v1754
  %v1835 = vunpack.c.l.s4 1983009808
  %v1836 = vunpack.c.0.s8 %v1835
  %v1837 = vperm.slane %v1833, %v1836
  %v1838 = vrot.slane %v1774, 4
  %v1839 = vsel %vm1187, %v1838, %v1772
  %v1841 = vunpack.c.l.s4 1983009808
  %v1842 = vunpack.c.0.s8 %v1841
  %v1843 = vperm.slane %v1839, %v1842
  %v1844 = vsel %vm1187, %v1777, %v1766
  %v1846 = vunpack.c.l.s4 1983009808
  %v1847 = vunpack.c.0.s8 %v1846
  %v1848 = vperm.slane %v1844, %v1847
  %v1849 = vrot.slane %v1778, 4
  %v1850 = vsel %vm1187, %v1849, %v1776
  %v1852 = vunpack.c.l.s4 1983009808
  %v1853 = vunpack.c.0.s8 %v1852
  %v1854 = vperm.slane %v1850, %v1853
  %v1855 = vrot.slane %v1843, 4
  %v1856 = vsel %vm1187, %v1855, %v1837
  %v1857 = vrot.slane %v1837, 4
  %v1858 = vsel %vm1187, %v1843, %v1857
  %v1860 = vunpack.c.l.s4 1934713408
  %v1861 = vunpack.c.0.s8 %v1860
  %v1862 = vperm.slane %v1856, %v1861
  %v1864 = vunpack.c.l.s4 1934713408
  %v1865 = vunpack.c.0.s8 %v1864
  %v1866 = vperm.slane %v1858, %v1865
  %v1867 = vrot.slane %v1854, 4
  %v1868 = vsel %vm1187, %v1867, %v1848
  %v1869 = vrot.slane %v1848, 4
  %v1870 = vsel %vm1187, %v1854, %v1869
  %v1872 = vunpack.c.l.s4 1934713408
  %v1873 = vunpack.c.0.s8 %v1872
  %v1874 = vperm.slane %v1868, %v1873
  %v1876 = vunpack.c.l.s4 1934713408
  %v1877 = vunpack.c.0.s8 %v1876
  %v1878 = vperm.slane %v1870, %v1877
  %v1879 = vrot.slane %v1874, 4
  %v1880 = vsel %vm1187, %v1879, %v1862
  %v1881 = vrot.slane %v1862, 4
  %v1882 = vsel %vm1187, %v1874, %v1881
  %v1883 = vrot.slane %v1878, 4
  %v1884 = vsel %vm1187, %v1883, %v1866
  %v1885 = vrot.slane %v1866, 4
  %v1886 = vsel %vm1187, %v1878, %v1885
  %vm1887 = vcmask 261120
  %v1889 = vsel %vm1887, %v1346, 0
  %v1892 = vsel %vm1887, %v1400, 0
  %v1895 = vsel %vm1887, %v1586, 0
  %v1898 = vsel %vm1887, %v1640, 0
  %1900 = vmatpush.xpose.msra.mxu0 0.0
  %1901 = vmatpush.xpose.msra.mxu0 0.0
  %1902 = vmatpush.xpose.msra.mxu0 0.0
  %1903 = vmatpush.xpose.msra.mxu0 0.0
  %1904 = vmatpush.xpose.msra.mxu0 0.0
  %1905 = vmatpush.xpose.msra.mxu0 0.0
  %1906 = vmatpush.xpose.msra.mxu0 0.0
  %1907 = vmatpush.xpose.msra.mxu0 0.0
  %1908 = vmatpush.xpose.msra.mxu0 0.0
  %1909 = vmatpush.xpose.msra.mxu0 0.0
  %1910 = vmatpush.xpose.msra.mxu0 0.0
  %1911 = vmatpush.xpose.msra.mxu0 0.0
  %1912 = vmatpush.xpose.msra.mxu0 0.0
  %1913 = vmatpush.xpose.msra.mxu0 0.0
  %1914 = vmatpush.xpose.msra.mxu0 %v1898
  %1915 = vmatpush.xpose.msra.mxu0 %v1895
  %1916 = vmatmul.f32.gmra.mxu0 %v1889
  %v1917 = vpop.f32.mrf.mxu0
  %v1918 = vadd.f32 0.0, %v1917
  %1919 = vmatmul.f32.gmra.mxu0 %v1892
  %v1920 = vpop.f32.mrf.mxu0
  %v1921 = vadd.f32 0.0, %v1920
  %1922 = vdwg.mxu0
  %v1924 = vsel %vm1887, %v1348, 0
  %v1927 = vsel %vm1887, %v1402, 0
  %v1930 = vsel %vm1887, %v1588, 0
  %v1933 = vsel %vm1887, %v1642, 0
  %1935 = vmatpush.xpose.msra.mxu0 0.0
  %1936 = vmatpush.xpose.msra.mxu0 0.0
  %1937 = vmatpush.xpose.msra.mxu0 0.0
  %1938 = vmatpush.xpose.msra.mxu0 0.0
  %1939 = vmatpush.xpose.msra.mxu0 0.0
  %1940 = vmatpush.xpose.msra.mxu0 0.0
  %1941 = vmatpush.xpose.msra.mxu0 0.0
  %1942 = vmatpush.xpose.msra.mxu0 0.0
  %1943 = vmatpush.xpose.msra.mxu0 0.0
  %1944 = vmatpush.xpose.msra.mxu0 0.0
  %1945 = vmatpush.xpose.msra.mxu0 0.0
  %1946 = vmatpush.xpose.msra.mxu0 0.0
  %1947 = vmatpush.xpose.msra.mxu0 0.0
  %1948 = vmatpush.xpose.msra.mxu0 0.0
  %1949 = vmatpush.xpose.msra.mxu0 %v1933
  %1950 = vmatpush.xpose.msra.mxu0 %v1930
  %1951 = vmatmul.f32.gmra.mxu0 %v1924
  %v1952 = vpop.f32.mrf.mxu0
  %v1953 = vadd.f32 0.0, %v1952
  %1954 = vmatmul.f32.gmra.mxu0 %v1927
  %v1955 = vpop.f32.mrf.mxu0
  %v1956 = vadd.f32 0.0, %v1955
  %1957 = vdwg.mxu0
  %v1959 = vsel %vm1887, %v1350, 0
  %v1962 = vsel %vm1887, %v1404, 0
  %v1965 = vsel %vm1887, %v1590, 0
  %v1968 = vsel %vm1887, %v1644, 0
  %1970 = vmatpush.xpose.msra.mxu0 0.0
  %1971 = vmatpush.xpose.msra.mxu0 0.0
  %1972 = vmatpush.xpose.msra.mxu0 0.0
  %1973 = vmatpush.xpose.msra.mxu0 0.0
  %1974 = vmatpush.xpose.msra.mxu0 0.0
  %1975 = vmatpush.xpose.msra.mxu0 0.0
  %1976 = vmatpush.xpose.msra.mxu0 0.0
  %1977 = vmatpush.xpose.msra.mxu0 0.0
  %1978 = vmatpush.xpose.msra.mxu0 0.0
  %1979 = vmatpush.xpose.msra.mxu0 0.0
  %1980 = vmatpush.xpose.msra.mxu0 0.0
  %1981 = vmatpush.xpose.msra.mxu0 0.0
  %1982 = vmatpush.xpose.msra.mxu0 0.0
  %1983 = vmatpush.xpose.msra.mxu0 0.0
  %1984 = vmatpush.xpose.msra.mxu0 %v1968
  %1985 = vmatpush.xpose.msra.mxu0 %v1965
  %1986 = vmatmul.f32.gmra.mxu0 %v1959
  %v1987 = vpop.f32.mrf.mxu0
  %v1988 = vadd.f32 0.0, %v1987
  %1989 = vmatmul.f32.gmra.mxu0 %v1962
  %v1990 = vpop.f32.mrf.mxu0
  %v1991 = vadd.f32 0.0, %v1990
  %1992 = vdwg.mxu0
  %v1994 = vsel %vm1887, %v1352, 0
  %v1997 = vsel %vm1887, %v1406, 0
  %v2000 = vsel %vm1887, %v1592, 0
  %v2003 = vsel %vm1887, %v1646, 0
  %2005 = vmatpush.xpose.msra.mxu0 0.0
  %2006 = vmatpush.xpose.msra.mxu0 0.0
  %2007 = vmatpush.xpose.msra.mxu0 0.0
  %2008 = vmatpush.xpose.msra.mxu0 0.0
  %2009 = vmatpush.xpose.msra.mxu0 0.0
  %2010 = vmatpush.xpose.msra.mxu0 0.0
  %2011 = vmatpush.xpose.msra.mxu0 0.0
  %2012 = vmatpush.xpose.msra.mxu0 0.0
  %2013 = vmatpush.xpose.msra.mxu0 0.0
  %2014 = vmatpush.xpose.msra.mxu0 0.0
  %2015 = vmatpush.xpose.msra.mxu0 0.0
  %2016 = vmatpush.xpose.msra.mxu0 0.0
  %2017 = vmatpush.xpose.msra.mxu0 0.0
  %2018 = vmatpush.xpose.msra.mxu0 0.0
  %2019 = vmatpush.xpose.msra.mxu0 %v2003
  %2020 = vmatpush.xpose.msra.mxu0 %v2000
  %2021 = vmatmul.f32.gmra.mxu0 %v1994
  %v2022 = vpop.f32.mrf.mxu0
  %v2023 = vadd.f32 0.0, %v2022
  %2024 = vmatmul.f32.gmra.mxu0 %v1997
  %v2025 = vpop.f32.mrf.mxu0
  %v2026 = vadd.f32 0.0, %v2025
  %2027 = vdwg.mxu0
  %v2028 = vmul.f32 %v1918, 0.17677669
  %v2029 = vmul.f32 %v1921, 0.17677669
  %v2030 = vmul.f32 %v1953, 0.17677669
  %v2031 = vmul.f32 %v1956, 0.17677669
  %v2032 = vmul.f32 %v1988, 0.17677669
  %v2033 = vmul.f32 %v1991, 0.17677669
  %v2034 = vmul.f32 %v2023, 0.17677669
  %v2035 = vmul.f32 %v2026, 0.17677669
  %v2036 = vld [vmem:[%s1] sm:$0xff]
  %v2037 = vld [vmem:[%s1 + $0x8] sm:$0xff]
  %v2038 = vadd.f32 %v2028, %v2036
  %v2039 = vadd.f32 %v2029, %v2037
  %v2040 = vadd.f32 %v2030, %v2036
  %v2041 = vadd.f32 %v2031, %v2037
  %v2042 = vadd.f32 %v2032, %v2036
  %v2043 = vadd.f32 %v2033, %v2037
  %v2044 = vadd.f32 %v2034, %v2036
  %v2045 = vadd.f32 %v2035, %v2037
  %vm2046 = vcmask 130048
  %v2047 = vsel %vm2046, %v2038, -inf
  %2048 = vmax.xlane.f32.xlu0 %v2047
  %v2049 = vpop.xlane.xlu0 %2048
  %v2050 = vsel %vm2046, %v2039, -inf
  %2051 = vmax.xlane.f32.xlu0 %v2050
  %v2052 = vpop.xlane.xlu0 %2051
  %v2053 = vsel %vm2046, %v2040, -inf
  %2054 = vmax.xlane.f32.xlu0 %v2053
  %v2055 = vpop.xlane.xlu0 %2054
  %v2056 = vsel %vm2046, %v2041, -inf
  %2057 = vmax.xlane.f32.xlu0 %v2056
  %v2058 = vpop.xlane.xlu0 %2057
  %v2059 = vsel %vm2046, %v2042, -inf
  %2060 = vmax.xlane.f32.xlu0 %v2059
  %v2061 = vpop.xlane.xlu0 %2060
  %v2062 = vsel %vm2046, %v2043, -inf
  %2063 = vmax.xlane.f32.xlu0 %v2062
  %v2064 = vpop.xlane.xlu0 %2063
  %v2065 = vsel %vm2046, %v2044, -inf
  %2066 = vmax.xlane.f32.xlu0 %v2065
  %v2067 = vpop.xlane.xlu0 %2066
  %v2068 = vsel %vm2046, %v2045, -inf
  %2069 = vmax.xlane.f32.xlu0 %v2068
  %v2070 = vpop.xlane.xlu0 %2069
  %v2071 = vsub.f32 %v2038, %v2049
  %v2072 = vsub.f32 %v2039, %v2052
  %v2073 = vsub.f32 %v2040, %v2055
  %v2074 = vsub.f32 %v2041, %v2058
  %v2075 = vsub.f32 %v2042, %v2061
  %v2076 = vsub.f32 %v2043, %v2064
  %v2077 = vsub.f32 %v2044, %v2067
  %v2078 = vsub.f32 %v2045, %v2070
  %v2079 = vmul.f32 %v2071, 1.442695
  %v2080 = vpow.pop %v2079
  %v2081 = vmul.f32 %v2072, 1.442695
  %v2082 = vpow.pop %v2081
  %v2083 = vmul.f32 %v2073, 1.442695
  %v2084 = vpow.pop %v2083
  %v2085 = vmul.f32 %v2074, 1.442695
  %v2086 = vpow.pop %v2085
  %v2087 = vmul.f32 %v2075, 1.442695
  %v2088 = vpow.pop %v2087
  %v2089 = vmul.f32 %v2076, 1.442695
  %v2090 = vpow.pop %v2089
  %v2091 = vmul.f32 %v2077, 1.442695
  %v2092 = vpow.pop %v2091
  %v2093 = vmul.f32 %v2078, 1.442695
  %v2094 = vpow.pop %v2093
  %v2095 = vsel %vm2046, %v2080, 0.0
  %2096 = vadd.xlane.f32.xlu0 %v2095
  %v2097 = vpop.xlane.xlu0 %2096
  %v2098 = vsel %vm2046, %v2082, 0.0
  %2099 = vadd.xlane.f32.xlu0 %v2098
  %v2100 = vpop.xlane.xlu0 %2099
  %v2101 = vsel %vm2046, %v2084, 0.0
  %2102 = vadd.xlane.f32.xlu0 %v2101
  %v2103 = vpop.xlane.xlu0 %2102
  %v2104 = vsel %vm2046, %v2086, 0.0
  %2105 = vadd.xlane.f32.xlu0 %v2104
  %v2106 = vpop.xlane.xlu0 %2105
  %v2107 = vsel %vm2046, %v2088, 0.0
  %2108 = vadd.xlane.f32.xlu0 %v2107
  %v2109 = vpop.xlane.xlu0 %2108
  %v2110 = vsel %vm2046, %v2090, 0.0
  %2111 = vadd.xlane.f32.xlu0 %v2110
  %v2112 = vpop.xlane.xlu0 %2111
  %v2113 = vsel %vm2046, %v2092, 0.0
  %2114 = vadd.xlane.f32.xlu0 %v2113
  %v2115 = vpop.xlane.xlu0 %2114
  %v2116 = vsel %vm2046, %v2094, 0.0
  %2117 = vadd.xlane.f32.xlu0 %v2116
  %v2118 = vpop.xlane.xlu0 %2117
  %v2119 = vrcp.pop %v2097
  %v2120 = vrcp.pop %v2100
  %v2121 = vrcp.pop %v2103
  %v2122 = vrcp.pop %v2106
  %v2123 = vrcp.pop %v2109
  %v2124 = vrcp.pop %v2112
  %v2125 = vrcp.pop %v2115
  %v2126 = vrcp.pop %v2118
  %v2127 = vmul.f32 %v2080, %v2119
  %v2128 = vmul.f32 %v2082, %v2120
  %v2129 = vmul.f32 %v2084, %v2121
  %v2130 = vmul.f32 %v2086, %v2122
  %v2131 = vmul.f32 %v2088, %v2123
  %v2132 = vmul.f32 %v2090, %v2124
  %v2133 = vmul.f32 %v2092, %v2125
  %v2134 = vmul.f32 %v2094, %v2126
  %v2136 = vsel %vm2046, %v2127, 0
  %v2139 = vsel %vm2046, %v2128, 0
  %2141 = vmatpush.msra.mxu0 0.0
  %2142 = vmatpush.msra.mxu0 0.0
  %2143 = vmatpush.msra.mxu0 0.0
  %2144 = vmatpush.msra.mxu0 0.0
  %2145 = vmatpush.msra.mxu0 0.0
  %2146 = vmatpush.msra.mxu0 0.0
  %2147 = vmatpush.msra.mxu0 0.0
  %2148 = vmatpush.msra.mxu0 0.0
  %2149 = vmatpush.msra.mxu0 0.0
  %2150 = vmatpush.msra.mxu0 0.0
  %2151 = vmatpush.msra.mxu0 0.0
  %2152 = vmatpush.msra.mxu0 0.0
  %2153 = vmatpush.msra.mxu0 0.0
  %2154 = vmatpush.msra.mxu0 0.0
  %2155 = vmatpush.msra.mxu0 %v1880
  %2156 = vmatpush.msra.mxu0 %v1826
  %2157 = vmatmul.f32.gmra.mxu0 %v2136
  %v2158 = vpop.f32.mrf.mxu0
  %v2159 = vadd.f32 0.0, %v2158
  %2160 = vmatmul.f32.gmra.mxu0 %v2139
  %v2161 = vpop.f32.mrf.mxu0
  %v2162 = vadd.f32 0.0, %v2161
  %2163 = vdwg.mxu0
  %v2165 = vsel %vm2046, %v2129, 0
  %v2168 = vsel %vm2046, %v2130, 0
  %2170 = vmatpush.msra.mxu0 0.0
  %2171 = vmatpush.msra.mxu0 0.0
  %2172 = vmatpush.msra.mxu0 0.0
  %2173 = vmatpush.msra.mxu0 0.0
  %2174 = vmatpush.msra.mxu0 0.0
  %2175 = vmatpush.msra.mxu0 0.0
  %2176 = vmatpush.msra.mxu0 0.0
  %2177 = vmatpush.msra.mxu0 0.0
  %2178 = vmatpush.msra.mxu0 0.0
  %2179 = vmatpush.msra.mxu0 0.0
  %2180 = vmatpush.msra.mxu0 0.0
  %2181 = vmatpush.msra.mxu0 0.0
  %2182 = vmatpush.msra.mxu0 0.0
  %2183 = vmatpush.msra.mxu0 0.0
  %2184 = vmatpush.msra.mxu0 %v1882
  %2185 = vmatpush.msra.mxu0 %v1828
  %2186 = vmatmul.f32.gmra.mxu0 %v2165
  %v2187 = vpop.f32.mrf.mxu0
  %v2188 = vadd.f32 0.0, %v2187
  %2189 = vmatmul.f32.gmra.mxu0 %v2168
  %v2190 = vpop.f32.mrf.mxu0
  %v2191 = vadd.f32 0.0, %v2190
  %2192 = vdwg.mxu0
  %v2194 = vsel %vm2046, %v2131, 0
  %v2197 = vsel %vm2046, %v2132, 0
  %2199 = vmatpush.msra.mxu0 0.0
  %2200 = vmatpush.msra.mxu0 0.0
  %2201 = vmatpush.msra.mxu0 0.0
  %2202 = vmatpush.msra.mxu0 0.0
  %2203 = vmatpush.msra.mxu0 0.0
  %2204 = vmatpush.msra.mxu0 0.0
  %2205 = vmatpush.msra.mxu0 0.0
  %2206 = vmatpush.msra.mxu0 0.0
  %2207 = vmatpush.msra.mxu0 0.0
  %2208 = vmatpush.msra.mxu0 0.0
  %2209 = vmatpush.msra.mxu0 0.0
  %2210 = vmatpush.msra.mxu0 0.0
  %2211 = vmatpush.msra.mxu0 0.0
  %2212 = vmatpush.msra.mxu0 0.0
  %2213 = vmatpush.msra.mxu0 %v1884
  %2214 = vmatpush.msra.mxu0 %v1830
  %2215 = vmatmul.f32.gmra.mxu0 %v2194
  %v2216 = vpop.f32.mrf.mxu0
  %v2217 = vadd.f32 0.0, %v2216
  %2218 = vmatmul.f32.gmra.mxu0 %v2197
  %v2219 = vpop.f32.mrf.mxu0
  %v2220 = vadd.f32 0.0, %v2219
  %2221 = vdwg.mxu0
  %v2223 = vsel %vm2046, %v2133, 0
  %v2226 = vsel %vm2046, %v2134, 0
  %2228 = vmatpush.msra.mxu0 0.0
  %2229 = vmatpush.msra.mxu0 0.0
  %2230 = vmatpush.msra.mxu0 0.0
  %2231 = vmatpush.msra.mxu0 0.0
  %2232 = vmatpush.msra.mxu0 0.0
  %2233 = vmatpush.msra.mxu0 0.0
  %2234 = vmatpush.msra.mxu0 0.0
  %2235 = vmatpush.msra.mxu0 0.0
  %2236 = vmatpush.msra.mxu0 0.0
  %2237 = vmatpush.msra.mxu0 0.0
  %2238 = vmatpush.msra.mxu0 0.0
  %2239 = vmatpush.msra.mxu0 0.0
  %2240 = vmatpush.msra.mxu0 0.0
  %2241 = vmatpush.msra.mxu0 0.0
  %2242 = vmatpush.msra.mxu0 %v1886
  %2243 = vmatpush.msra.mxu0 %v1832
  %2244 = vmatmul.f32.gmra.mxu0 %v2223
  %v2245 = vpop.f32.mrf.mxu0
  %v2246 = vadd.f32 0.0, %v2245
  %2247 = vmatmul.f32.gmra.mxu0 %v2226
  %v2248 = vpop.f32.mrf.mxu0
  %v2249 = vadd.f32 0.0, %v2248
  %2250 = vdwg.mxu0
  %v2251 = vrot.slane %v2217, 4
  %v2252 = vsel %vm1187, %v2251, %v2159
  %v2253 = vrot.slane %v2159, 4
  %v2254 = vsel %vm1187, %v2217, %v2253
  %v2256 = vunpack.c.l.s4 1983009808
  %v2257 = vunpack.c.0.s8 %v2256
  %v2258 = vperm.slane %v2252, %v2257
  %v2260 = vunpack.c.l.s4 1983009808
  %v2261 = vunpack.c.0.s8 %v2260
  %v2262 = vperm.slane %v2254, %v2261
  %v2263 = vrot.slane %v2246, 4
  %v2264 = vsel %vm1187, %v2263, %v2188
  %v2265 = vrot.slane %v2188, 4
  %v2266 = vsel %vm1187, %v2246, %v2265
  %v2268 = vunpack.c.l.s4 1983009808
  %v2269 = vunpack.c.0.s8 %v2268
  %v2270 = vperm.slane %v2264, %v2269
  %v2272 = vunpack.c.l.s4 1983009808
  %v2273 = vunpack.c.0.s8 %v2272
  %v2274 = vperm.slane %v2266, %v2273
  %v2275 = vrot.slane %v2270, 4
  %v2276 = vsel %vm1187, %v2275, %v2258
  %v2277 = vrot.slane %v2258, 4
  %v2278 = vsel %vm1187, %v2270, %v2277
  %v2280 = vunpack.c.l.s4 1934713408
  %v2281 = vunpack.c.0.s8 %v2280
  %v2282 = vperm.slane %v2276, %v2281
  %v2284 = vunpack.c.l.s4 1934713408
  %v2285 = vunpack.c.0.s8 %v2284
  %v2286 = vperm.slane %v2278, %v2285
  %v2287 = vrot.slane %v2274, 4
  %v2288 = vsel %vm1187, %v2287, %v2262
  %v2289 = vrot.slane %v2262, 4
  %v2290 = vsel %vm1187, %v2274, %v2289
  %v2292 = vunpack.c.l.s4 1934713408
  %v2293 = vunpack.c.0.s8 %v2292
  %v2294 = vperm.slane %v2288, %v2293
  %v2296 = vunpack.c.l.s4 1934713408
  %v2297 = vunpack.c.0.s8 %v2296
  %v2298 = vperm.slane %v2290, %v2297
  %v2299 = vrot.slane %v2282, 4
  %v2300 = vsel %vm1187, 0.0, %v2299
  %v2301 = vrot.slane %v2286, 4
  %v2302 = vsel %vm1187, 0.0, %v2301
  %v2303 = vrot.slane %v2294, 4
  %v2304 = vsel %vm1187, 0.0, %v2303
  %v2305 = vrot.slane %v2298, 4
  %v2306 = vsel %vm1187, 0.0, %v2305
  %v2307 = vrot.slane %v2220, 4
  %v2308 = vsel %vm1187, %v2307, %v2162
  %v2309 = vrot.slane %v2162, 4
  %v2310 = vsel %vm1187, %v2220, %v2309
  %v2312 = vunpack.c.l.s4 1983009808
  %v2313 = vunpack.c.0.s8 %v2312
  %v2314 = vperm.slane %v2308, %v2313
  %v2316 = vunpack.c.l.s4 1983009808
  %v2317 = vunpack.c.0.s8 %v2316
  %v2318 = vperm.slane %v2310, %v2317
  %v2319 = vrot.slane %v2249, 4
  %v2320 = vsel %vm1187, %v2319, %v2191
  %v2321 = vrot.slane %v2191, 4
  %v2322 = vsel %vm1187, %v2249, %v2321
  %v2324 = vunpack.c.l.s4 1983009808
  %v2325 = vunpack.c.0.s8 %v2324
  %v2326 = vperm.slane %v2320, %v2325
  %v2328 = vunpack.c.l.s4 1983009808
  %v2329 = vunpack.c.0.s8 %v2328
  %v2330 = vperm.slane %v2322, %v2329
  %v2331 = vrot.slane %v2326, 4
  %v2332 = vsel %vm1187, %v2331, %v2314
  %v2333 = vrot.slane %v2314, 4
  %v2334 = vsel %vm1187, %v2326, %v2333
  %v2336 = vunpack.c.l.s4 1934713408
  %v2337 = vunpack.c.0.s8 %v2336
  %v2338 = vperm.slane %v2332, %v2337
  %v2340 = vunpack.c.l.s4 1934713408
  %v2341 = vunpack.c.0.s8 %v2340
  %v2342 = vperm.slane %v2334, %v2341
  %v2343 = vrot.slane %v2330, 4
  %v2344 = vsel %vm1187, %v2343, %v2318
  %v2345 = vrot.slane %v2318, 4
  %v2346 = vsel %vm1187, %v2330, %v2345
  %v2348 = vunpack.c.l.s4 1934713408
  %v2349 = vunpack.c.0.s8 %v2348
  %v2350 = vperm.slane %v2344, %v2349
  %v2352 = vunpack.c.l.s4 1934713408
  %v2353 = vunpack.c.0.s8 %v2352
  %v2354 = vperm.slane %v2346, %v2353
  %v2355 = vrot.slane %v2338, 4
  %v2356 = vsel %vm1187, 0.0, %v2355
  %v2357 = vrot.slane %v2342, 4
  %v2358 = vsel %vm1187, 0.0, %v2357
  %v2359 = vrot.slane %v2350, 4
  %v2360 = vsel %vm1187, 0.0, %v2359
  %v2361 = vrot.slane %v2354, 4
  %v2362 = vsel %vm1187, 0.0, %v2361
  %v2363 = vsel %vm1187, %v2301, %v2282
  %v2365 = vunpack.c.l.s4 1983009808
  %v2366 = vunpack.c.0.s8 %v2365
  %v2367 = vperm.slane %v2363, %v2366
  %v2368 = vrot.slane %v2302, 4
  %v2369 = vsel %vm1187, %v2368, %v2300
  %v2371 = vunpack.c.l.s4 1983009808
  %v2372 = vunpack.c.0.s8 %v2371
  %v2373 = vperm.slane %v2369, %v2372
  %v2374 = vsel %vm1187, %v2305, %v2294
  %v2376 = vunpack.c.l.s4 1983009808
  %v2377 = vunpack.c.0.s8 %v2376
  %v2378 = vperm.slane %v2374, %v2377
  %v2379 = vrot.slane %v2306, 4
  %v2380 = vsel %vm1187, %v2379, %v2304
  %v2382 = vunpack.c.l.s4 1983009808
  %v2383 = vunpack.c.0.s8 %v2382
  %v2384 = vperm.slane %v2380, %v2383
  %v2385 = vrot.slane %v2373, 4
  %v2386 = vsel %vm1187, %v2385, %v2367
  %v2387 = vrot.slane %v2367, 4
  %v2388 = vsel %vm1187, %v2373, %v2387
  %v2390 = vunpack.c.l.s4 1934713408
  %v2391 = vunpack.c.0.s8 %v2390
  %v2392 = vperm.slane %v2386, %v2391
  %v2394 = vunpack.c.l.s4 1934713408
  %v2395 = vunpack.c.0.s8 %v2394
  %v2396 = vperm.slane %v2388, %v2395
  %v2397 = vrot.slane %v2384, 4
  %v2398 = vsel %vm1187, %v2397, %v2378
  %v2399 = vrot.slane %v2378, 4
  %v2400 = vsel %vm1187, %v2384, %v2399
  %v2402 = vunpack.c.l.s4 1934713408
  %v2403 = vunpack.c.0.s8 %v2402
  %v2404 = vperm.slane %v2398, %v2403
  %v2406 = vunpack.c.l.s4 1934713408
  %v2407 = vunpack.c.0.s8 %v2406
  %v2408 = vperm.slane %v2400, %v2407
  %v2409 = vrot.slane %v2404, 4
  %v2410 = vsel %vm1187, %v2409, %v2392
  %v2411 = vrot.slane %v2392, 4
  %v2412 = vsel %vm1187, %v2404, %v2411
  %v2413 = vrot.slane %v2408, 4
  %v2414 = vsel %vm1187, %v2413, %v2396
  %v2415 = vrot.slane %v2396, 4
  %v2416 = vsel %vm1187, %v2408, %v2415
  %v2417 = vsel %vm1187, %v2357, %v2338
  %v2419 = vunpack.c.l.s4 1983009808
  %v2420 = vunpack.c.0.s8 %v2419
  %v2421 = vperm.slane %v2417, %v2420
  %v2422 = vrot.slane %v2358, 4
  %v2423 = vsel %vm1187, %v2422, %v2356
  %v2425 = vunpack.c.l.s4 1983009808
  %v2426 = vunpack.c.0.s8 %v2425
  %v2427 = vperm.slane %v2423, %v2426
  %v2428 = vsel %vm1187, %v2361, %v2350
  %v2430 = vunpack.c.l.s4 1983009808
  %v2431 = vunpack.c.0.s8 %v2430
  %v2432 = vperm.slane %v2428, %v2431
  %v2433 = vrot.slane %v2362, 4
  %v2434 = vsel %vm1187, %v2433, %v2360
  %v2436 = vunpack.c.l.s4 1983009808
  %v2437 = vunpack.c.0.s8 %v2436
  %v2438 = vperm.slane %v2434, %v2437
  %v2439 = vrot.slane %v2427, 4
  %v2440 = vsel %vm1187, %v2439, %v2421
  %v2441 = vrot.slane %v2421, 4
  %v2442 = vsel %vm1187, %v2427, %v2441
  %v2444 = vunpack.c.l.s4 1934713408
  %v2445 = vunpack.c.0.s8 %v2444
  %v2446 = vperm.slane %v2440, %v2445
  %v2448 = vunpack.c.l.s4 1934713408
  %v2449 = vunpack.c.0.s8 %v2448
  %v2450 = vperm.slane %v2442, %v2449
  %v2451 = vrot.slane %v2438, 4
  %v2452 = vsel %vm1187, %v2451, %v2432
  %v2453 = vrot.slane %v2432, 4
  %v2454 = vsel %vm1187, %v2438, %v2453
  %v2456 = vunpack.c.l.s4 1934713408
  %v2457 = vunpack.c.0.s8 %v2456
  %v2458 = vperm.slane %v2452, %v2457
  %v2460 = vunpack.c.l.s4 1934713408
  %v2461 = vunpack.c.0.s8 %v2460
  %v2462 = vperm.slane %v2454, %v2461
  %v2463 = vrot.slane %v2458, 4
  %v2464 = vsel %vm1187, %v2463, %v2446
  %v2465 = vrot.slane %v2446, 4
  %v2466 = vsel %vm1187, %v2458, %v2465
  %v2467 = vrot.slane %v2462, 4
  %v2468 = vsel %vm1187, %v2467, %v2450
  %v2469 = vrot.slane %v2450, 4
  %v2470 = vsel %vm1187, %v2462, %v2469
  %2473 = vrot.lane.b32.xlu0 %v2412, 32
  %v2474 = vpop.permute.xlu0 %2473
  %2475 = vrot.lane.b32.xlu0 %v2466, 32
  %v2476 = vpop.permute.xlu0 %2475
  %2481 = vrot.lane.b32.xlu0 %v2414, 64
  %v2482 = vpop.permute.xlu0 %2481
  %2483 = vrot.lane.b32.xlu0 %v2468, 64
  %v2484 = vpop.permute.xlu0 %2483
  %2489 = vrot.lane.b32.xlu0 %v2416, 96
  %v2490 = vpop.permute.xlu0 %2489
  %2491 = vrot.lane.b32.xlu0 %v2470, 96
  %v2492 = vpop.permute.xlu0 %2491
  %v2495 = vsel %vm1887, %v2410, %v2474
  %v2496 = vsel %vm1887, %v2464, %v2476
  %vm2497 = vcmask 523264
  %v2498 = vsel %vm2497, %v2495, %v2482
  %v2499 = vsel %vm2497, %v2496, %v2484
  %vm2500 = vcmask 785408
  %v2501 = vsel %vm2500, %v2498, %v2490
  %v2502 = vsel %vm2500, %v2499, %v2492
  %v2503 = vpack.c.bf16 %v2502, %v2501
  %v2504 = vld [vmem:[%s7] sm:$0xf]
  %v2505 = vld [vmem:[%s7 + $0x4] sm:$0xf]
  %v2506 = vld [vmem:[%s7 + $0x8] sm:$0xf]
  %v2507 = vld [vmem:[%s7 + $0xc] sm:$0xf]
  %v2508 = vld [vmem:[%s7 + $0x10] sm:$0xf]
  %v2509 = vld [vmem:[%s7 + $0x14] sm:$0xf]
  %v2510 = vld [vmem:[%s7 + $0x18] sm:$0xf]
  %v2511 = vld [vmem:[%s7 + $0x1c] sm:$0xf]
  %v2512 = vld [vmem:[%s7 + $0x20] sm:$0xf]
  %v2513 = vld [vmem:[%s7 + $0x24] sm:$0xf]
  %v2514 = vld [vmem:[%s7 + $0x28] sm:$0xf]
  %v2515 = vld [vmem:[%s7 + $0x2c] sm:$0xf]
  %v2516 = vld [vmem:[%s7 + $0x30] sm:$0xf]
  %v2517 = vld [vmem:[%s7 + $0x34] sm:$0xf]
  %v2518 = vld [vmem:[%s7 + $0x38] sm:$0xf]
  %v2519 = vld [vmem:[%s7 + $0x3c] sm:$0xf]
  %v2520 = vld [vmem:[%s8] sm:$0x1]
  %v2522 = vperm.slane %v2520, 0
  %v2540 = vunpack.c.l.b16 %v2504
  %v2541 = vunpack.c.l.b16 %v2505
  %v2542 = vunpack.c.l.b16 %v2506
  %v2543 = vunpack.c.l.b16 %v2507
  %v2544 = vunpack.c.l.b16 %v2508
  %v2545 = vunpack.c.l.b16 %v2509
  %v2546 = vunpack.c.l.b16 %v2510
  %v2547 = vunpack.c.l.b16 %v2511
  %v2548 = vunpack.c.l.b16 %v2512
  %v2549 = vunpack.c.l.b16 %v2513
  %v2550 = vunpack.c.l.b16 %v2514
  %v2551 = vunpack.c.l.b16 %v2515
  %v2552 = vunpack.c.l.b16 %v2516
  %v2553 = vunpack.c.l.b16 %v2517
  %v2554 = vunpack.c.l.b16 %v2518
  %v2555 = vunpack.c.l.b16 %v2519
  %v2556 = vpack.c.b16 %v2541, %v2540
  %v2557 = vpack.c.b16 %v2543, %v2542
  %v2558 = vpack.c.b16 %v2545, %v2544
  %v2559 = vpack.c.b16 %v2547, %v2546
  %v2560 = vpack.c.b16 %v2549, %v2548
  %v2561 = vpack.c.b16 %v2551, %v2550
  %v2562 = vpack.c.b16 %v2553, %v2552
  %v2563 = vpack.c.b16 %v2555, %v2554
  %2572 = vmatpush.bf16.msra.mxu0 %v2563
  %2573 = vmatpush.bf16.msra.mxu0 %v2562
  %2574 = vmatpush.bf16.msra.mxu0 %v2561
  %2575 = vmatpush.bf16.msra.mxu0 %v2560
  %2576 = vmatpush.bf16.msra.mxu0 %v2559
  %2577 = vmatpush.bf16.msra.mxu0 %v2558
  %2578 = vmatpush.bf16.msra.mxu0 %v2557
  %2579 = vmatpush.bf16.msra.mxu0 %v2556
  %2580 = vmatmul.bf16.gmra.mxu0 %v2503
  %v2581 = vpop.f32.mrf.mxu0
  %v2582 = vadd.f32 %v2522, %v2581
  %v2583 = vpop.f32.mrf.mxu0
  %v2584 = vadd.f32 %v2522, %v2583
  %2585 = vdwg.mxu0
  %v2586 = vadd.f32 %v891, %v2582
  %v2587 = vadd.f32 %v894, %v2584
  %v2588 = vld [vmem:[%s9] sm:$0x1]
  %v2589 = vld [vmem:[%s10] sm:$0x1]
  %2590 = vadd.xlane.f32.xlu0 %v2586
  %v2591 = vpop.xlane.xlu0 %2590
  %2592 = vadd.xlane.f32.xlu0 %v2587
  %v2593 = vpop.xlane.xlu0 %2592
  %v2594 = vmul.f32 %v2591, %v908
  %v2595 = vmul.f32 %v2593, %v908
  %v2596 = vsub.f32 %v2586, %v2594
  %v2597 = vsub.f32 %v2587, %v2595
  %v2598 = vmul.f32 %v2596, %v2596
  %v2599 = vmul.f32 %v2597, %v2597
  %2600 = vadd.xlane.f32.xlu0 %v2598
  %v2601 = vpop.xlane.xlu0 %2600
  %2602 = vadd.xlane.f32.xlu0 %v2599
  %v2603 = vpop.xlane.xlu0 %2602
  %v2604 = vmul.f32 %v2601, %v908
  %v2605 = vmul.f32 %v2603, %v908
  %v2606 = vadd.f32 %v2604, 1e-05
  %v2607 = vadd.f32 %v2605, 1e-05
  %v2608 = vrsqrt.pop %v2606
  %v2609 = vmul.f32 %v2608, %v2606
  %v2610 = vmul.f32 %v2609, %v2608
  %v2611 = vmul.f32 0.5, %v2610
  %v2612 = vsub.f32 1.5, %v2611
  %v2613 = vmul.f32 %v2608, %v2612
  %vm2614 = vweird.f32 %v2606
  %vm2615 = vweird.f32 %v2608
  %vm2616 = vmor %vm2614, %vm2615
  %v2617 = vsel %vm2616, %v2608, %v2613
  %v2618 = vrsqrt.pop %v2607
  %v2619 = vmul.f32 %v2618, %v2607
  %v2620 = vmul.f32 %v2619, %v2618
  %v2621 = vmul.f32 0.5, %v2620
  %v2622 = vsub.f32 1.5, %v2621
  %v2623 = vmul.f32 %v2618, %v2622
  %vm2624 = vweird.f32 %v2607
  %vm2625 = vweird.f32 %v2618
  %vm2626 = vmor %vm2624, %vm2625
  %v2627 = vsel %vm2626, %v2618, %v2623
  %v2628 = vmul.f32 %v2596, %v2617
  %v2629 = vmul.f32 %v2597, %v2627
  %v2631 = vperm.slane %v2588, 0
  %v2633 = vmul.f32 %v2628, %v2631
  %v2634 = vmul.f32 %v2629, %v2631
  %v2636 = vperm.slane %v2589, 0
  %v2638 = vadd.f32 %v2633, %v2636
  %v2639 = vadd.f32 %v2634, %v2636
  %v2640 = vpack.c.bf16 %v2639, %v2638
  %v2641 = vld [vmem:[%s11] sm:$0xff]
  %v2642 = vld [vmem:[%s11 + $0x8] sm:$0xff]
  %v2643 = vld [vmem:[%s11 + $0x10] sm:$0xff]
  %v2644 = vld [vmem:[%s11 + $0x18] sm:$0xff]
  %v2645 = vld [vmem:[%s11 + $0x20] sm:$0xff]
  %v2646 = vld [vmem:[%s11 + $0x28] sm:$0xff]
  %v2647 = vld [vmem:[%s11 + $0x30] sm:$0xff]
  %v2648 = vld [vmem:[%s11 + $0x38] sm:$0xff]
  %v2649 = vld [vmem:[%s11 + $0x40] sm:$0xff]
  %v2650 = vld [vmem:[%s11 + $0x48] sm:$0xff]
  %v2651 = vld [vmem:[%s11 + $0x50] sm:$0xff]
  %v2652 = vld [vmem:[%s11 + $0x58] sm:$0xff]
  %v2653 = vld [vmem:[%s11 + $0x60] sm:$0xff]
  %v2654 = vld [vmem:[%s11 + $0x68] sm:$0xff]
  %v2655 = vld [vmem:[%s11 + $0x70] sm:$0xff]
  %v2656 = vld [vmem:[%s11 + $0x78] sm:$0xff]
  %v2657 = vld [vmem:[%s11 + $0x80] sm:$0xff]
  %v2658 = vld [vmem:[%s11 + $0x88] sm:$0xff]
  %v2659 = vld [vmem:[%s11 + $0x90] sm:$0xff]
  %v2660 = vld [vmem:[%s11 + $0x98] sm:$0xff]
  %v2661 = vld [vmem:[%s11 + $0xa0] sm:$0xff]
  %v2662 = vld [vmem:[%s11 + $0xa8] sm:$0xff]
  %v2663 = vld [vmem:[%s11 + $0xb0] sm:$0xff]
  %v2664 = vld [vmem:[%s11 + $0xb8] sm:$0xff]
  %v2665 = vld [vmem:[%s11 + $0xc0] sm:$0xff]
  %v2666 = vld [vmem:[%s11 + $0xc8] sm:$0xff]
  %v2667 = vld [vmem:[%s11 + $0xd0] sm:$0xff]
  %v2668 = vld [vmem:[%s11 + $0xd8] sm:$0xff]
  %v2669 = vld [vmem:[%s11 + $0xe0] sm:$0xff]
  %v2670 = vld [vmem:[%s11 + $0xe8] sm:$0xff]
  %v2671 = vld [vmem:[%s11 + $0xf0] sm:$0xff]
  %v2672 = vld [vmem:[%s11 + $0xf8] sm:$0xff]
  %v2673 = vld [vmem:[%s12] sm:$0xf]
  %v2675 = vperm.slane %v2673, 0
  %v2676 = vperm.slane %v2673, 1
  %v2677 = vperm.slane %v2673, 2
  %v2678 = vperm.slane %v2673, 3
  %v2715 = vunpack.c.l.b16 %v2641
  %v2716 = vunpack.c.h.b16 %v2641
  %v2717 = vunpack.c.l.b16 %v2642
  %v2718 = vunpack.c.h.b16 %v2642
  %v2719 = vunpack.c.l.b16 %v2643
  %v2720 = vunpack.c.h.b16 %v2643
  %v2721 = vunpack.c.l.b16 %v2644
  %v2722 = vunpack.c.h.b16 %v2644
  %v2723 = vunpack.c.l.b16 %v2645
  %v2724 = vunpack.c.h.b16 %v2645
  %v2725 = vunpack.c.l.b16 %v2646
  %v2726 = vunpack.c.h.b16 %v2646
  %v2727 = vunpack.c.l.b16 %v2647
  %v2728 = vunpack.c.h.b16 %v2647
  %v2729 = vunpack.c.l.b16 %v2648
  %v2730 = vunpack.c.h.b16 %v2648
  %v2731 = vunpack.c.l.b16 %v2649
  %v2732 = vunpack.c.h.b16 %v2649
  %v2733 = vunpack.c.l.b16 %v2650
  %v2734 = vunpack.c.h.b16 %v2650
  %v2735 = vunpack.c.l.b16 %v2651
  %v2736 = vunpack.c.h.b16 %v2651
  %v2737 = vunpack.c.l.b16 %v2652
  %v2738 = vunpack.c.h.b16 %v2652
  %v2739 = vunpack.c.l.b16 %v2653
  %v2740 = vunpack.c.h.b16 %v2653
  %v2741 = vunpack.c.l.b16 %v2654
  %v2742 = vunpack.c.h.b16 %v2654
  %v2743 = vunpack.c.l.b16 %v2655
  %v2744 = vunpack.c.h.b16 %v2655
  %v2745 = vunpack.c.l.b16 %v2656
  %v2746 = vunpack.c.h.b16 %v2656
  %v2747 = vunpack.c.l.b16 %v2657
  %v2748 = vunpack.c.h.b16 %v2657
  %v2749 = vunpack.c.l.b16 %v2658
  %v2750 = vunpack.c.h.b16 %v2658
  %v2751 = vunpack.c.l.b16 %v2659
  %v2752 = vunpack.c.h.b16 %v2659
  %v2753 = vunpack.c.l.b16 %v2660
  %v2754 = vunpack.c.h.b16 %v2660
  %v2755 = vunpack.c.l.b16 %v2661
  %v2756 = vunpack.c.h.b16 %v2661
  %v2757 = vunpack.c.l.b16 %v2662
  %v2758 = vunpack.c.h.b16 %v2662
  %v2759 = vunpack.c.l.b16 %v2663
  %v2760 = vunpack.c.h.b16 %v2663
  %v2761 = vunpack.c.l.b16 %v2664
  %v2762 = vunpack.c.h.b16 %v2664
  %v2763 = vunpack.c.l.b16 %v2665
  %v2764 = vunpack.c.h.b16 %v2665
  %v2765 = vunpack.c.l.b16 %v2666
  %v2766 = vunpack.c.h.b16 %v2666
  %v2767 = vunpack.c.l.b16 %v2667
  %v2768 = vunpack.c.h.b16 %v2667
  %v2769 = vunpack.c.l.b16 %v2668
  %v2770 = vunpack.c.h.b16 %v2668
  %v2771 = vunpack.c.l.b16 %v2669
  %v2772 = vunpack.c.h.b16 %v2669
  %v2773 = vunpack.c.l.b16 %v2670
  %v2774 = vunpack.c.h.b16 %v2670
  %v2775 = vunpack.c.l.b16 %v2671
  %v2776 = vunpack.c.h.b16 %v2671
  %v2777 = vunpack.c.l.b16 %v2672
  %v2778 = vunpack.c.h.b16 %v2672
  %v2779 = vpack.c.b16 %v2719, %v2715
  %v2780 = vpack.c.b16 %v2720, %v2716
  %v2781 = vpack.c.b16 %v2721, %v2717
  %v2782 = vpack.c.b16 %v2722, %v2718
  %v2783 = vpack.c.b16 %v2727, %v2723
  %v2784 = vpack.c.b16 %v2728, %v2724
  %v2785 = vpack.c.b16 %v2729, %v2725
  %v2786 = vpack.c.b16 %v2730, %v2726
  %v2787 = vpack.c.b16 %v2735, %v2731
  %v2788 = vpack.c.b16 %v2736, %v2732
  %v2789 = vpack.c.b16 %v2737, %v2733
  %v2790 = vpack.c.b16 %v2738, %v2734
  %v2791 = vpack.c.b16 %v2743, %v2739
  %v2792 = vpack.c.b16 %v2744, %v2740
  %v2793 = vpack.c.b16 %v2745, %v2741
  %v2794 = vpack.c.b16 %v2746, %v2742
  %v2795 = vpack.c.b16 %v2751, %v2747
  %v2796 = vpack.c.b16 %v2752, %v2748
  %v2797 = vpack.c.b16 %v2753, %v2749
  %v2798 = vpack.c.b16 %v2754, %v2750
  %v2799 = vpack.c.b16 %v2759, %v2755
  %v2800 = vpack.c.b16 %v2760, %v2756
  %v2801 = vpack.c.b16 %v2761, %v2757
  %v2802 = vpack.c.b16 %v2762, %v2758
  %v2803 = vpack.c.b16 %v2767, %v2763
  %v2804 = vpack.c.b16 %v2768, %v2764
  %v2805 = vpack.c.b16 %v2769, %v2765
  %v2806 = vpack.c.b16 %v2770, %v2766
  %v2807 = vpack.c.b16 %v2775, %v2771
  %v2808 = vpack.c.b16 %v2776, %v2772
  %v2809 = vpack.c.b16 %v2777, %v2773
  %v2810 = vpack.c.b16 %v2778, %v2774
  %2843 = vmatpush.bf16.msra.mxu0 %v2807
  %2844 = vmatpush.bf16.msra.mxu0 %v2803
  %2845 = vmatpush.bf16.msra.mxu0 %v2799
  %2846 = vmatpush.bf16.msra.mxu0 %v2795
  %2847 = vmatpush.bf16.msra.mxu0 %v2791
  %2848 = vmatpush.bf16.msra.mxu0 %v2787
  %2849 = vmatpush.bf16.msra.mxu0 %v2783
  %2850 = vmatpush.bf16.msra.mxu0 %v2779
  %2851 = vmatmul.bf16.gmra.mxu0 %v2640
  %v2852 = vpop.f32.mrf.mxu0
  %v2853 = vadd.f32 %v2675, %v2852
  %v2854 = vpop.f32.mrf.mxu0
  %v2855 = vadd.f32 %v2675, %v2854
  %2856 = vdwg.mxu0
  %2857 = vmatpush.bf16.msra.mxu0 %v2808
  %2858 = vmatpush.bf16.msra.mxu0 %v2804
  %2859 = vmatpush.bf16.msra.mxu0 %v2800
  %2860 = vmatpush.bf16.msra.mxu0 %v2796
  %2861 = vmatpush.bf16.msra.mxu0 %v2792
  %2862 = vmatpush.bf16.msra.mxu0 %v2788
  %2863 = vmatpush.bf16.msra.mxu0 %v2784
  %2864 = vmatpush.bf16.msra.mxu0 %v2780
  %2865 = vmatmul.bf16.gmra.mxu0 %v2640
  %v2866 = vpop.f32.mrf.mxu0
  %v2867 = vadd.f32 %v2676, %v2866
  %v2868 = vpop.f32.mrf.mxu0
  %v2869 = vadd.f32 %v2676, %v2868
  %2870 = vdwg.mxu0
  %2871 = vmatpush.bf16.msra.mxu0 %v2809
  %2872 = vmatpush.bf16.msra.mxu0 %v2805
  %2873 = vmatpush.bf16.msra.mxu0 %v2801
  %2874 = vmatpush.bf16.msra.mxu0 %v2797
  %2875 = vmatpush.bf16.msra.mxu0 %v2793
  %2876 = vmatpush.bf16.msra.mxu0 %v2789
  %2877 = vmatpush.bf16.msra.mxu0 %v2785
  %2878 = vmatpush.bf16.msra.mxu0 %v2781
  %2879 = vmatmul.bf16.gmra.mxu0 %v2640
  %v2880 = vpop.f32.mrf.mxu0
  %v2881 = vadd.f32 %v2677, %v2880
  %v2882 = vpop.f32.mrf.mxu0
  %v2883 = vadd.f32 %v2677, %v2882
  %2884 = vdwg.mxu0
  %2885 = vmatpush.bf16.msra.mxu0 %v2810
  %2886 = vmatpush.bf16.msra.mxu0 %v2806
  %2887 = vmatpush.bf16.msra.mxu0 %v2802
  %2888 = vmatpush.bf16.msra.mxu0 %v2798
  %2889 = vmatpush.bf16.msra.mxu0 %v2794
  %2890 = vmatpush.bf16.msra.mxu0 %v2790
  %2891 = vmatpush.bf16.msra.mxu0 %v2786
  %2892 = vmatpush.bf16.msra.mxu0 %v2782
  %2893 = vmatmul.bf16.gmra.mxu0 %v2640
  %v2894 = vpop.f32.mrf.mxu0
  %v2895 = vadd.f32 %v2678, %v2894
  %v2896 = vpop.f32.mrf.mxu0
  %v2897 = vadd.f32 %v2678, %v2896
  %2898 = vdwg.mxu0
  %v2899 = vmul.f32 %v2853, %v2853
  %v2900 = vmul.f32 %v2867, %v2867
  %v2901 = vmul.f32 %v2881, %v2881
  %v2902 = vmul.f32 %v2895, %v2895
  %v2903 = vmul.f32 %v2855, %v2855
  %v2904 = vmul.f32 %v2869, %v2869
  %v2905 = vmul.f32 %v2883, %v2883
  %v2906 = vmul.f32 %v2897, %v2897
  %v2907 = vmul.f32 %v2853, %v2899
  %v2908 = vmul.f32 %v2867, %v2900
  %v2909 = vmul.f32 %v2881, %v2901
  %v2910 = vmul.f32 %v2895, %v2902
  %v2911 = vmul.f32 %v2855, %v2903
  %v2912 = vmul.f32 %v2869, %v2904
  %v2913 = vmul.f32 %v2883, %v2905
  %v2914 = vmul.f32 %v2897, %v2906
  %v2915 = vmul.f32 %v2907, 0.044715
  %v2916 = vmul.f32 %v2908, 0.044715
  %v2917 = vmul.f32 %v2909, 0.044715
  %v2918 = vmul.f32 %v2910, 0.044715
  %v2919 = vmul.f32 %v2911, 0.044715
  %v2920 = vmul.f32 %v2912, 0.044715
  %v2921 = vmul.f32 %v2913, 0.044715
  %v2922 = vmul.f32 %v2914, 0.044715
  %v2923 = vadd.f32 %v2853, %v2915
  %v2924 = vadd.f32 %v2867, %v2916
  %v2925 = vadd.f32 %v2881, %v2917
  %v2926 = vadd.f32 %v2895, %v2918
  %v2927 = vadd.f32 %v2855, %v2919
  %v2928 = vadd.f32 %v2869, %v2920
  %v2929 = vadd.f32 %v2883, %v2921
  %v2930 = vadd.f32 %v2897, %v2922
  %v2931 = vmul.f32 %v2923, 0.7978846
  %v2932 = vmul.f32 %v2924, 0.7978846
  %v2933 = vmul.f32 %v2925, 0.7978846
  %v2934 = vmul.f32 %v2926, 0.7978846
  %v2935 = vmul.f32 %v2927, 0.7978846
  %v2936 = vmul.f32 %v2928, 0.7978846
  %v2937 = vmul.f32 %v2929, 0.7978846
  %v2938 = vmul.f32 %v2930, 0.7978846
  %v2939 = vtanh.pop %v2931
  %v2940 = vtanh.pop %v2932
  %v2941 = vtanh.pop %v2933
  %v2942 = vtanh.pop %v2934
  %v2943 = vtanh.pop %v2935
  %v2944 = vtanh.pop %v2936
  %v2945 = vtanh.pop %v2937
  %v2946 = vtanh.pop %v2938
  %v2947 = vadd.f32 %v2939, 1.0
  %v2948 = vadd.f32 %v2940, 1.0
  %v2949 = vadd.f32 %v2941, 1.0
  %v2950 = vadd.f32 %v2942, 1.0
  %v2951 = vadd.f32 %v2943, 1.0
  %v2952 = vadd.f32 %v2944, 1.0
  %v2953 = vadd.f32 %v2945, 1.0
  %v2954 = vadd.f32 %v2946, 1.0
  %v2955 = vmul.f32 %v2947, 0.5
  %v2956 = vmul.f32 %v2948, 0.5
  %v2957 = vmul.f32 %v2949, 0.5
  %v2958 = vmul.f32 %v2950, 0.5
  %v2959 = vmul.f32 %v2951, 0.5
  %v2960 = vmul.f32 %v2952, 0.5
  %v2961 = vmul.f32 %v2953, 0.5
  %v2962 = vmul.f32 %v2954, 0.5
  %v2963 = vmul.f32 %v2853, %v2955
  %v2964 = vmul.f32 %v2867, %v2956
  %v2965 = vmul.f32 %v2881, %v2957
  %v2966 = vmul.f32 %v2895, %v2958
  %v2967 = vmul.f32 %v2855, %v2959
  %v2968 = vmul.f32 %v2869, %v2960
  %v2969 = vmul.f32 %v2883, %v2961
  %v2970 = vmul.f32 %v2897, %v2962
  %v2971 = vpack.c.bf16 %v2967, %v2963
  %v2972 = vpack.c.bf16 %v2968, %v2964
  %v2973 = vpack.c.bf16 %v2969, %v2965
  %v2974 = vpack.c.bf16 %v2970, %v2966
  %v2975 = vld [vmem:[%s13] sm:$0xf]
  %v2976 = vld [vmem:[%s13 + $0x4] sm:$0xf]
  %v2977 = vld [vmem:[%s13 + $0x8] sm:$0xf]
  %v2978 = vld [vmem:[%s13 + $0xc] sm:$0xf]
  %v2979 = vld [vmem:[%s13 + $0x10] sm:$0xf]
  %v2980 = vld [vmem:[%s13 + $0x14] sm:$0xf]
  %v2981 = vld [vmem:[%s13 + $0x18] sm:$0xf]
  %v2982 = vld [vmem:[%s13 + $0x1c] sm:$0xf]
  %v2983 = vld [vmem:[%s13 + $0x20] sm:$0xf]
  %v2984 = vld [vmem:[%s13 + $0x24] sm:$0xf]
  %v2985 = vld [vmem:[%s13 + $0x28] sm:$0xf]
  %v2986 = vld [vmem:[%s13 + $0x2c] sm:$0xf]
  %v2987 = vld [vmem:[%s13 + $0x30] sm:$0xf]
  %v2988 = vld [vmem:[%s13 + $0x34] sm:$0xf]
  %v2989 = vld [vmem:[%s13 + $0x38] sm:$0xf]
  %v2990 = vld [vmem:[%s13 + $0x3c] sm:$0xf]
  %v2991 = vld [vmem:[%s13 + $0x40] sm:$0xf]
  %v2992 = vld [vmem:[%s13 + $0x44] sm:$0xf]
  %v2993 = vld [vmem:[%s13 + $0x48] sm:$0xf]
  %v2994 = vld [vmem:[%s13 + $0x4c] sm:$0xf]
  %v2995 = vld [vmem:[%s13 + $0x50] sm:$0xf]
  %v2996 = vld [vmem:[%s13 + $0x54] sm:$0xf]
  %v2997 = vld [vmem:[%s13 + $0x58] sm:$0xf]
  %v2998 = vld [vmem:[%s13 + $0x5c] sm:$0xf]
  %v2999 = vld [vmem:[%s13 + $0x60] sm:$0xf]
  %v3000 = vld [vmem:[%s13 + $0x64] sm:$0xf]
  %v3001 = vld [vmem:[%s13 + $0x68] sm:$0xf]
  %v3002 = vld [vmem:[%s13 + $0x6c] sm:$0xf]
  %v3003 = vld [vmem:[%s13 + $0x70] sm:$0xf]
  %v3004 = vld [vmem:[%s13 + $0x74] sm:$0xf]
  %v3005 = vld [vmem:[%s13 + $0x78] sm:$0xf]
  %v3006 = vld [vmem:[%s13 + $0x7c] sm:$0xf]
  %v3007 = vld [vmem:[%s13 + $0x80] sm:$0xf]
  %v3008 = vld [vmem:[%s13 + $0x84] sm:$0xf]
  %v3009 = vld [vmem:[%s13 + $0x88] sm:$0xf]
  %v3010 = vld [vmem:[%s13 + $0x8c] sm:$0xf]
  %v3011 = vld [vmem:[%s13 + $0x90] sm:$0xf]
  %v3012 = vld [vmem:[%s13 + $0x94] sm:$0xf]
  %v3013 = vld [vmem:[%s13 + $0x98] sm:$0xf]
  %v3014 = vld [vmem:[%s13 + $0x9c] sm:$0xf]
  %v3015 = vld [vmem:[%s13 + $0xa0] sm:$0xf]
  %v3016 = vld [vmem:[%s13 + $0xa4] sm:$0xf]
  %v3017 = vld [vmem:[%s13 + $0xa8] sm:$0xf]
  %v3018 = vld [vmem:[%s13 + $0xac] sm:$0xf]
  %v3019 = vld [vmem:[%s13 + $0xb0] sm:$0xf]
  %v3020 = vld [vmem:[%s13 + $0xb4] sm:$0xf]
  %v3021 = vld [vmem:[%s13 + $0xb8] sm:$0xf]
  %v3022 = vld [vmem:[%s13 + $0xbc] sm:$0xf]
  %v3023 = vld [vmem:[%s13 + $0xc0] sm:$0xf]
  %v3024 = vld [vmem:[%s13 + $0xc4] sm:$0xf]
  %v3025 = vld [vmem:[%s13 + $0xc8] sm:$0xf]
  %v3026 = vld [vmem:[%s13 + $0xcc] sm:$0xf]
  %v3027 = vld [vmem:[%s13 + $0xd0] sm:$0xf]
  %v3028 = vld [vmem:[%s13 + $0xd4] sm:$0xf]
  %v3029 = vld [vmem:[%s13 + $0xd8] sm:$0xf]
  %v3030 = vld [vmem:[%s13 + $0xdc] sm:$0xf]
  %v3031 = vld [vmem:[%s13 + $0xe0] sm:$0xf]
  %v3032 = vld [vmem:[%s13 + $0xe4] sm:$0xf]
  %v3033 = vld [vmem:[%s13 + $0xe8] sm:$0xf]
  %v3034 = vld [vmem:[%s13 + $0xec] sm:$0xf]
  %v3035 = vld [vmem:[%s13 + $0xf0] sm:$0xf]
  %v3036 = vld [vmem:[%s13 + $0xf4] sm:$0xf]
  %v3037 = vld [vmem:[%s13 + $0xf8] sm:$0xf]
  %v3038 = vld [vmem:[%s13 + $0xfc] sm:$0xf]
  %v3039 = vld [vmem:[%s14] sm:$0x1]
  %v3041 = vperm.slane %v3039, 0
  %v3107 = vunpack.c.l.b16 %v2975
  %v3108 = vunpack.c.l.b16 %v2976
  %v3109 = vunpack.c.l.b16 %v2977
  %v3110 = vunpack.c.l.b16 %v2978
  %v3111 = vunpack.c.l.b16 %v2979
  %v3112 = vunpack.c.l.b16 %v2980
  %v3113 = vunpack.c.l.b16 %v2981
  %v3114 = vunpack.c.l.b16 %v2982
  %v3115 = vunpack.c.l.b16 %v2983
  %v3116 = vunpack.c.l.b16 %v2984
  %v3117 = vunpack.c.l.b16 %v2985
  %v3118 = vunpack.c.l.b16 %v2986
  %v3119 = vunpack.c.l.b16 %v2987
  %v3120 = vunpack.c.l.b16 %v2988
  %v3121 = vunpack.c.l.b16 %v2989
  %v3122 = vunpack.c.l.b16 %v2990
  %v3123 = vunpack.c.l.b16 %v2991
  %v3124 = vunpack.c.l.b16 %v2992
  %v3125 = vunpack.c.l.b16 %v2993
  %v3126 = vunpack.c.l.b16 %v2994
  %v3127 = vunpack.c.l.b16 %v2995
  %v3128 = vunpack.c.l.b16 %v2996
  %v3129 = vunpack.c.l.b16 %v2997
  %v3130 = vunpack.c.l.b16 %v2998
  %v3131 = vunpack.c.l.b16 %v2999
  %v3132 = vunpack.c.l.b16 %v3000
  %v3133 = vunpack.c.l.b16 %v3001
  %v3134 = vunpack.c.l.b16 %v3002
  %v3135 = vunpack.c.l.b16 %v3003
  %v3136 = vunpack.c.l.b16 %v3004
  %v3137 = vunpack.c.l.b16 %v3005
  %v3138 = vunpack.c.l.b16 %v3006
  %v3139 = vunpack.c.l.b16 %v3007
  %v3140 = vunpack.c.l.b16 %v3008
  %v3141 = vunpack.c.l.b16 %v3009
  %v3142 = vunpack.c.l.b16 %v3010
  %v3143 = vunpack.c.l.b16 %v3011
  %v3144 = vunpack.c.l.b16 %v3012
  %v3145 = vunpack.c.l.b16 %v3013
  %v3146 = vunpack.c.l.b16 %v3014
  %v3147 = vunpack.c.l.b16 %v3015
  %v3148 = vunpack.c.l.b16 %v3016
  %v3149 = vunpack.c.l.b16 %v3017
  %v3150 = vunpack.c.l.b16 %v3018
  %v3151 = vunpack.c.l.b16 %v3019
  %v3152 = vunpack.c.l.b16 %v3020
  %v3153 = vunpack.c.l.b16 %v3021
  %v3154 = vunpack.c.l.b16 %v3022
  %v3155 = vunpack.c.l.b16 %v3023
  %v3156 = vunpack.c.l.b16 %v3024
  %v3157 = vunpack.c.l.b16 %v3025
  %v3158 = vunpack.c.l.b16 %v3026
  %v3159 = vunpack.c.l.b16 %v3027
  %v3160 = vunpack.c.l.b16 %v3028
  %v3161 = vunpack.c.l.b16 %v3029
  %v3162 = vunpack.c.l.b16 %v3030
  %v3163 = vunpack.c.l.b16 %v3031
  %v3164 = vunpack.c.l.b16 %v3032
  %v3165 = vunpack.c.l.b16 %v3033
  %v3166 = vunpack.c.l.b16 %v3034
  %v3167 = vunpack.c.l.b16 %v3035
  %v3168 = vunpack.c.l.b16 %v3036
  %v3169 = vunpack.c.l.b16 %v3037
  %v3170 = vunpack.c.l.b16 %v3038
  %v3171 = vpack.c.b16 %v3108, %v3107
  %v3172 = vpack.c.b16 %v3110, %v3109
  %v3173 = vpack.c.b16 %v3112, %v3111
  %v3174 = vpack.c.b16 %v3114, %v3113
  %v3175 = vpack.c.b16 %v3116, %v3115
  %v3176 = vpack.c.b16 %v3118, %v3117
  %v3177 = vpack.c.b16 %v3120, %v3119
  %v3178 = vpack.c.b16 %v3122, %v3121
  %v3179 = vpack.c.b16 %v3124, %v3123
  %v3180 = vpack.c.b16 %v3126, %v3125
  %v3181 = vpack.c.b16 %v3128, %v3127
  %v3182 = vpack.c.b16 %v3130, %v3129
  %v3183 = vpack.c.b16 %v3132, %v3131
  %v3184 = vpack.c.b16 %v3134, %v3133
  %v3185 = vpack.c.b16 %v3136, %v3135
  %v3186 = vpack.c.b16 %v3138, %v3137
  %v3187 = vpack.c.b16 %v3140, %v3139
  %v3188 = vpack.c.b16 %v3142, %v3141
  %v3189 = vpack.c.b16 %v3144, %v3143
  %v3190 = vpack.c.b16 %v3146, %v3145
  %v3191 = vpack.c.b16 %v3148, %v3147
  %v3192 = vpack.c.b16 %v3150, %v3149
  %v3193 = vpack.c.b16 %v3152, %v3151
  %v3194 = vpack.c.b16 %v3154, %v3153
  %v3195 = vpack.c.b16 %v3156, %v3155
  %v3196 = vpack.c.b16 %v3158, %v3157
  %v3197 = vpack.c.b16 %v3160, %v3159
  %v3198 = vpack.c.b16 %v3162, %v3161
  %v3199 = vpack.c.b16 %v3164, %v3163
  %v3200 = vpack.c.b16 %v3166, %v3165
  %v3201 = vpack.c.b16 %v3168, %v3167
  %v3202 = vpack.c.b16 %v3170, %v3169
  %3235 = vmatpush.bf16.msra.mxu0 %v3178
  %3236 = vmatpush.bf16.msra.mxu0 %v3177
  %3237 = vmatpush.bf16.msra.mxu0 %v3176
  %3238 = vmatpush.bf16.msra.mxu0 %v3175
  %3239 = vmatpush.bf16.msra.mxu0 %v3174
  %3240 = vmatpush.bf16.msra.mxu0 %v3173
  %3241 = vmatpush.bf16.msra.mxu0 %v3172
  %3242 = vmatpush.bf16.msra.mxu0 %v3171
  %3243 = vmatmul.bf16.gmra.mxu0 %v2971
  %v3244 = vpop.f32.mrf.mxu0
  %v3245 = vadd.f32 %v3041, %v3244
  %v3246 = vpop.f32.mrf.mxu0
  %v3247 = vadd.f32 %v3041, %v3246
  %3248 = vdwg.mxu0
  %3249 = vmatpush.bf16.msra.mxu0 %v3186
  %3250 = vmatpush.bf16.msra.mxu0 %v3185
  %3251 = vmatpush.bf16.msra.mxu0 %v3184
  %3252 = vmatpush.bf16.msra.mxu0 %v3183
  %3253 = vmatpush.bf16.msra.mxu0 %v3182
  %3254 = vmatpush.bf16.msra.mxu0 %v3181
  %3255 = vmatpush.bf16.msra.mxu0 %v3180
  %3256 = vmatpush.bf16.msra.mxu0 %v3179
  %3257 = vmatmul.bf16.gmra.mxu0 %v2972
  %v3258 = vpop.f32.mrf.mxu0
  %v3259 = vadd.f32 %v3245, %v3258
  %v3260 = vpop.f32.mrf.mxu0
  %v3261 = vadd.f32 %v3247, %v3260
  %3262 = vdwg.mxu0
  %3263 = vmatpush.bf16.msra.mxu0 %v3194
  %3264 = vmatpush.bf16.msra.mxu0 %v3193
  %3265 = vmatpush.bf16.msra.mxu0 %v3192
  %3266 = vmatpush.bf16.msra.mxu0 %v3191
  %3267 = vmatpush.bf16.msra.mxu0 %v3190
  %3268 = vmatpush.bf16.msra.mxu0 %v3189
  %3269 = vmatpush.bf16.msra.mxu0 %v3188
  %3270 = vmatpush.bf16.msra.mxu0 %v3187
  %3271 = vmatmul.bf16.gmra.mxu0 %v2973
  %v3272 = vpop.f32.mrf.mxu0
  %v3273 = vadd.f32 %v3259, %v3272
  %v3274 = vpop.f32.mrf.mxu0
  %v3275 = vadd.f32 %v3261, %v3274
  %3276 = vdwg.mxu0
  %3277 = vmatpush.bf16.msra.mxu0 %v3202
  %3278 = vmatpush.bf16.msra.mxu0 %v3201
  %3279 = vmatpush.bf16.msra.mxu0 %v3200
  %3280 = vmatpush.bf16.msra.mxu0 %v3199
  %3281 = vmatpush.bf16.msra.mxu0 %v3198
  %3282 = vmatpush.bf16.msra.mxu0 %v3197
  %3283 = vmatpush.bf16.msra.mxu0 %v3196
  %3284 = vmatpush.bf16.msra.mxu0 %v3195
  %3285 = vmatmul.bf16.gmra.mxu0 %v2974
  %v3286 = vpop.f32.mrf.mxu0
  %v3287 = vadd.f32 %v3273, %v3286
  %v3288 = vpop.f32.mrf.mxu0
  %v3289 = vadd.f32 %v3275, %v3288
  %3290 = vdwg.mxu0
  %v3291 = vadd.f32 %v2586, %v3287
  %v3292 = vadd.f32 %v2587, %v3289
  %v3293 = vld [vmem:[%s15] sm:$0x1]
  %v3294 = vld [vmem:[%s16] sm:$0x1]
  %3295 = vadd.xlane.f32.xlu0 %v3291
  %v3296 = vpop.xlane.xlu0 %3295
  %3297 = vadd.xlane.f32.xlu0 %v3292
  %v3298 = vpop.xlane.xlu0 %3297
  %v3299 = vmul.f32 %v3296, %v908
  %v3300 = vmul.f32 %v3298, %v908
  %v3301 = vsub.f32 %v3291, %v3299
  %v3302 = vsub.f32 %v3292, %v3300
  %v3303 = vmul.f32 %v3301, %v3301
  %v3304 = vmul.f32 %v3302, %v3302
  %3305 = vadd.xlane.f32.xlu0 %v3303
  %v3306 = vpop.xlane.xlu0 %3305
  %3307 = vadd.xlane.f32.xlu0 %v3304
  %v3308 = vpop.xlane.xlu0 %3307
  %v3309 = vmul.f32 %v3306, %v908
  %v3310 = vmul.f32 %v3308, %v908
  %v3311 = vadd.f32 %v3309, 1e-05
  %v3312 = vadd.f32 %v3310, 1e-05
  %v3313 = vrsqrt.pop %v3311
  %v3314 = vmul.f32 %v3313, %v3311
  %v3315 = vmul.f32 %v3314, %v3313
  %v3316 = vmul.f32 0.5, %v3315
  %v3317 = vsub.f32 1.5, %v3316
  %v3318 = vmul.f32 %v3313, %v3317
  %vm3319 = vweird.f32 %v3311
  %vm3320 = vweird.f32 %v3313
  %vm3321 = vmor %vm3319, %vm3320
  %v3322 = vsel %vm3321, %v3313, %v3318
  %v3323 = vrsqrt.pop %v3312
  %v3324 = vmul.f32 %v3323, %v3312
  %v3325 = vmul.f32 %v3324, %v3323
  %v3326 = vmul.f32 0.5, %v3325
  %v3327 = vsub.f32 1.5, %v3326
  %v3328 = vmul.f32 %v3323, %v3327
  %vm3329 = vweird.f32 %v3312
  %vm3330 = vweird.f32 %v3323
  %vm3331 = vmor %vm3329, %vm3330
  %v3332 = vsel %vm3331, %v3323, %v3328
  %v3333 = vmul.f32 %v3301, %v3322
  %v3334 = vmul.f32 %v3302, %v3332
  %v3336 = vperm.slane %v3293, 0
  %v3338 = vmul.f32 %v3333, %v3336
  %v3339 = vmul.f32 %v3334, %v3336
  %v3341 = vperm.slane %v3294, 0
  %v3343 = vadd.f32 %v3338, %v3341
  %v3344 = vadd.f32 %v3339, %v3341
  %v3345 = vpack.c.bf16 %v3344, %v3343
  %v3346 = vld [vmem:[%s17] sm:$0xff]
  %v3347 = vld [vmem:[%s17 + $0x8] sm:$0xff]
  %v3348 = vld [vmem:[%s17 + $0x10] sm:$0xff]
  %v3349 = vld [vmem:[%s17 + $0x18] sm:$0xff]
  %v3350 = vld [vmem:[%s17 + $0x20] sm:$0xff]
  %v3351 = vld [vmem:[%s17 + $0x28] sm:$0xff]
  %v3352 = vld [vmem:[%s17 + $0x30] sm:$0xff]
  %v3353 = vld [vmem:[%s17 + $0x38] sm:$0xff]
  %v3354 = vld [vmem:[%s17 + $0x40] sm:$0xff]
  %v3355 = vld [vmem:[%s17 + $0x48] sm:$0xff]
  %v3356 = vld [vmem:[%s17 + $0x50] sm:$0xff]
  %v3357 = vld [vmem:[%s17 + $0x58] sm:$0xff]
  %v3358 = vld [vmem:[%s17 + $0x60] sm:$0xff]
  %v3359 = vld [vmem:[%s17 + $0x68] sm:$0xff]
  %v3360 = vld [vmem:[%s17 + $0x70] sm:$0xff]
  %v3361 = vld [vmem:[%s17 + $0x78] sm:$0xff]
  %v3378 = vunpack.c.l.b16 %v3346
  %v3379 = vunpack.c.h.b16 %v3346
  %v3380 = vunpack.c.l.b16 %v3347
  %v3381 = vunpack.c.h.b16 %v3347
  %v3382 = vunpack.c.l.b16 %v3348
  %v3383 = vunpack.c.h.b16 %v3348
  %v3384 = vunpack.c.l.b16 %v3349
  %v3385 = vunpack.c.h.b16 %v3349
  %v3386 = vunpack.c.l.b16 %v3350
  %v3387 = vunpack.c.h.b16 %v3350
  %v3388 = vunpack.c.l.b16 %v3351
  %v3389 = vunpack.c.h.b16 %v3351
  %v3390 = vunpack.c.l.b16 %v3352
  %v3391 = vunpack.c.h.b16 %v3352
  %v3392 = vunpack.c.l.b16 %v3353
  %v3393 = vunpack.c.h.b16 %v3353
  %v3394 = vunpack.c.l.b16 %v3354
  %v3395 = vunpack.c.h.b16 %v3354
  %v3396 = vunpack.c.l.b16 %v3355
  %v3397 = vunpack.c.h.b16 %v3355
  %v3398 = vunpack.c.l.b16 %v3356
  %v3399 = vunpack.c.h.b16 %v3356
  %v3400 = vunpack.c.l.b16 %v3357
  %v3401 = vunpack.c.h.b16 %v3357
  %v3402 = vunpack.c.l.b16 %v3358
  %v3403 = vunpack.c.h.b16 %v3358
  %v3404 = vunpack.c.l.b16 %v3359
  %v3405 = vunpack.c.h.b16 %v3359
  %v3406 = vunpack.c.l.b16 %v3360
  %v3407 = vunpack.c.h.b16 %v3360
  %v3408 = vunpack.c.l.b16 %v3361
  %v3409 = vunpack.c.h.b16 %v3361
  %v3410 = vpack.c.b16 %v3380, %v3378
  %v3411 = vpack.c.b16 %v3381, %v3379
  %v3412 = vpack.c.b16 %v3384, %v3382
  %v3413 = vpack.c.b16 %v3385, %v3383
  %v3414 = vpack.c.b16 %v3388, %v3386
  %v3415 = vpack.c.b16 %v3389, %v3387
  %v3416 = vpack.c.b16 %v3392, %v3390
  %v3417 = vpack.c.b16 %v3393, %v3391
  %v3418 = vpack.c.b16 %v3396, %v3394
  %v3419 = vpack.c.b16 %v3397, %v3395
  %v3420 = vpack.c.b16 %v3400, %v3398
  %v3421 = vpack.c.b16 %v3401, %v3399
  %v3422 = vpack.c.b16 %v3404, %v3402
  %v3423 = vpack.c.b16 %v3405, %v3403
  %v3424 = vpack.c.b16 %v3408, %v3406
  %v3425 = vpack.c.b16 %v3409, %v3407
  %3442 = vmatpush.bf16.msra.mxu0 %v3424
  %3443 = vmatpush.bf16.msra.mxu0 %v3422
  %3444 = vmatpush.bf16.msra.mxu0 %v3420
  %3445 = vmatpush.bf16.msra.mxu0 %v3418
  %3446 = vmatpush.bf16.msra.mxu0 %v3416
  %3447 = vmatpush.bf16.msra.mxu0 %v3414
  %3448 = vmatpush.bf16.msra.mxu0 %v3412
  %3449 = vmatpush.bf16.msra.mxu0 %v3410
  %3450 = vmatmul.bf16.gmra.mxu0 %v3345
  %v3451 = vpop.f32.mrf.mxu0
  %v3452 = vadd.f32 0.0, %v3451
  %v3453 = vpop.f32.mrf.mxu0
  %v3454 = vadd.f32 0.0, %v3453
  %3455 = vdwg.mxu0
  %3456 = vmatpush.bf16.msra.mxu0 %v3425
  %3457 = vmatpush.bf16.msra.mxu0 %v3423
  %3458 = vmatpush.bf16.msra.mxu0 %v3421
  %3459 = vmatpush.bf16.msra.mxu0 %v3419
  %3460 = vmatpush.bf16.msra.mxu0 %v3417
  %3461 = vmatpush.bf16.msra.mxu0 %v3415
  %3462 = vmatpush.bf16.msra.mxu0 %v3413
  %3463 = vmatpush.bf16.msra.mxu0 %v3411
  %3464 = vmatmul.bf16.gmra.mxu0 %v3345
  %v3465 = vpop.f32.mrf.mxu0
  %v3466 = vadd.f32 0.0, %v3465
  %v3467 = vpop.f32.mrf.mxu0
  %v3468 = vadd.f32 0.0, %v3467
  %3469 = vdwg.mxu0
  %3470 = vst [vmem:[%s18] sm:$0xff] %v3452
  %3471 = vst [vmem:[%s18 + $0x8] sm:$0xff] %v3466
  %3472 = vst [vmem:[%s18 + $0x10] sm:$0xff] %v3454
  %3473 = vst [vmem:[%s18 + $0x18] sm:$0xff] %v3468
  // Predicated region
  $region74: #{fine_unigpt_forward.1} parent=0 // pred_check
    _
  $region75: #{fine_unigpt_forward.1} parent=0 // pred_check_branch
    %3475 = sbr.rel (0) target = $region77
  $region76: #{fine_unigpt_forward.1} parent=0 // pred_region
    _
  $region77: #{fine_unigpt_forward.1} parent=0 // pred_fallthru
    _
  // Predicated region
  $region78: #{fine_unigpt_forward.1} parent=0 // pred_check
    _
  $region79: #{fine_unigpt_forward.1} parent=0 // pred_check_branch
    %3477 = sbr.rel (0) target = $region81
  $region80: #{fine_unigpt_forward.1} parent=0 // pred_region
    _
  $region81: #{fine_unigpt_forward.1} parent=0 // pred_fallthru
    _

</llo_original>
